<compile_context>
chip_gen: v5e
topology: v5e:2x2
jax: 0.10.0
libtpu: 0.0.40
codegen_flags: <defaults>
</compile_context>

<pallas_src>
import functools
import math

import jax
import jax.numpy as jnp
from jax import lax
from jax.experimental import pallas as pl
from jax.experimental.pallas import tpu as pltpu

EPS = 1e-5                       # nn.LayerNorm default eps
_VMEM_LIMIT = 64 * 1024 * 1024   # explicit scoped-VMEM cap (fits v5e/v6e/v7x)
_VMEM = pl.BlockSpec(memory_space=pltpu.MemorySpace.VMEM)


# ---------------------------------------------------------------------------
# small helpers
# ---------------------------------------------------------------------------

def _round_up(x, m):
    return (x + m - 1) // m * m


def _row_tile(m, target=256):
    """Largest row tile <= target (multiple of 8) that divides m; m itself if small."""
    if m <= target:
        return m
    t = (target // 8) * 8
    while t > 8 and m % t:
        t -= 8
    return t if (t > 0 and m % t == 0) else m


def _layernorm(z, g, b):
    """f32 LayerNorm over the last axis (biased variance, like nn.LayerNorm)."""
    mean = jnp.mean(z, axis=-1, keepdims=True)
    var = jnp.mean((z - mean) ** 2, axis=-1, keepdims=True)
    return (z - mean) * lax.rsqrt(var + EPS) * g + b


def _gelu(h):
    # exact (erf-based) GELU, matching nn.GELU() default
    return 0.5 * h * (1.0 + lax.erf(h * (1.0 / math.sqrt(2.0))))


def _params(parallel_axes=1):
    return pltpu.CompilerParams(
        dimension_semantics=("parallel",) * parallel_axes,
        vmem_limit_bytes=_VMEM_LIMIT)


# ---------------------------------------------------------------------------
# Pallas kernels
# ---------------------------------------------------------------------------

def _matmul_bias_kernel(x_ref, w_ref, b_ref, o_ref):
    acc = jnp.dot(x_ref[...], w_ref[...], preferred_element_type=jnp.float32)
    o_ref[...] = (acc + b_ref[...]).astype(o_ref.dtype)


def matmul_bias(x, w, b, out_dtype=jnp.bfloat16):
    """x:(M,K) @ w:(K,N) + b:(N,), tiled over M; weight resident across the grid."""
    M, K = x.shape
    N = w.shape[1]
    tm = _row_tile(M)
    return pl.pallas_call(
        _matmul_bias_kernel,
        out_shape=jax.ShapeDtypeStruct((M, N), out_dtype),
        grid=(M // tm,),
        in_specs=[pl.BlockSpec((tm, K), lambda i: (i, 0)),
                  pl.BlockSpec((K, N), lambda i: (0, 0)),    # resident weight
                  pl.BlockSpec((1, N), lambda i: (0, 0))],
        out_specs=pl.BlockSpec((tm, N), lambda i: (i, 0)),
        compiler_params=_params(),
    )(x, w, b.reshape(1, N).astype(jnp.float32))


def _add_layernorm_kernel(x_ref, y_ref, g_ref, b_ref, o_ref):
    z = x_ref[...].astype(jnp.float32) + y_ref[...].astype(jnp.float32)
    o_ref[...] = _layernorm(z, g_ref[...], b_ref[...]).astype(o_ref.dtype)


def add_layernorm(x, y, gamma, beta):
    """LayerNorm(x + y) over the last axis, tiled over rows.  Used for pos-emb + LN."""
    M, E = x.shape
    tm = _row_tile(M)
    return pl.pallas_call(
        _add_layernorm_kernel,
        out_shape=jax.ShapeDtypeStruct((M, E), jnp.bfloat16),
        grid=(M // tm,),
        in_specs=[pl.BlockSpec((tm, E), lambda i: (i, 0)),
                  pl.BlockSpec((tm, E), lambda i: (i, 0)),
                  pl.BlockSpec((1, E), lambda i: (0, 0)),
                  pl.BlockSpec((1, E), lambda i: (0, 0))],
        out_specs=pl.BlockSpec((tm, E), lambda i: (i, 0)),
        compiler_params=_params(),
    )(x, y, gamma.reshape(1, E), beta.reshape(1, E))


def _matmul_res_ln_kernel(x_ref, res_ref, w_ref, b_ref, g_ref, bt_ref, o_ref):
    # LN(res + x @ W + b) fused: out-projection epilogue.
    y = jnp.dot(x_ref[...], w_ref[...], preferred_element_type=jnp.float32) + b_ref[...]
    z = res_ref[...].astype(jnp.float32) + y
    o_ref[...] = _layernorm(z, g_ref[...], bt_ref[...]).astype(o_ref.dtype)


def matmul_res_layernorm(x, res, w, b, gamma, beta):
    M, K = x.shape
    N = w.shape[1]
    tm = _row_tile(M)
    return pl.pallas_call(
        _matmul_res_ln_kernel,
        out_shape=jax.ShapeDtypeStruct((M, N), jnp.bfloat16),
        grid=(M // tm,),
        in_specs=[pl.BlockSpec((tm, K), lambda i: (i, 0)),
                  pl.BlockSpec((tm, N), lambda i: (i, 0)),
                  pl.BlockSpec((K, N), lambda i: (0, 0)),    # resident weight
                  pl.BlockSpec((1, N), lambda i: (0, 0)),
                  pl.BlockSpec((1, N), lambda i: (0, 0)),
                  pl.BlockSpec((1, N), lambda i: (0, 0))],
        out_specs=pl.BlockSpec((tm, N), lambda i: (i, 0)),
        compiler_params=_params(),
    )(x, res, w, b.reshape(1, N).astype(jnp.float32),
      gamma.reshape(1, N), beta.reshape(1, N))


def _mlp_res_ln_kernel(x_ref, w1_ref, b1_ref, w2_ref, b2_ref, g_ref, bt_ref, o_ref):
    # LN(x + GELU(x@w1+b1) @ w2 + b2) fused; hidden activation kept in bf16,
    # both matmuls accumulate in f32, LN in f32.
    x = x_ref[...]
    h = jnp.dot(x, w1_ref[...], preferred_element_type=jnp.float32) + b1_ref[...]
    h = _gelu(h).astype(x.dtype)
    y = jnp.dot(h, w2_ref[...], preferred_element_type=jnp.float32) + b2_ref[...]
    z = x.astype(jnp.float32) + y
    o_ref[...] = _layernorm(z, g_ref[...], bt_ref[...]).astype(o_ref.dtype)


def mlp_res_layernorm(x, w1, b1, w2, b2, gamma, beta):
    M, E = x.shape
    H = w1.shape[1]
    tm = _row_tile(M)
    return pl.pallas_call(
        _mlp_res_ln_kernel,
        out_shape=jax.ShapeDtypeStruct((M, E), jnp.bfloat16),
        grid=(M // tm,),
        in_specs=[pl.BlockSpec((tm, E), lambda i: (i, 0)),
                  pl.BlockSpec((E, H), lambda i: (0, 0)),    # resident weights
                  pl.BlockSpec((1, H), lambda i: (0, 0)),
                  pl.BlockSpec((H, E), lambda i: (0, 0)),
                  pl.BlockSpec((1, E), lambda i: (0, 0)),
                  pl.BlockSpec((1, E), lambda i: (0, 0)),
                  pl.BlockSpec((1, E), lambda i: (0, 0))],
        out_specs=pl.BlockSpec((tm, E), lambda i: (i, 0)),
        compiler_params=_params(),
    )(x, w1, b1.reshape(1, H).astype(jnp.float32),
      w2, b2.reshape(1, E).astype(jnp.float32),
      gamma.reshape(1, E), beta.reshape(1, E))


def _attn_kernel(qkv_ref, o_ref, *, nh, dh, seq_len, scale):
    E = nh * dh
    qkv = qkv_ref[0]                                          # (S_pad, 3E) bf16
    # Build head-major (nh, S_pad, dh) stacks from static lane slices of the packed
    # QKV block: all head work is batched in one grid step, no HBM round trip.
    q = jnp.stack([qkv[:, h * dh:(h + 1) * dh] for h in range(nh)], axis=0)
    k = jnp.stack([qkv[:, E + h * dh:E + (h + 1) * dh] for h in range(nh)], axis=0)
    v = jnp.stack([qkv[:, 2 * E + h * dh:2 * E + (h + 1) * dh] for h in range(nh)], axis=0)
    # scores: contract the last (Dh) axis of both operands -> no k.T / XLU transpose
    s = jnp.einsum("hqd,hkd->hqk", q, k,
                   preferred_element_type=jnp.float32) * scale   # (nh, S_pad, S_pad)
    # mask padded key columns (sequence was padded to a multiple of 16)
    valid = lax.broadcasted_iota(jnp.int32, s.shape, 2) < seq_len
    s = jnp.where(valid, s, -1e30)
    m = jnp.max(s, axis=-1, keepdims=True)
    p = jnp.exp(s - m)
    p = p * pl.reciprocal(jnp.sum(p, axis=-1, keepdims=True), approx=True)
    o = jnp.einsum("hqk,hkd->hqd", p.astype(v.dtype), v,
                   preferred_element_type=jnp.float32)          # (nh, S_pad, dh)
    # lane-dense (S_pad, E) output block
    o_ref[0] = jnp.concatenate([o[h] for h in range(nh)], axis=-1).astype(o_ref.dtype)


def attention(qkv, num_heads, seq_len):
    """qkv: (B, S_pad, 3E) packed projections -> (B, S_pad, E). Grid over batch."""
    B, S_pad, threeE = qkv.shape
    E = threeE // 3
    dh = E // num_heads
    kernel = functools.partial(_attn_kernel, nh=num_heads, dh=dh,
                               seq_len=seq_len, scale=1.0 / math.sqrt(dh))
    return pl.pallas_call(
        kernel,
        out_shape=jax.ShapeDtypeStruct((B, S_pad, E), jnp.bfloat16),
        grid=(B,),
        in_specs=[pl.BlockSpec((1, S_pad, threeE), lambda b: (b, 0, 0))],
        out_specs=pl.BlockSpec((1, S_pad, E), lambda b: (b, 0, 0)),
        compiler_params=_params(),
    )(qkv)


def _ln_linear_kernel(x_ref, g_ref, b_ref, w_ref, bias_ref, o_ref):
    zn = _layernorm(x_ref[...].astype(jnp.float32), g_ref[...], b_ref[...])
    o_ref[...] = (jnp.dot(zn.astype(w_ref.dtype), w_ref[...],
                          preferred_element_type=jnp.float32)
                  + bias_ref[...]).astype(o_ref.dtype)


def ln_linear(x, gamma, beta, w, b):
    """align_projection: LayerNorm -> Linear on the CLS tokens. x:(B,E) -> (B,A) f32."""
    M, E = x.shape
    A = w.shape[1]
    return pl.pallas_call(
        _ln_linear_kernel,
        out_shape=jax.ShapeDtypeStruct((M, A), jnp.float32),
        in_specs=[_VMEM] * 5,
        out_specs=_VMEM,
    )(x, gamma.reshape(1, E), beta.reshape(1, E), w, b.reshape(1, A).astype(jnp.float32))


# ---------------------------------------------------------------------------
# Parameter init (deterministic, synthetic).  Matmul weights are stored in bf16;
# biases / LayerNorm affine params stay f32.
# ---------------------------------------------------------------------------

def init_params(key, in_channel, patch_size, img_size, align_dim,
                num_layers, num_heads, mlp_dim):
    num_patches = (img_size // patch_size) ** 2
    E = in_channel * patch_size ** 2
    assert E % num_heads == 0

    def nrm(k, shape, scale=0.02, dtype=jnp.bfloat16):
        return (scale * jax.random.normal(k, shape, dtype=jnp.float32)).astype(dtype)

    keys = iter(jax.random.split(key, 8 + 10 * num_layers))
    params = dict(
        patch_size=patch_size,
        embed_dim=E,
        num_heads=num_heads,
        # Conv2d(E, C, p, p) flattened to (C*p*p, E) so conv == patches @ w + b
        conv_w=nrm(next(keys), (in_channel * patch_size * patch_size, E)),
        conv_b=nrm(next(keys), (E,), dtype=jnp.float32),
        cls_token=nrm(next(keys), (1, 1, E), 1.0, jnp.float32),   # torch.randn
        pos_emb=nrm(next(keys), (1, num_patches + 1, E), 1.0, jnp.float32),
        pe_ln_g=jnp.ones((E,), jnp.float32),
        pe_ln_b=jnp.zeros((E,), jnp.float32),
        align_ln_g=jnp.ones((E,), jnp.float32),
        align_ln_b=jnp.zeros((E,), jnp.float32),
        align_w=nrm(next(keys), (E, align_dim)),
        align_b=jnp.zeros((align_dim,), jnp.float32),
        blocks=[],
    )
    for _ in range(num_layers):
        params["blocks"].append(dict(
            in_proj_w=nrm(next(keys), (E, 3 * E)),            # already (in, out)
            in_proj_b=jnp.zeros((3 * E,), jnp.float32),
            out_proj_w=nrm(next(keys), (E, E)),
            out_proj_b=jnp.zeros((E,), jnp.float32),
            ln1_g=jnp.ones((E,), jnp.float32), ln1_b=jnp.zeros((E,), jnp.float32),
            ln2_g=jnp.ones((E,), jnp.float32), ln2_b=jnp.zeros((E,), jnp.float32),
            w1=nrm(next(keys), (E, mlp_dim)), b1=jnp.zeros((mlp_dim,), jnp.float32),
            w2=nrm(next(keys), (mlp_dim, E)), b2=jnp.zeros((E,), jnp.float32),
        ))
    return params


# ---------------------------------------------------------------------------
# Forward pass (glue in plain JAX, compute in Pallas kernels)
# ---------------------------------------------------------------------------

def image_encoder_forward(params, x):
    B, C, H, W = x.shape
    p = params["patch_size"]
    E = params["embed_dim"]
    nh = params["num_heads"]
    hp, wp = H // p, W // p
    N = hp * wp

    # --- PatchEmbedding ---
    # Conv2d(k=stride=p) as a patch matmul; patch flatten order = (c, kh, kw)
    # TODO(synk): fold the NCHW->token transpose into the first matmul's input DMA
    # (pl.Element row gather) for high-resolution inputs; it is a one-time pass here.
    patches = (x.reshape(B, C, hp, p, wp, p)
                 .transpose(0, 2, 4, 1, 3, 5)
                 .reshape(B * N, C * p * p)).astype(jnp.bfloat16)
    tok = matmul_bias(patches, params["conv_w"], params["conv_b"])        # (B*N, E) bf16
    tok = tok.reshape(B, N, E)

    S = N + 1
    S_pad = _round_up(S, 16)                     # bf16 sublane packing; padded keys masked
    cls = jnp.broadcast_to(params["cls_token"], (B, 1, E)).astype(jnp.bfloat16)
    seq = jnp.concatenate([cls, tok], axis=1)                             # (B, S, E)
    seq = jnp.pad(seq, ((0, 0), (0, S_pad - S), (0, 0)))
    pos = jnp.pad(params["pos_emb"], ((0, 0), (0, S_pad - S), (0, 0)))
    pos = jnp.broadcast_to(pos, (B, S_pad, E))

    M = B * S_pad
    xf = add_layernorm(seq.reshape(M, E), pos.reshape(M, E),
                       params["pe_ln_g"], params["pe_ln_b"])              # (M, E) bf16

    # --- Transformer blocks (post-norm MHA + MLP), all fused Pallas kernels ---
    for blk in params["blocks"]:
        qkv = matmul_bias(xf, blk["in_proj_w"], blk["in_proj_b"])         # (M, 3E) bf16
        attn = attention(qkv.reshape(B, S_pad, 3 * E), nh, S)             # (B, S_pad, E)
        xf = matmul_res_layernorm(attn.reshape(M, E), xf,                 # LN(x + attn@Wo+b)
                                  blk["out_proj_w"], blk["out_proj_b"],
                                  blk["ln1_g"], blk["ln1_b"])
        xf = mlp_res_layernorm(xf, blk["w1"], blk["b1"],                  # LN(x + MLP(x))
                               blk["w2"], blk["b2"],
                               blk["ln2_g"], blk["ln2_b"])

    # --- align_projection on the CLS token ---
    cls_out = xf.reshape(B, S_pad, E)[:, 0, :]                            # (B, E) bf16
    out = ln_linear(cls_out, params["align_ln_g"], params["align_ln_b"],
                    params["align_w"], params["align_b"])                 # (B, align_dim) f32
    return out


# ---------------------------------------------------------------------------

if __name__ == "__main__":
    # small shapes consistent with the module:
    #   embed_dim = in_channel * patch_size**2 = 4*16 = 64
    #   num_patches = (16/4)**2 = 16  ->  seq = 17 (padded to 32 internally)
    in_channel, patch_size, img_size = 4, 4, 16
    align_dim, num_layers, num_heads, mlp_dim = 32, 2, 4, 128
    batch = 2

    key = jax.random.PRNGKey(0)
    kx, kp = jax.random.split(key)
    x = jax.random.normal(kx, (batch, in_channel, img_size, img_size), dtype=jnp.float32)
    params = init_params(kp, in_channel, patch_size, img_size, align_dim,
                         num_layers, num_heads, mlp_dim)

    fwd = jax.jit(lambda inp: image_encoder_forward(params, inp))
    out = jax.block_until_ready(fwd(x))
    assert out.shape == (batch, align_dim), out.shape
    assert bool(jnp.all(jnp.isfinite(out)))
    print("KERNEL_OK")
</pallas_src>

<mosaic_0001>
module attributes {stable_mosaic.version = 11 : i64} {
  func.func @_matmul_bias_kernel(%arg0: i32, %arg1: memref<64x64xbf16, #tpu.memory_space<vmem>>, %arg2: memref<64x192xbf16, #tpu.memory_space<vmem>>, %arg3: memref<1x192xf32, #tpu.memory_space<vmem>>, %arg4: memref<64x192xbf16, #tpu.memory_space<vmem>>) attributes {dimension_semantics = [#tpu.dimension_semantics<parallel>], iteration_bounds = array<i64: 1>, scalar_prefetch = 0 : i64, scratch_operands = 0 : i64, tpu.core_type = #tpu.core_type<tc>, window_params = [{transform_indices = @transform_0, window_bounds = array<i64: 64, 64>}, {pipeline_mode = #tpu.pipeline_mode<synchronous>, transform_indices = @transform_1, window_bounds = array<i64: 64, 192>}, {pipeline_mode = #tpu.pipeline_mode<synchronous>, transform_indices = @transform_2, window_bounds = array<i64: 1, 192>}, {transform_indices = @transform_3, window_bounds = array<i64: 64, 192>}]} {
    %c0 = arith.constant 0 : index
    %c0_0 = arith.constant 0 : index
    %0 = vector.load %arg1[%c0, %c0_0] : memref<64x64xbf16, #tpu.memory_space<vmem>>, vector<64x64xbf16>
    %c0_1 = arith.constant 0 : index
    %c0_2 = arith.constant 0 : index
    %1 = vector.load %arg2[%c0_1, %c0_2] : memref<64x192xbf16, #tpu.memory_space<vmem>>, vector<64x192xbf16>
    %cst = arith.constant dense<0.000000e+00> : vector<64x192xf32>
    %2 = tpu.matmul %0, %1, %cst {dimension_numbers = #tpu.dot_dimension_numbers<[1], [0], [0], [1], [0, 0, 1, 1], [], []>} : vector<64x64xbf16>, vector<64x192xbf16>, vector<64x192xf32> -> vector<64x192xf32>
    %c0_3 = arith.constant 0 : index
    %c0_4 = arith.constant 0 : index
    %3 = vector.load %arg3[%c0_3, %c0_4] : memref<1x192xf32, #tpu.memory_space<vmem>>, vector<1x192xf32>
    %4 = vector.broadcast %3 : vector<1x192xf32> to vector<64x192xf32>
    %5 = arith.addf %2, %4 : vector<64x192xf32>
    %6 = arith.truncf %5 : vector<64x192xf32> to vector<64x192xbf16>
    %c0_5 = arith.constant 0 : index
    %c0_6 = arith.constant 0 : index
    %7 = vector.load %arg4[%c0_5, %c0_6] : memref<64x192xbf16, #tpu.memory_space<vmem>>, vector<64x192xbf16>
    tpu.vector_store %arg4[%c0_5, %c0_6], %6 {strides = array<i32>} : memref<64x192xbf16, #tpu.memory_space<vmem>>, vector<64x192xbf16>,
    return
  }
  func.func @transform_0(%arg0: i32) -> (i32, i32) {
    %c0_i32 = arith.constant 0 : i32
    %c0_i32_0 = arith.constant 0 : i32
    return %arg0, %c0_i32 : i32, i32
  }
  func.func @transform_1(%arg0: i32) -> (i32, i32) {
    %c0_i32 = arith.constant 0 : i32
    %c0_i32_0 = arith.constant 0 : i32
    %c0_i32_1 = arith.constant 0 : i32
    return %c0_i32, %c0_i32_0 : i32, i32
  }
  func.func @transform_2(%arg0: i32) -> (i32, i32) {
    %c0_i32 = arith.constant 0 : i32
    %c0_i32_0 = arith.constant 0 : i32
    %c0_i32_1 = arith.constant 0 : i32
    return %c0_i32, %c0_i32_0 : i32, i32
  }
  func.func @transform_3(%arg0: i32) -> (i32, i32) {
    %c0_i32 = arith.constant 0 : i32
    %c0_i32_0 = arith.constant 0 : i32
    return %arg0, %c0_i32 : i32, i32
  }
}

module attributes {stable_mosaic.version = 11 : i64} {
  func.func @_add_layernorm_kernel(%arg0: i32, %arg1: memref<64x64xbf16, #tpu.memory_space<vmem>>, %arg2: memref<64x64xf32, #tpu.memory_space<vmem>>, %arg3: memref<1x64xf32, #tpu.memory_space<vmem>>, %arg4: memref<1x64xf32, #tpu.memory_space<vmem>>, %arg5: memref<64x64xbf16, #tpu.memory_space<vmem>>) attributes {dimension_semantics = [#tpu.dimension_semantics<parallel>], iteration_bounds = array<i64: 1>, scalar_prefetch = 0 : i64, scratch_operands = 0 : i64, tpu.core_type = #tpu.core_type<tc>, window_params = [{transform_indices = @transform_0, window_bounds = array<i64: 64, 64>}, {transform_indices = @transform_1, window_bounds = array<i64: 64, 64>}, {pipeline_mode = #tpu.pipeline_mode<synchronous>, transform_indices = @transform_2, window_bounds = array<i64: 1, 64>}, {pipeline_mode = #tpu.pipeline_mode<synchronous>, transform_indices = @transform_3, window_bounds = array<i64: 1, 64>}, {transform_indices = @transform_4, window_bounds = array<i64: 64, 64>}]} {
    %c0 = arith.constant 0 : index
    %c0_0 = arith.constant 0 : index
    %0 = vector.load %arg1[%c0, %c0_0] : memref<64x64xbf16, #tpu.memory_space<vmem>>, vector<64x64xbf16>
    %1 = arith.extf %0 : vector<64x64xbf16> to vector<64x64xf32>
    %c0_1 = arith.constant 0 : index
    %c0_2 = arith.constant 0 : index
    %2 = vector.load %arg2[%c0_1, %c0_2] : memref<64x64xf32, #tpu.memory_space<vmem>>, vector<64x64xf32>
    %3 = arith.addf %1, %2 : vector<64x64xf32>
    %c0_3 = arith.constant 0 : index
    %c0_4 = arith.constant 0 : index
    %4 = vector.load %arg3[%c0_3, %c0_4] : memref<1x64xf32, #tpu.memory_space<vmem>>, vector<1x64xf32>
    %c0_5 = arith.constant 0 : index
    %c0_6 = arith.constant 0 : index
    %5 = vector.load %arg4[%c0_5, %c0_6] : memref<1x64xf32, #tpu.memory_space<vmem>>, vector<1x64xf32>
    %cst = arith.constant dense<0.000000e+00> : vector<64xf32>
    %6 = vector.multi_reduction <add>, %3, %cst [1] : vector<64x64xf32> to vector<64xf32>
    %7 = vector.shape_cast %6 : vector<64xf32> to vector<64x1xf32>
    %cst_7 = arith.constant 6.400000e+01 : f32
    %8 = vector.broadcast %cst_7 : f32 to vector<64x1xf32>
    %9 = arith.divf %7, %8 : vector<64x1xf32>
    %10 = vector.broadcast %9 : vector<64x1xf32> to vector<64x64xf32>
    %11 = arith.subf %3, %10 : vector<64x64xf32>
    %12 = arith.mulf %11, %11 : vector<64x64xf32>
    %cst_8 = arith.constant dense<0.000000e+00> : vector<64xf32>
    %13 = vector.multi_reduction <add>, %12, %cst_8 [1] : vector<64x64xf32> to vector<64xf32>
    %14 = vector.shape_cast %13 : vector<64xf32> to vector<64x1xf32>
    %cst_9 = arith.constant 6.400000e+01 : f32
    %15 = vector.broadcast %cst_9 : f32 to vector<64x1xf32>
    %16 = arith.divf %14, %15 : vector<64x1xf32>
    %17 = vector.broadcast %9 : vector<64x1xf32> to vector<64x64xf32>
    %18 = arith.subf %3, %17 : vector<64x64xf32>
    %cst_10 = arith.constant 9.99999974E-6 : f32
    %19 = vector.broadcast %cst_10 : f32 to vector<64x1xf32>
    %20 = arith.addf %16, %19 : vector<64x1xf32>
    %21 = math.rsqrt %20 : vector<64x1xf32>
    %22 = vector.broadcast %21 : vector<64x1xf32> to vector<64x64xf32>
    %23 = arith.mulf %18, %22 : vector<64x64xf32>
    %24 = vector.broadcast %4 : vector<1x64xf32> to vector<64x64xf32>
    %25 = arith.mulf %23, %24 : vector<64x64xf32>
    %26 = vector.broadcast %5 : vector<1x64xf32> to vector<64x64xf32>
    %27 = arith.addf %25, %26 : vector<64x64xf32>
    %28 = arith.truncf %27 : vector<64x64xf32> to vector<64x64xbf16>
    %c0_11 = arith.constant 0 : index
    %c0_12 = arith.constant 0 : index
    %29 = vector.load %arg5[%c0_11, %c0_12] : memref<64x64xbf16, #tpu.memory_space<vmem>>, vector<64x64xbf16>
    tpu.vector_store %arg5[%c0_11, %c0_12], %28 {strides = array<i32>} : memref<64x64xbf16, #tpu.memory_space<vmem>>, vector<64x64xbf16>,
    return
  }
  func.func @transform_0(%arg0: i32) -> (i32, i32) {
    %c0_i32 = arith.constant 0 : i32
    %c0_i32_0 = arith.constant 0 : i32
    return %arg0, %c0_i32 : i32, i32
  }
  func.func @transform_1(%arg0: i32) -> (i32, i32) {
    %c0_i32 = arith.constant 0 : i32
    %c0_i32_0 = arith.constant 0 : i32
    return %arg0, %c0_i32 : i32, i32
  }
  func.func @transform_2(%arg0: i32) -> (i32, i32) {
    %c0_i32 = arith.constant 0 : i32
    %c0_i32_0 = arith.constant 0 : i32
    %c0_i32_1 = arith.constant 0 : i32
    return %c0_i32, %c0_i32_0 : i32, i32
  }
  func.func @transform_3(%arg0: i32) -> (i32, i32) {
    %c0_i32 = arith.constant 0 : i32
    %c0_i32_0 = arith.constant 0 : i32
    %c0_i32_1 = arith.constant 0 : i32
    return %c0_i32, %c0_i32_0 : i32, i32
  }
  func.func @transform_4(%arg0: i32) -> (i32, i32) {
    %c0_i32 = arith.constant 0 : i32
    %c0_i32_0 = arith.constant 0 : i32
    return %arg0, %c0_i32 : i32, i32
  }
}

module attributes {stable_mosaic.version = 11 : i64} {
  func.func @_matmul_bias_kernel(%arg0: i32, %arg1: memref<32x64xbf16, #tpu.memory_space<vmem>>, %arg2: memref<64x64xbf16, #tpu.memory_space<vmem>>, %arg3: memref<1x64xf32, #tpu.memory_space<vmem>>, %arg4: memref<32x64xbf16, #tpu.memory_space<vmem>>) attributes {dimension_semantics = [#tpu.dimension_semantics<parallel>], iteration_bounds = array<i64: 1>, scalar_prefetch = 0 : i64, scratch_operands = 0 : i64, tpu.core_type = #tpu.core_type<tc>, window_params = [{transform_indices = @transform_0, window_bounds = array<i64: 32, 64>}, {pipeline_mode = #tpu.pipeline_mode<synchronous>, transform_indices = @transform_1, window_bounds = array<i64: 64, 64>}, {pipeline_mode = #tpu.pipeline_mode<synchronous>, transform_indices = @transform_2, window_bounds = array<i64: 1, 64>}, {transform_indices = @transform_3, window_bounds = array<i64: 32, 64>}]} {
    %c0 = arith.constant 0 : index
    %c0_0 = arith.constant 0 : index
    %0 = vector.load %arg1[%c0, %c0_0] : memref<32x64xbf16, #tpu.memory_space<vmem>>, vector<32x64xbf16>
    %c0_1 = arith.constant 0 : index
    %c0_2 = arith.constant 0 : index
    %1 = vector.load %arg2[%c0_1, %c0_2] : memref<64x64xbf16, #tpu.memory_space<vmem>>, vector<64x64xbf16>
    %cst = arith.constant dense<0.000000e+00> : vector<32x64xf32>
    %2 = tpu.matmul %0, %1, %cst {dimension_numbers = #tpu.dot_dimension_numbers<[1], [0], [0], [1], [0, 0, 1, 1], [], []>} : vector<32x64xbf16>, vector<64x64xbf16>, vector<32x64xf32> -> vector<32x64xf32>
    %c0_3 = arith.constant 0 : index
    %c0_4 = arith.constant 0 : index
    %3 = vector.load %arg3[%c0_3, %c0_4] : memref<1x64xf32, #tpu.memory_space<vmem>>, vector<1x64xf32>
    %4 = vector.broadcast %3 : vector<1x64xf32> to vector<32x64xf32>
    %5 = arith.addf %2, %4 : vector<32x64xf32>
    %6 = arith.truncf %5 : vector<32x64xf32> to vector<32x64xbf16>
    %c0_5 = arith.constant 0 : index
    %c0_6 = arith.constant 0 : index
    %7 = vector.load %arg4[%c0_5, %c0_6] : memref<32x64xbf16, #tpu.memory_space<vmem>>, vector<32x64xbf16>
    tpu.vector_store %arg4[%c0_5, %c0_6], %6 {strides = array<i32>} : memref<32x64xbf16, #tpu.memory_space<vmem>>, vector<32x64xbf16>,
    return
  }
  func.func @transform_0(%arg0: i32) -> (i32, i32) {
    %c0_i32 = arith.constant 0 : i32
    %c0_i32_0 = arith.constant 0 : i32
    return %arg0, %c0_i32 : i32, i32
  }
  func.func @transform_1(%arg0: i32) -> (i32, i32) {
    %c0_i32 = arith.constant 0 : i32
    %c0_i32_0 = arith.constant 0 : i32
    %c0_i32_1 = arith.constant 0 : i32
    return %c0_i32, %c0_i32_0 : i32, i32
  }
  func.func @transform_2(%arg0: i32) -> (i32, i32) {
    %c0_i32 = arith.constant 0 : i32
    %c0_i32_0 = arith.constant 0 : i32
    %c0_i32_1 = arith.constant 0 : i32
    return %c0_i32, %c0_i32_0 : i32, i32
  }
  func.func @transform_3(%arg0: i32) -> (i32, i32) {
    %c0_i32 = arith.constant 0 : i32
    %c0_i32_0 = arith.constant 0 : i32
    return %arg0, %c0_i32 : i32, i32
  }
}

module attributes {stable_mosaic.version = 11 : i64} {
  func.func @_attn_kernel(%arg0: i32, %arg1: memref<1x32x192xbf16, #tpu.memory_space<vmem>>, %arg2: memref<1x32x64xbf16, #tpu.memory_space<vmem>>) attributes {dimension_semantics = [#tpu.dimension_semantics<parallel>], iteration_bounds = array<i64: 2>, scalar_prefetch = 0 : i64, scratch_operands = 0 : i64, tpu.core_type = #tpu.core_type<tc>, window_params = [{transform_indices = @transform_0, window_bounds = array<i64: 1, 32, 192>}, {transform_indices = @transform_1, window_bounds = array<i64: 1, 32, 64>}]} {
    %c0 = arith.constant 0 : index
    %c0_0 = arith.constant 0 : index
    %c0_1 = arith.constant 0 : index
    %0 = vector.load %arg1[%c0, %c0_0, %c0_1] : memref<1x32x192xbf16, #tpu.memory_space<vmem>>, vector<1x32x192xbf16>
    %1 = vector.shape_cast %0 : vector<1x32x192xbf16> to vector<32x192xbf16>
    %2 = vector.extract_strided_slice %1 {offsets = [0, 0], sizes = [32, 16], strides = [1, 1]} : vector<32x192xbf16> to vector<32x16xbf16>
    %3 = vector.extract_strided_slice %1 {offsets = [0, 16], sizes = [32, 16], strides = [1, 1]} : vector<32x192xbf16> to vector<32x16xbf16>
    %4 = vector.extract_strided_slice %1 {offsets = [0, 32], sizes = [32, 16], strides = [1, 1]} : vector<32x192xbf16> to vector<32x16xbf16>
    %5 = vector.extract_strided_slice %1 {offsets = [0, 48], sizes = [32, 16], strides = [1, 1]} : vector<32x192xbf16> to vector<32x16xbf16>
    %6 = vector.shape_cast %2 : vector<32x16xbf16> to vector<1x32x16xbf16>
    %7 = vector.shape_cast %3 : vector<32x16xbf16> to vector<1x32x16xbf16>
    %8 = vector.shape_cast %4 : vector<32x16xbf16> to vector<1x32x16xbf16>
    %9 = vector.shape_cast %5 : vector<32x16xbf16> to vector<1x32x16xbf16>
    %10 = tpu.concatenate %6, %7, %8, %9 in 0 : vector<1x32x16xbf16>, vector<1x32x16xbf16>, vector<1x32x16xbf16>, vector<1x32x16xbf16> -> vector<4x32x16xbf16>
    %11 = vector.extract_strided_slice %1 {offsets = [0, 64], sizes = [32, 16], strides = [1, 1]} : vector<32x192xbf16> to vector<32x16xbf16>
    %12 = vector.extract_strided_slice %1 {offsets = [0, 80], sizes = [32, 16], strides = [1, 1]} : vector<32x192xbf16> to vector<32x16xbf16>
    %13 = vector.extract_strided_slice %1 {offsets = [0, 96], sizes = [32, 16], strides = [1, 1]} : vector<32x192xbf16> to vector<32x16xbf16>
    %14 = vector.extract_strided_slice %1 {offsets = [0, 112], sizes = [32, 16], strides = [1, 1]} : vector<32x192xbf16> to vector<32x16xbf16>
    %15 = vector.shape_cast %11 : vector<32x16xbf16> to vector<1x32x16xbf16>
    %16 = vector.shape_cast %12 : vector<32x16xbf16> to vector<1x32x16xbf16>
    %17 = vector.shape_cast %13 : vector<32x16xbf16> to vector<1x32x16xbf16>
    %18 = vector.shape_cast %14 : vector<32x16xbf16> to vector<1x32x16xbf16>
    %19 = tpu.concatenate %15, %16, %17, %18 in 0 : vector<1x32x16xbf16>, vector<1x32x16xbf16>, vector<1x32x16xbf16>, vector<1x32x16xbf16> -> vector<4x32x16xbf16>
    %20 = vector.extract_strided_slice %1 {offsets = [0, 128], sizes = [32, 16], strides = [1, 1]} : vector<32x192xbf16> to vector<32x16xbf16>
    %21 = vector.extract_strided_slice %1 {offsets = [0, 144], sizes = [32, 16], strides = [1, 1]} : vector<32x192xbf16> to vector<32x16xbf16>
    %22 = vector.extract_strided_slice %1 {offsets = [0, 160], sizes = [32, 16], strides = [1, 1]} : vector<32x192xbf16> to vector<32x16xbf16>
    %23 = vector.extract_strided_slice %1 {offsets = [0, 176], sizes = [32, 16], strides = [1, 1]} : vector<32x192xbf16> to vector<32x16xbf16>
    %24 = vector.shape_cast %20 : vector<32x16xbf16> to vector<1x32x16xbf16>
    %25 = vector.shape_cast %21 : vector<32x16xbf16> to vector<1x32x16xbf16>
    %26 = vector.shape_cast %22 : vector<32x16xbf16> to vector<1x32x16xbf16>
    %27 = vector.shape_cast %23 : vector<32x16xbf16> to vector<1x32x16xbf16>
    %28 = tpu.concatenate %24, %25, %26, %27 in 0 : vector<1x32x16xbf16>, vector<1x32x16xbf16>, vector<1x32x16xbf16>, vector<1x32x16xbf16> -> vector<4x32x16xbf16>
    "tpu.trace_start"() <{level = 10 : i32, message = "hqd,hkd->hqk"}> : () -> ()
    %cst = arith.constant dense<0.000000e+00> : vector<4x32x32xf32>
    %29 = tpu.matmul %10, %19, %cst {dimension_numbers = #tpu.dot_dimension_numbers<[2], [2], [1], [1], [0, 0, 0, 1, 1, 1], [0], [0]>} : vector<4x32x16xbf16>, vector<4x32x16xbf16>, vector<4x32x32xf32> -> vector<4x32x32xf32>
    "tpu.trace_stop"() : () -> ()
    %cst_2 = arith.constant 2.500000e-01 : f32
    %30 = vector.broadcast %cst_2 : f32 to vector<4x32x32xf32>
    %31 = arith.mulf %29, %30 : vector<4x32x32xf32>
    %32 = tpu.iota {dimensions = array<i32: 2>} : vector<4x32x32xi32>
    %c17_i32 = arith.constant 17 : i32
    %33 = vector.broadcast %c17_i32 : i32 to vector<4x32x32xi32>
    %34 = arith.cmpi slt, %32, %33 : vector<4x32x32xi32>
    %cst_3 = arith.constant -1.000000e+30 : f32
    %35 = vector.broadcast %cst_3 : f32 to vector<4x32x32xf32>
    %36 = arith.select %34, %31, %35 : vector<4x32x32xi1>, vector<4x32x32xf32>
    %cst_4 = arith.constant dense<0xFF800000> : vector<4x32xf32>
    %37 = vector.multi_reduction <maximumf>, %36, %cst_4 [2] : vector<4x32x32xf32> to vector<4x32xf32>
    %38 = vector.shape_cast %37 : vector<4x32xf32> to vector<4x32x1xf32>
    %39 = vector.broadcast %38 : vector<4x32x1xf32> to vector<4x32x32xf32>
    %40 = arith.subf %36, %39 : vector<4x32x32xf32>
    %41 = math.exp %40 : vector<4x32x32xf32>
    %cst_5 = arith.constant dense<0.000000e+00> : vector<4x32xf32>
    %42 = vector.multi_reduction <add>, %41, %cst_5 [2] : vector<4x32x32xf32> to vector<4x32xf32>
    %43 = vector.shape_cast %42 : vector<4x32xf32> to vector<4x32x1xf32>
    %44 = tpu.reciprocal %43 {approx = true} : vector<4x32x1xf32> -> vector<4x32x1xf32>
    %45 = vector.broadcast %44 : vector<4x32x1xf32> to vector<4x32x32xf32>
    %46 = arith.mulf %41, %45 : vector<4x32x32xf32>
    %47 = arith.truncf %46 : vector<4x32x32xf32> to vector<4x32x32xbf16>
    "tpu.trace_start"() <{level = 10 : i32, message = "hqk,hkd->hqd"}> : () -> ()
    %cst_6 = arith.constant dense<0.000000e+00> : vector<4x32x16xf32>
    %48 = tpu.matmul %47, %28, %cst_6 {dimension_numbers = #tpu.dot_dimension_numbers<[2], [1], [1], [2], [0, 0, 0, 1, 1, 2], [0], [0]>} : vector<4x32x32xbf16>, vector<4x32x16xbf16>, vector<4x32x16xf32> -> vector<4x32x16xf32>
    "tpu.trace_stop"() : () -> ()
    %49 = vector.extract_strided_slice %48 {offsets = [0, 0, 0], sizes = [1, 32, 16], strides = [1, 1, 1]} : vector<4x32x16xf32> to vector<1x32x16xf32>
    %50 = vector.shape_cast %49 : vector<1x32x16xf32> to vector<32x16xf32>
    %51 = vector.extract_strided_slice %48 {offsets = [1, 0, 0], sizes = [1, 32, 16], strides = [1, 1, 1]} : vector<4x32x16xf32> to vector<1x32x16xf32>
    %52 = vector.shape_cast %51 : vector<1x32x16xf32> to vector<32x16xf32>
    %53 = vector.extract_strided_slice %48 {offsets = [2, 0, 0], sizes = [1, 32, 16], strides = [1, 1, 1]} : vector<4x32x16xf32> to vector<1x32x16xf32>
    %54 = vector.shape_cast %53 : vector<1x32x16xf32> to vector<32x16xf32>
    %55 = vector.extract_strided_slice %48 {offsets = [3, 0, 0], sizes = [1, 32, 16], strides = [1, 1, 1]} : vector<4x32x16xf32> to vector<1x32x16xf32>
    %56 = vector.shape_cast %55 : vector<1x32x16xf32> to vector<32x16xf32>
    %57 = tpu.concatenate %50, %52, %54, %56 in 1 : vector<32x16xf32>, vector<32x16xf32>, vector<32x16xf32>, vector<32x16xf32> -> vector<32x64xf32>
    %58 = arith.truncf %57 : vector<32x64xf32> to vector<32x64xbf16>
    %c0_7 = arith.constant 0 : index
    %c0_8 = arith.constant 0 : index
    %c0_9 = arith.constant 0 : index
    %59 = vector.load %arg2[%c0_7, %c0_8, %c0_9] : memref<1x32x64xbf16, #tpu.memory_space<vmem>>, vector<1x32x64xbf16>
    %60 = vector.shape_cast %59 : vector<1x32x64xbf16> to vector<32x64xbf16>
    %61 = vector.shape_cast %58 : vector<32x64xbf16> to vector<1x32x64xbf16>
    tpu.vector_store %arg2[%c0_7, %c0_8, %c0_9], %61 {strides = array<i32>} : memref<1x32x64xbf16, #tpu.memory_space<vmem>>, vector<1x32x64xbf16>,
    return
  }
  func.func @transform_0(%arg0: i32) -> (i32, i32, i32) {
    %c0_i32 = arith.constant 0 : i32
    %c0_i32_0 = arith.constant 0 : i32
    %c0_i32_1 = arith.constant 0 : i32
    return %arg0, %c0_i32, %c0_i32_0 : i32, i32, i32
  }
  func.func @transform_1(%arg0: i32) -> (i32, i32, i32) {
    %c0_i32 = arith.constant 0 : i32
    %c0_i32_0 = arith.constant 0 : i32
    %c0_i32_1 = arith.constant 0 : i32
    return %arg0, %c0_i32, %c0_i32_0 : i32, i32, i32
  }
}

module attributes {stable_mosaic.version = 11 : i64} {
  func.func @_mlp_res_ln_kernel(%arg0: i32, %arg1: memref<64x64xbf16, #tpu.memory_space<vmem>>, %arg2: memref<64x128xbf16, #tpu.memory_space<vmem>>, %arg3: memref<1x128xf32, #tpu.memory_space<vmem>>, %arg4: memref<128x64xbf16, #tpu.memory_space<vmem>>, %arg5: memref<1x64xf32, #tpu.memory_space<vmem>>, %arg6: memref<1x64xf32, #tpu.memory_space<vmem>>, %arg7: memref<1x64xf32, #tpu.memory_space<vmem>>, %arg8: memref<64x64xbf16, #tpu.memory_space<vmem>>) attributes {dimension_semantics = [#tpu.dimension_semantics<parallel>], iteration_bounds = array<i64: 1>, scalar_prefetch = 0 : i64, scratch_operands = 0 : i64, tpu.core_type = #tpu.core_type<tc>, window_params = [{transform_indices = @transform_0, window_bounds = array<i64: 64, 64>}, {pipeline_mode = #tpu.pipeline_mode<synchronous>, transform_indices = @transform_1, window_bounds = array<i64: 64, 128>}, {pipeline_mode = #tpu.pipeline_mode<synchronous>, transform_indices = @transform_2, window_bounds = array<i64: 1, 128>}, {pipeline_mode = #tpu.pipeline_mode<synchronous>, transform_indices = @transform_3, window_bounds = array<i64: 128, 64>}, {pipeline_mode = #tpu.pipeline_mode<synchronous>, transform_indices = @transform_4, window_bounds = array<i64: 1, 64>}, {pipeline_mode = #tpu.pipeline_mode<synchronous>, transform_indices = @transform_5, window_bounds = array<i64: 1, 64>}, {pipeline_mode = #tpu.pipeline_mode<synchronous>, transform_indices = @transform_6, window_bounds = array<i64: 1, 64>}, {transform_indices = @transform_7, window_bounds = array<i64: 64, 64>}]} {
    %c0 = arith.constant 0 : index
    %c0_0 = arith.constant 0 : index
    %0 = vector.load %arg1[%c0, %c0_0] : memref<64x64xbf16, #tpu.memory_space<vmem>>, vector<64x64xbf16>
    %c0_1 = arith.constant 0 : index
    %c0_2 = arith.constant 0 : index
    %1 = vector.load %arg2[%c0_1, %c0_2] : memref<64x128xbf16, #tpu.memory_space<vmem>>, vector<64x128xbf16>
    %cst = arith.constant dense<0.000000e+00> : vector<64x128xf32>
    %2 = tpu.matmul %0, %1, %cst {dimension_numbers = #tpu.dot_dimension_numbers<[1], [0], [0], [1], [0, 0, 1, 1], [], []>} : vector<64x64xbf16>, vector<64x128xbf16>, vector<64x128xf32> -> vector<64x128xf32>
    %c0_3 = arith.constant 0 : index
    %c0_4 = arith.constant 0 : index
    %3 = vector.load %arg3[%c0_3, %c0_4] : memref<1x128xf32, #tpu.memory_space<vmem>>, vector<1x128xf32>
    %4 = vector.broadcast %3 : vector<1x128xf32> to vector<64x128xf32>
    %5 = arith.addf %2, %4 : vector<64x128xf32>
    %cst_5 = arith.constant 5.000000e-01 : f32
    %6 = vector.broadcast %cst_5 : f32 to vector<64x128xf32>
    %7 = arith.mulf %6, %5 : vector<64x128xf32>
    %cst_6 = arith.constant 0.707106769 : f32
    %8 = vector.broadcast %cst_6 : f32 to vector<64x128xf32>
    %9 = arith.mulf %5, %8 : vector<64x128xf32>
    %10 = math.erf %9 : vector<64x128xf32>
    %cst_7 = arith.constant 1.000000e+00 : f32
    %11 = vector.broadcast %cst_7 : f32 to vector<64x128xf32>
    %12 = arith.addf %11, %10 : vector<64x128xf32>
    %13 = arith.mulf %7, %12 : vector<64x128xf32>
    %14 = arith.truncf %13 : vector<64x128xf32> to vector<64x128xbf16>
    %c0_8 = arith.constant 0 : index
    %c0_9 = arith.constant 0 : index
    %15 = vector.load %arg4[%c0_8, %c0_9] : memref<128x64xbf16, #tpu.memory_space<vmem>>, vector<128x64xbf16>
    %cst_10 = arith.constant dense<0.000000e+00> : vector<64x64xf32>
    %16 = tpu.matmul %14, %15, %cst_10 {dimension_numbers = #tpu.dot_dimension_numbers<[1], [0], [0], [1], [0, 0, 1, 1], [], []>} : vector<64x128xbf16>, vector<128x64xbf16>, vector<64x64xf32> -> vector<64x64xf32>
    %c0_11 = arith.constant 0 : index
    %c0_12 = arith.constant 0 : index
    %17 = vector.load %arg5[%c0_11, %c0_12] : memref<1x64xf32, #tpu.memory_space<vmem>>, vector<1x64xf32>
    %18 = vector.broadcast %17 : vector<1x64xf32> to vector<64x64xf32>
    %19 = arith.addf %16, %18 : vector<64x64xf32>
    %20 = arith.extf %0 : vector<64x64xbf16> to vector<64x64xf32>
    %21 = arith.addf %20, %19 : vector<64x64xf32>
    %c0_13 = arith.constant 0 : index
    %c0_14 = arith.constant 0 : index
    %22 = vector.load %arg6[%c0_13, %c0_14] : memref<1x64xf32, #tpu.memory_space<vmem>>, vector<1x64xf32>
    %c0_15 = arith.constant 0 : index
    %c0_16 = arith.constant 0 : index
    %23 = vector.load %arg7[%c0_15, %c0_16] : memref<1x64xf32, #tpu.memory_space<vmem>>, vector<1x64xf32>
    %cst_17 = arith.constant dense<0.000000e+00> : vector<64xf32>
    %24 = vector.multi_reduction <add>, %21, %cst_17 [1] : vector<64x64xf32> to vector<64xf32>
    %25 = vector.shape_cast %24 : vector<64xf32> to vector<64x1xf32>
    %cst_18 = arith.constant 6.400000e+01 : f32
    %26 = vector.broadcast %cst_18 : f32 to vector<64x1xf32>
    %27 = arith.divf %25, %26 : vector<64x1xf32>
    %28 = vector.broadcast %27 : vector<64x1xf32> to vector<64x64xf32>
    %29 = arith.subf %21, %28 : vector<64x64xf32>
    %30 = arith.mulf %29, %29 : vector<64x64xf32>
    %cst_19 = arith.constant dense<0.000000e+00> : vector<64xf32>
    %31 = vector.multi_reduction <add>, %30, %cst_19 [1] : vector<64x64xf32> to vector<64xf32>
    %32 = vector.shape_cast %31 : vector<64xf32> to vector<64x1xf32>
    %cst_20 = arith.constant 6.400000e+01 : f32
    %33 = vector.broadcast %cst_20 : f32 to vector<64x1xf32>
    %34 = arith.divf %32, %33 : vector<64x1xf32>
    %35 = vector.broadcast %27 : vector<64x1xf32> to vector<64x64xf32>
    %36 = arith.subf %21, %35 : vector<64x64xf32>
    %cst_21 = arith.constant 9.99999974E-6 : f32
    %37 = vector.broadcast %cst_21 : f32 to vector<64x1xf32>
    %38 = arith.addf %34, %37 : vector<64x1xf32>
    %39 = math.rsqrt %38 : vector<64x1xf32>
    %40 = vector.broadcast %39 : vector<64x1xf32> to vector<64x64xf32>
    %41 = arith.mulf %36, %40 : vector<64x64xf32>
    %42 = vector.broadcast %22 : vector<1x64xf32> to vector<64x64xf32>
    %43 = arith.mulf %41, %42 : vector<64x64xf32>
    %44 = vector.broadcast %23 : vector<1x64xf32> to vector<64x64xf32>
    %45 = arith.addf %43, %44 : vector<64x64xf32>
    %46 = arith.truncf %45 : vector<64x64xf32> to vector<64x64xbf16>
    %c0_22 = arith.constant 0 : index
    %c0_23 = arith.constant 0 : index
    %47 = vector.load %arg8[%c0_22, %c0_23] : memref<64x64xbf16, #tpu.memory_space<vmem>>, vector<64x64xbf16>
    tpu.vector_store %arg8[%c0_22, %c0_23], %46 {strides = array<i32>} : memref<64x64xbf16, #tpu.memory_space<vmem>>, vector<64x64xbf16>,
    return
  }
  func.func @transform_0(%arg0: i32) -> (i32, i32) {
    %c0_i32 = arith.constant 0 : i32
    %c0_i32_0 = arith.constant 0 : i32
    return %arg0, %c0_i32 : i32, i32
  }
  func.func @transform_1(%arg0: i32) -> (i32, i32) {
    %c0_i32 = arith.constant 0 : i32
    %c0_i32_0 = arith.constant 0 : i32
    %c0_i32_1 = arith.constant 0 : i32
    return %c0_i32, %c0_i32_0 : i32, i32
  }
  func.func @transform_2(%arg0: i32) -> (i32, i32) {
    %c0_i32 = arith.constant 0 : i32
    %c0_i32_0 = arith.constant 0 : i32
    %c0_i32_1 = arith.constant 0 : i32
    return %c0_i32, %c0_i32_0 : i32, i32
  }
  func.func @transform_3(%arg0: i32) -> (i32, i32) {
    %c0_i32 = arith.constant 0 : i32
    %c0_i32_0 = arith.constant 0 : i32
    %c0_i32_1 = arith.constant 0 : i32
    return %c0_i32, %c0_i32_0 : i32, i32
  }
  func.func @transform_4(%arg0: i32) -> (i32, i32) {
    %c0_i32 = arith.constant 0 : i32
    %c0_i32_0 = arith.constant 0 : i32
    %c0_i32_1 = arith.constant 0 : i32
    return %c0_i32, %c0_i32_0 : i32, i32
  }
  func.func @transform_5(%arg0: i32) -> (i32, i32) {
    %c0_i32 = arith.constant 0 : i32
    %c0_i32_0 = arith.constant 0 : i32
    %c0_i32_1 = arith.constant 0 : i32
    return %c0_i32, %c0_i32_0 : i32, i32
  }
  func.func @transform_6(%arg0: i32) -> (i32, i32) {
    %c0_i32 = arith.constant 0 : i32
    %c0_i32_0 = arith.constant 0 : i32
    %c0_i32_1 = arith.constant 0 : i32
    return %c0_i32, %c0_i32_0 : i32, i32
  }
  func.func @transform_7(%arg0: i32) -> (i32, i32) {
    %c0_i32 = arith.constant 0 : i32
    %c0_i32_0 = arith.constant 0 : i32
    return %arg0, %c0_i32 : i32, i32
  }
}

module attributes {stable_mosaic.version = 11 : i64} {
  func.func @_matmul_res_ln_kernel(%arg0: i32, %arg1: memref<64x64xbf16, #tpu.memory_space<vmem>>, %arg2: memref<64x64xbf16, #tpu.memory_space<vmem>>, %arg3: memref<64x64xbf16, #tpu.memory_space<vmem>>, %arg4: memref<1x64xf32, #tpu.memory_space<vmem>>, %arg5: memref<1x64xf32, #tpu.memory_space<vmem>>, %arg6: memref<1x64xf32, #tpu.memory_space<vmem>>, %arg7: memref<64x64xbf16, #tpu.memory_space<vmem>>) attributes {dimension_semantics = [#tpu.dimension_semantics<parallel>], iteration_bounds = array<i64: 1>, scalar_prefetch = 0 : i64, scratch_operands = 0 : i64, tpu.core_type = #tpu.core_type<tc>, window_params = [{transform_indices = @transform_0, window_bounds = array<i64: 64, 64>}, {transform_indices = @transform_1, window_bounds = array<i64: 64, 64>}, {pipeline_mode = #tpu.pipeline_mode<synchronous>, transform_indices = @transform_2, window_bounds = array<i64: 64, 64>}, {pipeline_mode = #tpu.pipeline_mode<synchronous>, transform_indices = @transform_3, window_bounds = array<i64: 1, 64>}, {pipeline_mode = #tpu.pipeline_mode<synchronous>, transform_indices = @transform_4, window_bounds = array<i64: 1, 64>}, {pipeline_mode = #tpu.pipeline_mode<synchronous>, transform_indices = @transform_5, window_bounds = array<i64: 1, 64>}, {transform_indices = @transform_6, window_bounds = array<i64: 64, 64>}]} {
    %c0 = arith.constant 0 : index
    %c0_0 = arith.constant 0 : index
    %0 = vector.load %arg1[%c0, %c0_0] : memref<64x64xbf16, #tpu.memory_space<vmem>>, vector<64x64xbf16>
    %c0_1 = arith.constant 0 : index
    %c0_2 = arith.constant 0 : index
    %1 = vector.load %arg3[%c0_1, %c0_2] : memref<64x64xbf16, #tpu.memory_space<vmem>>, vector<64x64xbf16>
    %cst = arith.constant dense<0.000000e+00> : vector<64x64xf32>
    %2 = tpu.matmul %0, %1, %cst {dimension_numbers = #tpu.dot_dimension_numbers<[1], [0], [0], [1], [0, 0, 1, 1], [], []>} : vector<64x64xbf16>, vector<64x64xbf16>, vector<64x64xf32> -> vector<64x64xf32>
    %c0_3 = arith.constant 0 : index
    %c0_4 = arith.constant 0 : index
    %3 = vector.load %arg4[%c0_3, %c0_4] : memref<1x64xf32, #tpu.memory_space<vmem>>, vector<1x64xf32>
    %4 = vector.broadcast %3 : vector<1x64xf32> to vector<64x64xf32>
    %5 = arith.addf %2, %4 : vector<64x64xf32>
    %c0_5 = arith.constant 0 : index
    %c0_6 = arith.constant 0 : index
    %6 = vector.load %arg2[%c0_5, %c0_6] : memref<64x64xbf16, #tpu.memory_space<vmem>>, vector<64x64xbf16>
    %7 = arith.extf %6 : vector<64x64xbf16> to vector<64x64xf32>
    %8 = arith.addf %7, %5 : vector<64x64xf32>
    %c0_7 = arith.constant 0 : index
    %c0_8 = arith.constant 0 : index
    %9 = vector.load %arg5[%c0_7, %c0_8] : memref<1x64xf32, #tpu.memory_space<vmem>>, vector<1x64xf32>
    %c0_9 = arith.constant 0 : index
    %c0_10 = arith.constant 0 : index
    %10 = vector.load %arg6[%c0_9, %c0_10] : memref<1x64xf32, #tpu.memory_space<vmem>>, vector<1x64xf32>
    %cst_11 = arith.constant dense<0.000000e+00> : vector<64xf32>
    %11 = vector.multi_reduction <add>, %8, %cst_11 [1] : vector<64x64xf32> to vector<64xf32>
    %12 = vector.shape_cast %11 : vector<64xf32> to vector<64x1xf32>
    %cst_12 = arith.constant 6.400000e+01 : f32
    %13 = vector.broadcast %cst_12 : f32 to vector<64x1xf32>
    %14 = arith.divf %12, %13 : vector<64x1xf32>
    %15 = vector.broadcast %14 : vector<64x1xf32> to vector<64x64xf32>
    %16 = arith.subf %8, %15 : vector<64x64xf32>
    %17 = arith.mulf %16, %16 : vector<64x64xf32>
    %cst_13 = arith.constant dense<0.000000e+00> : vector<64xf32>
    %18 = vector.multi_reduction <add>, %17, %cst_13 [1] : vector<64x64xf32> to vector<64xf32>
    %19 = vector.shape_cast %18 : vector<64xf32> to vector<64x1xf32>
    %cst_14 = arith.constant 6.400000e+01 : f32
    %20 = vector.broadcast %cst_14 : f32 to vector<64x1xf32>
    %21 = arith.divf %19, %20 : vector<64x1xf32>
    %22 = vector.broadcast %14 : vector<64x1xf32> to vector<64x64xf32>
    %23 = arith.subf %8, %22 : vector<64x64xf32>
    %cst_15 = arith.constant 9.99999974E-6 : f32
    %24 = vector.broadcast %cst_15 : f32 to vector<64x1xf32>
    %25 = arith.addf %21, %24 : vector<64x1xf32>
    %26 = math.rsqrt %25 : vector<64x1xf32>
    %27 = vector.broadcast %26 : vector<64x1xf32> to vector<64x64xf32>
    %28 = arith.mulf %23, %27 : vector<64x64xf32>
    %29 = vector.broadcast %9 : vector<1x64xf32> to vector<64x64xf32>
    %30 = arith.mulf %28, %29 : vector<64x64xf32>
    %31 = vector.broadcast %10 : vector<1x64xf32> to vector<64x64xf32>
    %32 = arith.addf %30, %31 : vector<64x64xf32>
    %33 = arith.truncf %32 : vector<64x64xf32> to vector<64x64xbf16>
    %c0_16 = arith.constant 0 : index
    %c0_17 = arith.constant 0 : index
    %34 = vector.load %arg7[%c0_16, %c0_17] : memref<64x64xbf16, #tpu.memory_space<vmem>>, vector<64x64xbf16>
    tpu.vector_store %arg7[%c0_16, %c0_17], %33 {strides = array<i32>} : memref<64x64xbf16, #tpu.memory_space<vmem>>, vector<64x64xbf16>,
    return
  }
  func.func @transform_0(%arg0: i32) -> (i32, i32) {
    %c0_i32 = arith.constant 0 : i32
    %c0_i32_0 = arith.constant 0 : i32
    return %arg0, %c0_i32 : i32, i32
  }
  func.func @transform_1(%arg0: i32) -> (i32, i32) {
    %c0_i32 = arith.constant 0 : i32
    %c0_i32_0 = arith.constant 0 : i32
    return %arg0, %c0_i32 : i32, i32
  }
  func.func @transform_2(%arg0: i32) -> (i32, i32) {
    %c0_i32 = arith.constant 0 : i32
    %c0_i32_0 = arith.constant 0 : i32
    %c0_i32_1 = arith.constant 0 : i32
    return %c0_i32, %c0_i32_0 : i32, i32
  }
  func.func @transform_3(%arg0: i32) -> (i32, i32) {
    %c0_i32 = arith.constant 0 : i32
    %c0_i32_0 = arith.constant 0 : i32
    %c0_i32_1 = arith.constant 0 : i32
    return %c0_i32, %c0_i32_0 : i32, i32
  }
  func.func @transform_4(%arg0: i32) -> (i32, i32) {
    %c0_i32 = arith.constant 0 : i32
    %c0_i32_0 = arith.constant 0 : i32
    %c0_i32_1 = arith.constant 0 : i32
    return %c0_i32, %c0_i32_0 : i32, i32
  }
  func.func @transform_5(%arg0: i32) -> (i32, i32) {
    %c0_i32 = arith.constant 0 : i32
    %c0_i32_0 = arith.constant 0 : i32
    %c0_i32_1 = arith.constant 0 : i32
    return %c0_i32, %c0_i32_0 : i32, i32
  }
  func.func @transform_6(%arg0: i32) -> (i32, i32) {
    %c0_i32 = arith.constant 0 : i32
    %c0_i32_0 = arith.constant 0 : i32
    return %arg0, %c0_i32 : i32, i32
  }
}

module attributes {stable_mosaic.version = 11 : i64} {
  func.func @_ln_linear_kernel(%arg0: memref<2x64xbf16, #tpu.memory_space<vmem>>, %arg1: memref<1x64xf32, #tpu.memory_space<vmem>>, %arg2: memref<1x64xf32, #tpu.memory_space<vmem>>, %arg3: memref<64x32xbf16, #tpu.memory_space<vmem>>, %arg4: memref<1x32xf32, #tpu.memory_space<vmem>>, %arg5: memref<2x32xf32, #tpu.memory_space<vmem>>) attributes {dimension_semantics = [], scalar_prefetch = 0 : i64, scratch_operands = 0 : i64, tpu.core_type = #tpu.core_type<tc>} {
    %c0 = arith.constant 0 : index
    %c0_0 = arith.constant 0 : index
    %0 = vector.load %arg0[%c0, %c0_0] : memref<2x64xbf16, #tpu.memory_space<vmem>>, vector<2x64xbf16>
    %1 = arith.extf %0 : vector<2x64xbf16> to vector<2x64xf32>
    %c0_1 = arith.constant 0 : index
    %c0_2 = arith.constant 0 : index
    %2 = vector.load %arg1[%c0_1, %c0_2] : memref<1x64xf32, #tpu.memory_space<vmem>>, vector<1x64xf32>
    %c0_3 = arith.constant 0 : index
    %c0_4 = arith.constant 0 : index
    %3 = vector.load %arg2[%c0_3, %c0_4] : memref<1x64xf32, #tpu.memory_space<vmem>>, vector<1x64xf32>
    %cst = arith.constant dense<0.000000e+00> : vector<2xf32>
    %4 = vector.multi_reduction <add>, %1, %cst [1] : vector<2x64xf32> to vector<2xf32>
    %5 = vector.shape_cast %4 : vector<2xf32> to vector<2x1xf32>
    %cst_5 = arith.constant 6.400000e+01 : f32
    %6 = vector.broadcast %cst_5 : f32 to vector<2x1xf32>
    %7 = arith.divf %5, %6 : vector<2x1xf32>
    %8 = vector.broadcast %7 : vector<2x1xf32> to vector<2x64xf32>
    %9 = arith.subf %1, %8 : vector<2x64xf32>
    %10 = arith.mulf %9, %9 : vector<2x64xf32>
    %cst_6 = arith.constant dense<0.000000e+00> : vector<2xf32>
    %11 = vector.multi_reduction <add>, %10, %cst_6 [1] : vector<2x64xf32> to vector<2xf32>
    %12 = vector.shape_cast %11 : vector<2xf32> to vector<2x1xf32>
    %cst_7 = arith.constant 6.400000e+01 : f32
    %13 = vector.broadcast %cst_7 : f32 to vector<2x1xf32>
    %14 = arith.divf %12, %13 : vector<2x1xf32>
    %15 = vector.broadcast %7 : vector<2x1xf32> to vector<2x64xf32>
    %16 = arith.subf %1, %15 : vector<2x64xf32>
    %cst_8 = arith.constant 9.99999974E-6 : f32
    %17 = vector.broadcast %cst_8 : f32 to vector<2x1xf32>
    %18 = arith.addf %14, %17 : vector<2x1xf32>
    %19 = math.rsqrt %18 : vector<2x1xf32>
    %20 = vector.broadcast %19 : vector<2x1xf32> to vector<2x64xf32>
    %21 = arith.mulf %16, %20 : vector<2x64xf32>
    %22 = vector.broadcast %2 : vector<1x64xf32> to vector<2x64xf32>
    %23 = arith.mulf %21, %22 : vector<2x64xf32>
    %24 = vector.broadcast %3 : vector<1x64xf32> to vector<2x64xf32>
    %25 = arith.addf %23, %24 : vector<2x64xf32>
    %26 = arith.truncf %25 : vector<2x64xf32> to vector<2x64xbf16>
    %c0_9 = arith.constant 0 : index
    %c0_10 = arith.constant 0 : index
    %27 = vector.load %arg3[%c0_9, %c0_10] : memref<64x32xbf16, #tpu.memory_space<vmem>>, vector<64x32xbf16>
    %cst_11 = arith.constant dense<0.000000e+00> : vector<2x32xf32>
    %28 = tpu.matmul %26, %27, %cst_11 {dimension_numbers = #tpu.dot_dimension_numbers<[1], [0], [0], [1], [0, 0, 1, 1], [], []>} : vector<2x64xbf16>, vector<64x32xbf16>, vector<2x32xf32> -> vector<2x32xf32>
    %c0_12 = arith.constant 0 : index
    %c0_13 = arith.constant 0 : index
    %29 = vector.load %arg4[%c0_12, %c0_13] : memref<1x32xf32, #tpu.memory_space<vmem>>, vector<1x32xf32>
    %30 = vector.broadcast %29 : vector<1x32xf32> to vector<2x32xf32>
    %31 = arith.addf %28, %30 : vector<2x32xf32>
    %c0_14 = arith.constant 0 : index
    %c0_15 = arith.constant 0 : index
    %32 = vector.load %arg5[%c0_14, %c0_15] : memref<2x32xf32, #tpu.memory_space<vmem>>, vector<2x32xf32>
    tpu.vector_store %arg5[%c0_14, %c0_15], %31 {strides = array<i32>} : memref<2x32xf32, #tpu.memory_space<vmem>>, vector<2x32xf32>,
    return
  }
}

</mosaic_0001>

<llo_original>
// kernel: _lambda_.12
$region0: #{_lambda_.12}
  #allocation0 [shape = 'u32[]', space=smem, size = 0x4, offset = 0x4, fixed_abs, tag = 'smem constant byte address 0x4 - core index']
  #allocation1 [shape = 'u32[72,128]{1,0:T(1,128)}', space=vmem, size = 0x9000, scoped, tag = 'internal scratch']
  %s0 = inlined_call_operand.vmem [shape: bf16[64,64], index: 0, kind: input, shape index: {}]
  %s1 = inlined_call_operand.vmem [shape: f32[64,64], index: 1, kind: input, shape index: {}]
  %s2 = inlined_call_operand.vmem [shape: f32[1,64], index: 2, kind: input, shape index: {}]
  %s3 = inlined_call_operand.vmem [shape: f32[1,64], index: 3, kind: input, shape index: {}]
  %s4 = inlined_call_operand.vmem [shape: bf16[64,64], index: 4, kind: output, shape index: {}]
  %s5 = sld [smem:[#allocation0]]
  $region26: #{_lambda_.12} parent=0
    _
  %s7 = ssub.s32 1, %s5
  %s8 = scalar_select 0, %s7, %s5
  // Predicated region
  $region2: #{_lambda_.12} parent=0 // pred_check
    _
  $region3: #{_lambda_.12} parent=0 // pred_check_branch
    %10 = sbr.rel (0) target = $region5
  $region4: #{_lambda_.12} parent=0 // pred_region
    _
  $region5: #{_lambda_.12} parent=0 // pred_fallthru
    _
  // Predicated region
  $region6: #{_lambda_.12} parent=0 // pred_check
    _
  $region7: #{_lambda_.12} parent=0 // pred_check_branch
    %12 = sbr.rel (0) target = $region9
  $region8: #{_lambda_.12} parent=0 // pred_region
    _
  $region9: #{_lambda_.12} parent=0 // pred_fallthru
    _
  // Predicated region
  $region10: #{_lambda_.12} parent=0 // pred_check
    _
  $region11: #{_lambda_.12} parent=0 // pred_check_branch
    %14 = sbr.rel (0) target = $region13
  $region12: #{_lambda_.12} parent=0 // pred_region
    _
  $region13: #{_lambda_.12} parent=0 // pred_fallthru
    _
  // Predicated region
  $region14: #{_lambda_.12} parent=0 // pred_check
    _
  $region15: #{_lambda_.12} parent=0 // pred_check_branch
    %16 = sbr.rel (0) target = $region17
  $region16: #{_lambda_.12} parent=0 // pred_region
    _
  $region17: #{_lambda_.12} parent=0 // pred_fallthru
    _
  %v17 = vld [vmem:[%s0] sm:$0xf]
  %v18 = vld [vmem:[%s0 + $0x4] sm:$0xf]
  %v19 = vld [vmem:[%s0 + $0x8] sm:$0xf]
  %v20 = vld [vmem:[%s0 + $0xc] sm:$0xf]
  %v21 = vld [vmem:[%s0 + $0x10] sm:$0xf]
  %v22 = vld [vmem:[%s0 + $0x14] sm:$0xf]
  %v23 = vld [vmem:[%s0 + $0x18] sm:$0xf]
  %v24 = vld [vmem:[%s0 + $0x1c] sm:$0xf]
  %v25 = vunpack.c.l.bf16 %v17
  %v26 = vunpack.c.l.bf16 %v18
  %v27 = vunpack.c.l.bf16 %v19
  %v28 = vunpack.c.l.bf16 %v20
  %v29 = vunpack.c.l.bf16 %v21
  %v30 = vunpack.c.l.bf16 %v22
  %v31 = vunpack.c.l.bf16 %v23
  %v32 = vunpack.c.l.bf16 %v24
  %v33 = vld [vmem:[%s1] sm:$0xff]
  %v34 = vld [vmem:[%s1 + $0x8] sm:$0xff]
  %v35 = vld [vmem:[%s1 + $0x10] sm:$0xff]
  %v36 = vld [vmem:[%s1 + $0x18] sm:$0xff]
  %v37 = vld [vmem:[%s1 + $0x20] sm:$0xff]
  %v38 = vld [vmem:[%s1 + $0x28] sm:$0xff]
  %v39 = vld [vmem:[%s1 + $0x30] sm:$0xff]
  %v40 = vld [vmem:[%s1 + $0x38] sm:$0xff]
  %v41 = vadd.f32 %v25, %v33
  %v42 = vadd.f32 %v26, %v34
  %v43 = vadd.f32 %v27, %v35
  %v44 = vadd.f32 %v28, %v36
  %v45 = vadd.f32 %v29, %v37
  %v46 = vadd.f32 %v30, %v38
  %v47 = vadd.f32 %v31, %v39
  %v48 = vadd.f32 %v32, %v40
  %v49 = vld [vmem:[%s2] sm:$0x1]
  %v50 = vld [vmem:[%s3] sm:$0x1]
  %vm51 = vcmask 523264
  %v52 = vsel %vm51, %v41, 0.0
  %53 = vadd.xlane.f32.xlu0 %v52
  %v54 = vpop.xlane.xlu0 %53
  %v55 = vsel %vm51, %v42, 0.0
  %56 = vadd.xlane.f32.xlu0 %v55
  %v57 = vpop.xlane.xlu0 %56
  %v58 = vsel %vm51, %v43, 0.0
  %59 = vadd.xlane.f32.xlu0 %v58
  %v60 = vpop.xlane.xlu0 %59
  %v61 = vsel %vm51, %v44, 0.0
  %62 = vadd.xlane.f32.xlu0 %v61
  %v63 = vpop.xlane.xlu0 %62
  %v64 = vsel %vm51, %v45, 0.0
  %65 = vadd.xlane.f32.xlu0 %v64
  %v66 = vpop.xlane.xlu0 %65
  %v67 = vsel %vm51, %v46, 0.0
  %68 = vadd.xlane.f32.xlu0 %v67
  %v69 = vpop.xlane.xlu0 %68
  %v70 = vsel %vm51, %v47, 0.0
  %71 = vadd.xlane.f32.xlu0 %v70
  %v72 = vpop.xlane.xlu0 %71
  %v73 = vsel %vm51, %v48, 0.0
  %74 = vadd.xlane.f32.xlu0 %v73
  %v75 = vpop.xlane.xlu0 %74
  %v76 = vrcp.pop 64.0
  %v77 = vmul.f32 64.0, %v76
  %v78 = vsub.f32 1.0, %v77
  %v79 = vmul.f32 %v76, %v78
  %v80 = vadd.f32 %v76, %v79
  %vm81 = vweird.f32 %v76
  %v82 = vsel %vm81, %v76, %v80
  %v83 = vmul.f32 %v54, %v82
  %v84 = vmul.f32 %v57, %v82
  %v85 = vmul.f32 %v60, %v82
  %v86 = vmul.f32 %v63, %v82
  %v87 = vmul.f32 %v66, %v82
  %v88 = vmul.f32 %v69, %v82
  %v89 = vmul.f32 %v72, %v82
  %v90 = vmul.f32 %v75, %v82
  %v91 = vsub.f32 %v41, %v83
  %v92 = vsub.f32 %v42, %v84
  %v93 = vsub.f32 %v43, %v85
  %v94 = vsub.f32 %v44, %v86
  %v95 = vsub.f32 %v45, %v87
  %v96 = vsub.f32 %v46, %v88
  %v97 = vsub.f32 %v47, %v89
  %v98 = vsub.f32 %v48, %v90
  %v99 = vmul.f32 %v91, %v91
  %v100 = vmul.f32 %v92, %v92
  %v101 = vmul.f32 %v93, %v93
  %v102 = vmul.f32 %v94, %v94
  %v103 = vmul.f32 %v95, %v95
  %v104 = vmul.f32 %v96, %v96
  %v105 = vmul.f32 %v97, %v97
  %v106 = vmul.f32 %v98, %v98
  %v107 = vsel %vm51, %v99, 0.0
  %108 = vadd.xlane.f32.xlu0 %v107
  %v109 = vpop.xlane.xlu0 %108
  %v110 = vsel %vm51, %v100, 0.0
  %111 = vadd.xlane.f32.xlu0 %v110
  %v112 = vpop.xlane.xlu0 %111
  %v113 = vsel %vm51, %v101, 0.0
  %114 = vadd.xlane.f32.xlu0 %v113
  %v115 = vpop.xlane.xlu0 %114
  %v116 = vsel %vm51, %v102, 0.0
  %117 = vadd.xlane.f32.xlu0 %v116
  %v118 = vpop.xlane.xlu0 %117
  %v119 = vsel %vm51, %v103, 0.0
  %120 = vadd.xlane.f32.xlu0 %v119
  %v121 = vpop.xlane.xlu0 %120
  %v122 = vsel %vm51, %v104, 0.0
  %123 = vadd.xlane.f32.xlu0 %v122
  %v124 = vpop.xlane.xlu0 %123
  %v125 = vsel %vm51, %v105, 0.0
  %126 = vadd.xlane.f32.xlu0 %v125
  %v127 = vpop.xlane.xlu0 %126
  %v128 = vsel %vm51, %v106, 0.0
  %129 = vadd.xlane.f32.xlu0 %v128
  %v130 = vpop.xlane.xlu0 %129
  %v131 = vmul.f32 %v109, %v82
  %v132 = vmul.f32 %v112, %v82
  %v133 = vmul.f32 %v115, %v82
  %v134 = vmul.f32 %v118, %v82
  %v135 = vmul.f32 %v121, %v82
  %v136 = vmul.f32 %v124, %v82
  %v137 = vmul.f32 %v127, %v82
  %v138 = vmul.f32 %v130, %v82
  %v139 = vadd.f32 %v131, 1e-05
  %v140 = vadd.f32 %v132, 1e-05
  %v141 = vadd.f32 %v133, 1e-05
  %v142 = vadd.f32 %v134, 1e-05
  %v143 = vadd.f32 %v135, 1e-05
  %v144 = vadd.f32 %v136, 1e-05
  %v145 = vadd.f32 %v137, 1e-05
  %v146 = vadd.f32 %v138, 1e-05
  %v147 = vrsqrt.pop %v139
  %v148 = vmul.f32 %v147, %v139
  %v149 = vmul.f32 %v148, %v147
  %v150 = vmul.f32 0.5, %v149
  %v151 = vsub.f32 1.5, %v150
  %v152 = vmul.f32 %v147, %v151
  %vm153 = vweird.f32 %v139
  %vm154 = vweird.f32 %v147
  %vm155 = vmor %vm153, %vm154
  %v156 = vsel %vm155, %v147, %v152
  %v157 = vrsqrt.pop %v140
  %v158 = vmul.f32 %v157, %v140
  %v159 = vmul.f32 %v158, %v157
  %v160 = vmul.f32 0.5, %v159
  %v161 = vsub.f32 1.5, %v160
  %v162 = vmul.f32 %v157, %v161
  %vm163 = vweird.f32 %v140
  %vm164 = vweird.f32 %v157
  %vm165 = vmor %vm163, %vm164
  %v166 = vsel %vm165, %v157, %v162
  %v167 = vrsqrt.pop %v141
  %v168 = vmul.f32 %v167, %v141
  %v169 = vmul.f32 %v168, %v167
  %v170 = vmul.f32 0.5, %v169
  %v171 = vsub.f32 1.5, %v170
  %v172 = vmul.f32 %v167, %v171
  %vm173 = vweird.f32 %v141
  %vm174 = vweird.f32 %v167
  %vm175 = vmor %vm173, %vm174
  %v176 = vsel %vm175, %v167, %v172
  %v177 = vrsqrt.pop %v142
  %v178 = vmul.f32 %v177, %v142
  %v179 = vmul.f32 %v178, %v177
  %v180 = vmul.f32 0.5, %v179
  %v181 = vsub.f32 1.5, %v180
  %v182 = vmul.f32 %v177, %v181
  %vm183 = vweird.f32 %v142
  %vm184 = vweird.f32 %v177
  %vm185 = vmor %vm183, %vm184
  %v186 = vsel %vm185, %v177, %v182
  %v187 = vrsqrt.pop %v143
  %v188 = vmul.f32 %v187, %v143
  %v189 = vmul.f32 %v188, %v187
  %v190 = vmul.f32 0.5, %v189
  %v191 = vsub.f32 1.5, %v190
  %v192 = vmul.f32 %v187, %v191
  %vm193 = vweird.f32 %v143
  %vm194 = vweird.f32 %v187
  %vm195 = vmor %vm193, %vm194
  %v196 = vsel %vm195, %v187, %v192
  %v197 = vrsqrt.pop %v144
  %v198 = vmul.f32 %v197, %v144
  %v199 = vmul.f32 %v198, %v197
  %v200 = vmul.f32 0.5, %v199
  %v201 = vsub.f32 1.5, %v200
  %v202 = vmul.f32 %v197, %v201
  %vm203 = vweird.f32 %v144
  %vm204 = vweird.f32 %v197
  %vm205 = vmor %vm203, %vm204
  %v206 = vsel %vm205, %v197, %v202
  %v207 = vrsqrt.pop %v145
  %v208 = vmul.f32 %v207, %v145
  %v209 = vmul.f32 %v208, %v207
  %v210 = vmul.f32 0.5, %v209
  %v211 = vsub.f32 1.5, %v210
  %v212 = vmul.f32 %v207, %v211
  %vm213 = vweird.f32 %v145
  %vm214 = vweird.f32 %v207
  %vm215 = vmor %vm213, %vm214
  %v216 = vsel %vm215, %v207, %v212
  %v217 = vrsqrt.pop %v146
  %v218 = vmul.f32 %v217, %v146
  %v219 = vmul.f32 %v218, %v217
  %v220 = vmul.f32 0.5, %v219
  %v221 = vsub.f32 1.5, %v220
  %v222 = vmul.f32 %v217, %v221
  %vm223 = vweird.f32 %v146
  %vm224 = vweird.f32 %v217
  %vm225 = vmor %vm223, %vm224
  %v226 = vsel %vm225, %v217, %v222
  %v227 = vmul.f32 %v91, %v156
  %v228 = vmul.f32 %v92, %v166
  %v229 = vmul.f32 %v93, %v176
  %v230 = vmul.f32 %v94, %v186
  %v231 = vmul.f32 %v95, %v196
  %v232 = vmul.f32 %v96, %v206
  %v233 = vmul.f32 %v97, %v216
  %v234 = vmul.f32 %v98, %v226
  %v236 = vperm.slane %v49, 0
  %v238 = vmul.f32 %v227, %v236
  %v239 = vmul.f32 %v228, %v236
  %v240 = vmul.f32 %v229, %v236
  %v241 = vmul.f32 %v230, %v236
  %v242 = vmul.f32 %v231, %v236
  %v243 = vmul.f32 %v232, %v236
  %v244 = vmul.f32 %v233, %v236
  %v245 = vmul.f32 %v234, %v236
  %v247 = vperm.slane %v50, 0
  %v249 = vadd.f32 %v238, %v247
  %v250 = vadd.f32 %v239, %v247
  %v251 = vadd.f32 %v240, %v247
  %v252 = vadd.f32 %v241, %v247
  %v253 = vadd.f32 %v242, %v247
  %v254 = vadd.f32 %v243, %v247
  %v255 = vadd.f32 %v244, %v247
  %v256 = vadd.f32 %v245, %v247
  %v257 = vpack.c.bf16 %v249, %v249
  %v258 = vpack.c.bf16 %v250, %v250
  %v259 = vpack.c.bf16 %v251, %v251
  %v260 = vpack.c.bf16 %v252, %v252
  %v261 = vpack.c.bf16 %v253, %v253
  %v262 = vpack.c.bf16 %v254, %v254
  %v263 = vpack.c.bf16 %v255, %v255
  %v264 = vpack.c.bf16 %v256, %v256
  %vm265 = vcmask 519168
  %266 = vst.msk [vmem:[%s4] sm:$0xf] %vm265, %v257
  %267 = vst.msk [vmem:[%s4 + $0x4] sm:$0xf] %vm265, %v258
  %268 = vst.msk [vmem:[%s4 + $0x8] sm:$0xf] %vm265, %v259
  %269 = vst.msk [vmem:[%s4 + $0xc] sm:$0xf] %vm265, %v260
  %270 = vst.msk [vmem:[%s4 + $0x10] sm:$0xf] %vm265, %v261
  %271 = vst.msk [vmem:[%s4 + $0x14] sm:$0xf] %vm265, %v262
  %272 = vst.msk [vmem:[%s4 + $0x18] sm:$0xf] %vm265, %v263
  %273 = vst.msk [vmem:[%s4 + $0x1c] sm:$0xf] %vm265, %v264
  // Predicated region
  $region18: #{_lambda_.12} parent=0 // pred_check
    _
  $region19: #{_lambda_.12} parent=0 // pred_check_branch
    %275 = sbr.rel (0) target = $region21
  $region20: #{_lambda_.12} parent=0 // pred_region
    _
  $region21: #{_lambda_.12} parent=0 // pred_fallthru
    _
  // Predicated region
  $region22: #{_lambda_.12} parent=0 // pred_check
    _
  $region23: #{_lambda_.12} parent=0 // pred_check_branch
    %277 = sbr.rel (0) target = $region25
  $region24: #{_lambda_.12} parent=0 // pred_region
    _
  $region25: #{_lambda_.12} parent=0 // pred_fallthru
    _

// kernel: _lambda_.11
$region0: #{_lambda_.11}
  #allocation0 [shape = 'u32[]', space=smem, size = 0x4, offset = 0x4, fixed_abs, tag = 'smem constant byte address 0x4 - core index']
  #allocation1 [shape = 'u32[72,128]{1,0:T(1,128)}', space=vmem, size = 0x9000, scoped, tag = 'internal scratch']
  %s0 = inlined_call_operand.vmem [shape: bf16[32,64], index: 0, kind: input, shape index: {}]
  %s1 = inlined_call_operand.vmem [shape: bf16[64,64], index: 1, kind: input, shape index: {}]
  %s2 = inlined_call_operand.vmem [shape: f32[1,64], index: 2, kind: input, shape index: {}]
  %s3 = inlined_call_operand.vmem [shape: bf16[32,64], index: 3, kind: output, shape index: {}]
  %s4 = sld [smem:[#allocation0]]
  $region22: #{_lambda_.11} parent=0
    _
  %s6 = ssub.s32 1, %s4
  %s7 = scalar_select 0, %s6, %s4
  // Predicated region
  $region2: #{_lambda_.11} parent=0 // pred_check
    _
  $region3: #{_lambda_.11} parent=0 // pred_check_branch
    %9 = sbr.rel (0) target = $region5
  $region4: #{_lambda_.11} parent=0 // pred_region
    _
  $region5: #{_lambda_.11} parent=0 // pred_fallthru
    _
  // Predicated region
  $region6: #{_lambda_.11} parent=0 // pred_check
    _
  $region7: #{_lambda_.11} parent=0 // pred_check_branch
    %11 = sbr.rel (0) target = $region9
  $region8: #{_lambda_.11} parent=0 // pred_region
    _
  $region9: #{_lambda_.11} parent=0 // pred_fallthru
    _
  // Predicated region
  $region10: #{_lambda_.11} parent=0 // pred_check
    _
  $region11: #{_lambda_.11} parent=0 // pred_check_branch
    %13 = sbr.rel (0) target = $region13
  $region12: #{_lambda_.11} parent=0 // pred_region
    _
  $region13: #{_lambda_.11} parent=0 // pred_fallthru
    _
  %v15 = vld [vmem:[%s0] sm:$0xf]
  %v16 = vld [vmem:[%s0 + $0x4] sm:$0xf]
  %v17 = vld [vmem:[%s0 + $0x8] sm:$0xf]
  %v18 = vld [vmem:[%s0 + $0xc] sm:$0xf]
  %v19 = vld [vmem:[%s1] sm:$0xf]
  %v20 = vld [vmem:[%s1 + $0x4] sm:$0xf]
  %v21 = vld [vmem:[%s1 + $0x8] sm:$0xf]
  %v22 = vld [vmem:[%s1 + $0xc] sm:$0xf]
  %v23 = vld [vmem:[%s1 + $0x10] sm:$0xf]
  %v24 = vld [vmem:[%s1 + $0x14] sm:$0xf]
  %v25 = vld [vmem:[%s1 + $0x18] sm:$0xf]
  %v26 = vld [vmem:[%s1 + $0x1c] sm:$0xf]
  %v27 = vld [vmem:[%s2] sm:$0x1]
  %v29 = vperm.slane %v27, 0
  %v35 = vunpack.c.l.b16 %v15
  %v36 = vunpack.c.l.b16 %v16
  %v37 = vunpack.c.l.b16 %v17
  %v38 = vunpack.c.l.b16 %v18
  %v39 = vpack.c.b16 %v36, %v35
  %v40 = vpack.c.b16 %v38, %v37
  %v49 = vunpack.c.l.b16 %v19
  %v50 = vunpack.c.l.b16 %v20
  %v51 = vunpack.c.l.b16 %v21
  %v52 = vunpack.c.l.b16 %v22
  %v53 = vunpack.c.l.b16 %v23
  %v54 = vunpack.c.l.b16 %v24
  %v55 = vunpack.c.l.b16 %v25
  %v56 = vunpack.c.l.b16 %v26
  %v57 = vpack.c.b16 %v50, %v49
  %v58 = vpack.c.b16 %v52, %v51
  %v59 = vpack.c.b16 %v54, %v53
  %v60 = vpack.c.b16 %v56, %v55
  %vm65 = vcmask 523264
  %v67 = vsel %vm65, %v39, 0
  %v70 = vsel %vm65, %v40, 0
  %72 = vmatpush.bf16.msra.mxu0 0
  %73 = vmatpush.bf16.msra.mxu0 0
  %74 = vmatpush.bf16.msra.mxu0 0
  %75 = vmatpush.bf16.msra.mxu0 0
  %76 = vmatpush.bf16.msra.mxu0 %v60
  %77 = vmatpush.bf16.msra.mxu0 %v59
  %78 = vmatpush.bf16.msra.mxu0 %v58
  %79 = vmatpush.bf16.msra.mxu0 %v57
  %80 = vmatmul.bf16.gmra.mxu0 %v67
  %v81 = vpop.f32.mrf.mxu0
  %v82 = vadd.f32 %v29, %v81
  %v83 = vpop.f32.mrf.mxu0
  %v84 = vadd.f32 %v29, %v83
  %85 = vmatmul.bf16.gmra.mxu0 %v70
  %v86 = vpop.f32.mrf.mxu0
  %v87 = vadd.f32 %v29, %v86
  %v88 = vpop.f32.mrf.mxu0
  %v89 = vadd.f32 %v29, %v88
  %90 = vdwg.mxu0
  %v91 = vpack.c.bf16 %v82, %v82
  %v92 = vpack.c.bf16 %v84, %v84
  %v93 = vpack.c.bf16 %v87, %v87
  %v94 = vpack.c.bf16 %v89, %v89
  %vm95 = vcmask 519168
  %96 = vst.msk [vmem:[%s3] sm:$0xf] %vm95, %v91
  %97 = vst.msk [vmem:[%s3 + $0x4] sm:$0xf] %vm95, %v92
  %98 = vst.msk [vmem:[%s3 + $0x8] sm:$0xf] %vm95, %v93
  %99 = vst.msk [vmem:[%s3 + $0xc] sm:$0xf] %vm95, %v94
  // Predicated region
  $region14: #{_lambda_.11} parent=0 // pred_check
    _
  $region15: #{_lambda_.11} parent=0 // pred_check_branch
    %101 = sbr.rel (0) target = $region17
  $region16: #{_lambda_.11} parent=0 // pred_region
    _
  $region17: #{_lambda_.11} parent=0 // pred_fallthru
    _
  // Predicated region
  $region18: #{_lambda_.11} parent=0 // pred_check
    _
  $region19: #{_lambda_.11} parent=0 // pred_check_branch
    %103 = sbr.rel (0) target = $region21
  $region20: #{_lambda_.11} parent=0 // pred_region
    _
  $region21: #{_lambda_.11} parent=0 // pred_fallthru
    _

// kernel: _lambda_.13
$region0: #{_lambda_.13}
  #allocation0 [shape = 'u32[]', space=smem, size = 0x4, offset = 0x4, fixed_abs, tag = 'smem constant byte address 0x4 - core index']
  #allocation1 [shape = 'u32[72,128]{1,0:T(1,128)}', space=vmem, size = 0x9000, scoped, tag = 'internal scratch']
  %s0 = inlined_call_operand.vmem [shape: bf16[64,64], index: 0, kind: input, shape index: {}]
  %s1 = inlined_call_operand.vmem [shape: bf16[64,192], index: 1, kind: input, shape index: {}]
  %s2 = inlined_call_operand.vmem [shape: f32[1,192], index: 2, kind: input, shape index: {}]
  %s3 = inlined_call_operand.vmem [shape: bf16[64,192], index: 3, kind: output, shape index: {}]
  %s4 = sld [smem:[#allocation0]]
  $region22: #{_lambda_.13} parent=0
    _
  %s6 = ssub.s32 1, %s4
  %s7 = scalar_select 0, %s6, %s4
  // Predicated region
  $region2: #{_lambda_.13} parent=0 // pred_check
    _
  $region3: #{_lambda_.13} parent=0 // pred_check_branch
    %9 = sbr.rel (0) target = $region5
  $region4: #{_lambda_.13} parent=0 // pred_region
    _
  $region5: #{_lambda_.13} parent=0 // pred_fallthru
    _
  // Predicated region
  $region6: #{_lambda_.13} parent=0 // pred_check
    _
  $region7: #{_lambda_.13} parent=0 // pred_check_branch
    %11 = sbr.rel (0) target = $region9
  $region8: #{_lambda_.13} parent=0 // pred_region
    _
  $region9: #{_lambda_.13} parent=0 // pred_fallthru
    _
  // Predicated region
  $region10: #{_lambda_.13} parent=0 // pred_check
    _
  $region11: #{_lambda_.13} parent=0 // pred_check_branch
    %13 = sbr.rel (0) target = $region13
  $region12: #{_lambda_.13} parent=0 // pred_region
    _
  $region13: #{_lambda_.13} parent=0 // pred_fallthru
    _
  %v15 = vld [vmem:[%s0] sm:$0xf]
  %v16 = vld [vmem:[%s0 + $0x4] sm:$0xf]
  %v17 = vld [vmem:[%s0 + $0x8] sm:$0xf]
  %v18 = vld [vmem:[%s0 + $0xc] sm:$0xf]
  %v19 = vld [vmem:[%s0 + $0x10] sm:$0xf]
  %v20 = vld [vmem:[%s0 + $0x14] sm:$0xf]
  %v21 = vld [vmem:[%s0 + $0x18] sm:$0xf]
  %v22 = vld [vmem:[%s0 + $0x1c] sm:$0xf]
  %v23 = vld [vmem:[%s1] sm:$0xff]
  %v24 = vld [vmem:[%s1 + $0x8] sm:$0xff]
  %v25 = vld [vmem:[%s1 + $0x10] sm:$0xff]
  %v26 = vld [vmem:[%s1 + $0x18] sm:$0xff]
  %v27 = vld [vmem:[%s1 + $0x20] sm:$0xff]
  %v28 = vld [vmem:[%s1 + $0x28] sm:$0xff]
  %v29 = vld [vmem:[%s1 + $0x30] sm:$0xff]
  %v30 = vld [vmem:[%s1 + $0x38] sm:$0xff]
  %v31 = vld [vmem:[%s2] sm:$0x3]
  %v33 = vperm.slane %v31, 0
  %v34 = vperm.slane %v31, 1
  %v45 = vunpack.c.l.b16 %v15
  %v46 = vunpack.c.l.b16 %v16
  %v47 = vunpack.c.l.b16 %v17
  %v48 = vunpack.c.l.b16 %v18
  %v49 = vunpack.c.l.b16 %v19
  %v50 = vunpack.c.l.b16 %v20
  %v51 = vunpack.c.l.b16 %v21
  %v52 = vunpack.c.l.b16 %v22
  %v53 = vpack.c.b16 %v46, %v45
  %v54 = vpack.c.b16 %v48, %v47
  %v55 = vpack.c.b16 %v50, %v49
  %v56 = vpack.c.b16 %v52, %v51
  %v65 = vunpack.c.l.b16 %v23
  %v66 = vunpack.c.h.b16 %v23
  %v67 = vunpack.c.l.b16 %v24
  %v68 = vunpack.c.h.b16 %v24
  %v69 = vunpack.c.l.b16 %v25
  %v70 = vunpack.c.h.b16 %v25
  %v71 = vunpack.c.l.b16 %v26
  %v72 = vunpack.c.h.b16 %v26
  %v73 = vunpack.c.l.b16 %v27
  %v74 = vunpack.c.h.b16 %v27
  %v75 = vunpack.c.l.b16 %v28
  %v76 = vunpack.c.h.b16 %v28
  %v77 = vunpack.c.l.b16 %v29
  %v78 = vunpack.c.h.b16 %v29
  %v79 = vunpack.c.l.b16 %v30
  %v80 = vunpack.c.h.b16 %v30
  %v81 = vpack.c.b16 %v67, %v65
  %v82 = vpack.c.b16 %v68, %v66
  %v83 = vpack.c.b16 %v71, %v69
  %v84 = vpack.c.b16 %v72, %v70
  %v85 = vpack.c.b16 %v75, %v73
  %v86 = vpack.c.b16 %v76, %v74
  %v87 = vpack.c.b16 %v79, %v77
  %v88 = vpack.c.b16 %v80, %v78
  %vm97 = vcmask 523264
  %v99 = vsel %vm97, %v53, 0
  %v102 = vsel %vm97, %v54, 0
  %v105 = vsel %vm97, %v55, 0
  %v108 = vsel %vm97, %v56, 0
  %110 = vmatpush.bf16.msra.mxu0 0
  %111 = vmatpush.bf16.msra.mxu0 0
  %112 = vmatpush.bf16.msra.mxu0 0
  %113 = vmatpush.bf16.msra.mxu0 0
  %114 = vmatpush.bf16.msra.mxu0 %v87
  %115 = vmatpush.bf16.msra.mxu0 %v85
  %116 = vmatpush.bf16.msra.mxu0 %v83
  %117 = vmatpush.bf16.msra.mxu0 %v81
  %118 = vmatmul.bf16.gmra.mxu0 %v99
  %v119 = vpop.f32.mrf.mxu0
  %v120 = vadd.f32 %v33, %v119
  %v121 = vpop.f32.mrf.mxu0
  %v122 = vadd.f32 %v33, %v121
  %123 = vmatmul.bf16.gmra.mxu0 %v102
  %v124 = vpop.f32.mrf.mxu0
  %v125 = vadd.f32 %v33, %v124
  %v126 = vpop.f32.mrf.mxu0
  %v127 = vadd.f32 %v33, %v126
  %128 = vmatmul.bf16.gmra.mxu0 %v105
  %v129 = vpop.f32.mrf.mxu0
  %v130 = vadd.f32 %v33, %v129
  %v131 = vpop.f32.mrf.mxu0
  %v132 = vadd.f32 %v33, %v131
  %133 = vmatmul.bf16.gmra.mxu0 %v108
  %v134 = vpop.f32.mrf.mxu0
  %v135 = vadd.f32 %v33, %v134
  %v136 = vpop.f32.mrf.mxu0
  %v137 = vadd.f32 %v33, %v136
  %138 = vdwg.mxu0
  %139 = vmatpush.bf16.msra.mxu0 0
  %140 = vmatpush.bf16.msra.mxu0 0
  %141 = vmatpush.bf16.msra.mxu0 0
  %142 = vmatpush.bf16.msra.mxu0 0
  %143 = vmatpush.bf16.msra.mxu0 %v88
  %144 = vmatpush.bf16.msra.mxu0 %v86
  %145 = vmatpush.bf16.msra.mxu0 %v84
  %146 = vmatpush.bf16.msra.mxu0 %v82
  %147 = vmatmul.bf16.gmra.mxu0 %v99
  %v148 = vpop.f32.mrf.mxu0
  %v149 = vadd.f32 %v34, %v148
  %v150 = vpop.f32.mrf.mxu0
  %v151 = vadd.f32 %v34, %v150
  %152 = vmatmul.bf16.gmra.mxu0 %v102
  %v153 = vpop.f32.mrf.mxu0
  %v154 = vadd.f32 %v34, %v153
  %v155 = vpop.f32.mrf.mxu0
  %v156 = vadd.f32 %v34, %v155
  %157 = vmatmul.bf16.gmra.mxu0 %v105
  %v158 = vpop.f32.mrf.mxu0
  %v159 = vadd.f32 %v34, %v158
  %v160 = vpop.f32.mrf.mxu0
  %v161 = vadd.f32 %v34, %v160
  %162 = vmatmul.bf16.gmra.mxu0 %v108
  %v163 = vpop.f32.mrf.mxu0
  %v164 = vadd.f32 %v34, %v163
  %v165 = vpop.f32.mrf.mxu0
  %v166 = vadd.f32 %v34, %v165
  %167 = vdwg.mxu0
  %v168 = vpack.c.bf16 %v149, %v120
  %v169 = vpack.c.bf16 %v151, %v122
  %v170 = vpack.c.bf16 %v154, %v125
  %v171 = vpack.c.bf16 %v156, %v127
  %v172 = vpack.c.bf16 %v159, %v130
  %v173 = vpack.c.bf16 %v161, %v132
  %v174 = vpack.c.bf16 %v164, %v135
  %v175 = vpack.c.bf16 %v166, %v137
  %vm176 = vcmask 1043456
  %vm177 = vcmask 523268
  %vm178 = vmor %vm177, %vm176
  %179 = vst.msk [vmem:[%s3] sm:$0xff] %vm178, %v168
  %180 = vst.msk [vmem:[%s3 + $0x8] sm:$0xff] %vm178, %v169
  %181 = vst.msk [vmem:[%s3 + $0x10] sm:$0xff] %vm178, %v170
  %182 = vst.msk [vmem:[%s3 + $0x18] sm:$0xff] %vm178, %v171
  %183 = vst.msk [vmem:[%s3 + $0x20] sm:$0xff] %vm178, %v172
  %184 = vst.msk [vmem:[%s3 + $0x28] sm:$0xff] %vm178, %v173
  %185 = vst.msk [vmem:[%s3 + $0x30] sm:$0xff] %vm178, %v174
  %186 = vst.msk [vmem:[%s3 + $0x38] sm:$0xff] %vm178, %v175
  // Predicated region
  $region14: #{_lambda_.13} parent=0 // pred_check
    _
  $region15: #{_lambda_.13} parent=0 // pred_check_branch
    %188 = sbr.rel (0) target = $region17
  $region16: #{_lambda_.13} parent=0 // pred_region
    _
  $region17: #{_lambda_.13} parent=0 // pred_fallthru
    _
  // Predicated region
  $region18: #{_lambda_.13} parent=0 // pred_check
    _
  $region19: #{_lambda_.13} parent=0 // pred_check_branch
    %190 = sbr.rel (0) target = $region21
  $region20: #{_lambda_.13} parent=0 // pred_region
    _
  $region21: #{_lambda_.13} parent=0 // pred_fallthru
    _

// kernel: _lambda_.14
$region0: #{_lambda_.14}
  #allocation0 [shape = 'u32[]', space=smem, size = 0x4, offset = 0x4, fixed_abs, tag = 'smem constant byte address 0x4 - core index']
  #allocation1 [shape = 'u32[72,128]{1,0:T(1,128)}', space=vmem, size = 0x9000, scoped, tag = 'internal scratch']
  %s0 = inlined_call_operand.vmem [shape: bf16[2,32,192], index: 0, kind: input, shape index: {}]
  %s1 = inlined_call_operand.vmem [shape: bf16[2,32,64], index: 1, kind: output, shape index: {}]
  %s2 = sld [smem:[#allocation0]]
  $region37: #{_lambda_.14} parent=0
    _
  %s4 = ssub.s32 1, %s2
  %s5 = scalar_select 0, %s4, %s2
  loop: start=0, step=1, limit=4
  $region2: #{_lambda_.14} parent=0 // loop_pre_header
    _
  $region3: #{_lambda_.14} parent=0 // loop_header
    %s7 = sphi 0, %s11
    %p8 = scmp.ge.s32.totalorder %s7, 4
    %s17 = sphi 0, %s19
    %s20 = sphi 0, %s17
    %s21 = sphi 0, %s20
    %s37 = sphi 0, %s21
    %s43 = sphi 0, %s45
    %s46 = sphi 0, %s43
    %s47 = sphi 0, %s46
    %s63 = sphi 0, %s47
  $region4: #{_lambda_.14} parent=0 // loop_header_branch
    %10 = sbr.rel (%p8) target = $region8
  $region5: #{_lambda_.14} parent=0 // loop_body
    %s12 = ssub.s32 %s7, 1
    %s13 = ssub.s32 %s7, 2
    %s14 = sadd.s32 %s7, 1
    %s15 = ssub.s32 %s7, %s14
    %p16 = scmp.eq.s32.totalorder %s15, 0
    %s18 = sadd.s32 %s17, 1
    %s19 = scalar_select %p16, %s17, %s18
    %p22 = pneg %p16
    %p23 = scmp.eq.s32.totalorder %s7, 1
    %p24 = por %p22, %p23
    %p25 = scmp.ne.s32.totalorder %s17, %s20
    %p26 = scmp.eq.s32.totalorder %s7, 0
    %p27 = por %p25, %p26
    %p28 = scmp.ne.s32.totalorder %s17, %s20
    %p29 = scmp.eq.s32.totalorder %s12, 1
    %p30 = por %p28, %p29
    %p31 = scmp.ne.s32.totalorder %s20, %s21
    %p32 = scmp.eq.s32.totalorder %s12, 0
    %p33 = por %p31, %p32
    %p34 = scmp.ne.s32.totalorder %s20, %s21
    %p35 = scmp.eq.s32.totalorder %s13, 1
    %p36 = por %p34, %p35
    %p38 = scmp.ne.s32.totalorder %s21, %s37
    %p39 = scmp.eq.s32.totalorder %s13, 0
    %p40 = por %p38, %p39
    %s41 = ssub.s32 %s7, %s14
    %p42 = scmp.eq.s32.totalorder %s41, 0
    %s44 = sadd.s32 %s43, 1
    %s45 = scalar_select %p42, %s43, %s44
    %p48 = pneg %p42
    %p49 = scmp.eq.s32.totalorder %s7, 1
    %p50 = por %p48, %p49
    %p51 = scmp.ne.s32.totalorder %s43, %s46
    %p52 = scmp.eq.s32.totalorder %s7, 0
    %p53 = por %p51, %p52
    %p54 = scmp.ne.s32.totalorder %s43, %s46
    %p55 = scmp.eq.s32.totalorder %s12, 1
    %p56 = por %p54, %p55
    %p57 = scmp.ne.s32.totalorder %s46, %s47
    %p58 = scmp.eq.s32.totalorder %s12, 0
    %p59 = por %p57, %p58
    %p60 = scmp.ne.s32.totalorder %s46, %s47
    %p61 = scmp.eq.s32.totalorder %s13, 1
    %p62 = por %p60, %p61
    %p64 = scmp.ne.s32.totalorder %s47, %s63
    %p65 = scmp.eq.s32.totalorder %s13, 0
    %p66 = por %p64, %p65
    %p67 = scmp.le.s32.totalorder 1, %s7
    %p68 = scmp.lt.s32.totalorder %s7, 3
    %p69 = pnand %p67, %p68
    %p70 = pneg %p69
    // Predicated region
    $region9: #{_lambda_.14} parent=5 // pred_check
      _
    $region10: #{_lambda_.14} parent=5 // pred_check_branch
      %72 = sbr.rel (%p69) target = $region12
    $region11: #{_lambda_.14} parent=5 // pred_region
      %s73 = ssub.s32 %s7, 1
    $region12: #{_lambda_.14} parent=5 // pred_fallthru
      _
    %p74 = scmp.lt.s32.totalorder %s7, 2
    // Predicated region
    $region13: #{_lambda_.14} parent=5 // pred_check
      %p75 = pneg %p74
    $region14: #{_lambda_.14} parent=5 // pred_check_branch
      %77 = sbr.rel (%p75) target = $region16
    $region15: #{_lambda_.14} parent=5 // pred_region
      // Predicated region
      $region17: #{_lambda_.14} parent=15 // pred_check
        %p78 = pneg %p27
      $region18: #{_lambda_.14} parent=15 // pred_check_branch
        %80 = sbr.rel (%p78) target = $region20
      $region19: #{_lambda_.14} parent=15 // pred_region
        %p81 = scmp.lt.s32.totalorder %s7, 1
        %s82 = scalar_select %p81, %s7, 1
        %s83 = smul.addr %s82, 8
        %s84 = smul.addr %s83, 4
        %s85 = scalar_lea.vmem %s0, %s84
      $region20: #{_lambda_.14} parent=15 // pred_fallthru
        _
    $region16: #{_lambda_.14} parent=5 // pred_fallthru
      _
    %p86 = scmp.le.s32.totalorder 1, %s7
    %p87 = scmp.lt.s32.totalorder %s7, 3
    %p88 = pnand %p86, %p87
    %p89 = pneg %p88
    // Predicated region
    $region21: #{_lambda_.14} parent=5 // pred_check
      _
    $region22: #{_lambda_.14} parent=5 // pred_check_branch
      %91 = sbr.rel (%p88) target = $region24
    $region23: #{_lambda_.14} parent=5 // pred_region
      %s92 = ssub.s32 %s7, 1
      %p93 = scmp.lt.s32.totalorder %s12, 1
      %s94 = scalar_select %p93, %s12, 1
      %s95 = smul.addr %s94, 8
      %s96 = smul.addr %s95, 4
      %s97 = scalar_lea.vmem %s0, %s96
      %p98 = pneg %p33
      %p99 = pneg %p30
      %p100 = pneg %p59
      %p101 = pneg %p56
      %p102 = scmp.lt.s32.totalorder %s12, 1
      %s103 = scalar_select %p102, %s12, 1
      %s104 = smul.addr %s103, 4
      %s105 = smul.addr %s104, 4
      %s106 = scalar_lea.vmem %s1, %s105
      %p107 = scmp.lt.s32.totalorder %s12, 1
      %s108 = scalar_select %p107, %s12, 1
      %s109 = smul.addr %s108, 8
      %s110 = smul.addr %s109, 4
      %s111 = scalar_lea.vmem %s0, %s110
      %p112 = scmp.lt.s32.totalorder %s12, 1
      %s113 = scalar_select %p112, %s12, 1
      %s114 = smul.addr %s113, 4
      %s115 = smul.addr %s114, 4
      %s116 = scalar_lea.vmem %s1, %s115
      %v118 = vld [vmem:[%s111] sm:$0xff]
      %v119 = vld [vmem:[%s111 + $0x8] sm:$0xff]
      %v120 = vld [vmem:[%s111 + $0x10] sm:$0xff]
      %v121 = vld [vmem:[%s111 + $0x18] sm:$0xff]
      %126 = vrot.lane.b32.xlu0 %v118, 112
      %v127 = vpop.permute.xlu0 %126
      %128 = vrot.lane.b32.xlu0 %v119, 112
      %v129 = vpop.permute.xlu0 %128
      %130 = vrot.lane.b32.xlu0 %v120, 112
      %v131 = vpop.permute.xlu0 %130
      %132 = vrot.lane.b32.xlu0 %v121, 112
      %v133 = vpop.permute.xlu0 %132
      %134 = vrot.lane.b32.xlu0 %v118, 96
      %v135 = vpop.permute.xlu0 %134
      %136 = vrot.lane.b32.xlu0 %v119, 96
      %v137 = vpop.permute.xlu0 %136
      %138 = vrot.lane.b32.xlu0 %v120, 96
      %v139 = vpop.permute.xlu0 %138
      %140 = vrot.lane.b32.xlu0 %v121, 96
      %v141 = vpop.permute.xlu0 %140
      %142 = vrot.lane.b32.xlu0 %v118, 80
      %v143 = vpop.permute.xlu0 %142
      %144 = vrot.lane.b32.xlu0 %v119, 80
      %v145 = vpop.permute.xlu0 %144
      %146 = vrot.lane.b32.xlu0 %v120, 80
      %v147 = vpop.permute.xlu0 %146
      %148 = vrot.lane.b32.xlu0 %v121, 80
      %v149 = vpop.permute.xlu0 %148
      %v150 = vrot.slane %v118, 4
      %v151 = vrot.slane %v119, 4
      %v152 = vrot.slane %v120, 4
      %v153 = vrot.slane %v121, 4
      %v154 = vrot.slane %v127, 4
      %v155 = vrot.slane %v129, 4
      %v156 = vrot.slane %v131, 4
      %v157 = vrot.slane %v133, 4
      %v158 = vrot.slane %v135, 4
      %v159 = vrot.slane %v137, 4
      %v160 = vrot.slane %v139, 4
      %v161 = vrot.slane %v141, 4
      %v162 = vrot.slane %v143, 4
      %v163 = vrot.slane %v145, 4
      %v164 = vrot.slane %v147, 4
      %v165 = vrot.slane %v149, 4
      %v166 = vunpack.c.l.b16 %v118
      %v167 = vunpack.c.l.b16 %v119
      %v168 = vunpack.c.l.b16 %v120
      %v169 = vunpack.c.l.b16 %v121
      %v170 = vpack.c.b16 %v167, %v166
      %v171 = vpack.c.b16 %v169, %v168
      %172 = vrot.lane.b32.xlu0 %v170, 64
      %v173 = vpop.permute.xlu0 %172
      %174 = vrot.lane.b32.xlu0 %v171, 64
      %v175 = vpop.permute.xlu0 %174
      %vm176 = vcmask 130048
      %v178 = vsel %vm176, %v170, 0
      %v181 = vsel %vm176, %v171, 0
      %v184 = vsel %vm176, %v173, 0
      %v187 = vsel %vm176, %v175, 0
      %189 = vmatpush.bf16.xpose.msra.mxu0 0
      %190 = vmatpush.bf16.xpose.msra.mxu0 0
      %191 = vmatpush.bf16.xpose.msra.mxu0 0
      %192 = vmatpush.bf16.xpose.msra.mxu0 0
      %193 = vmatpush.bf16.xpose.msra.mxu0 0
      %194 = vmatpush.bf16.xpose.msra.mxu0 0
      %195 = vmatpush.bf16.xpose.msra.mxu0 %v187
      %196 = vmatpush.bf16.xpose.msra.mxu0 %v184
      %197 = vmatmul.bf16.gmra.mxu0 %v178
      %v198 = vpop.f32.mrf.mxu0
      %v199 = vadd.f32 0.0, %v198
      %v200 = vpop.f32.mrf.mxu0
      %v201 = vadd.f32 0.0, %v200
      %202 = vmatmul.bf16.gmra.mxu0 %v181
      %v203 = vpop.f32.mrf.mxu0
      %v204 = vadd.f32 0.0, %v203
      %v205 = vpop.f32.mrf.mxu0
      %v206 = vadd.f32 0.0, %v205
      %207 = vdwg.mxu0
      %v208 = vunpack.c.l.b16 %v127
      %v209 = vunpack.c.l.b16 %v129
      %v210 = vunpack.c.l.b16 %v131
      %v211 = vunpack.c.l.b16 %v133
      %v212 = vpack.c.b16 %v209, %v208
      %v213 = vpack.c.b16 %v211, %v210
      %214 = vrot.lane.b32.xlu0 %v212, 64
      %v215 = vpop.permute.xlu0 %214
      %216 = vrot.lane.b32.xlu0 %v213, 64
      %v217 = vpop.permute.xlu0 %216
      %v219 = vsel %vm176, %v212, 0
      %v222 = vsel %vm176, %v213, 0
      %v225 = vsel %vm176, %v215, 0
      %v228 = vsel %vm176, %v217, 0
      %230 = vmatpush.bf16.xpose.msra.mxu0 0
      %231 = vmatpush.bf16.xpose.msra.mxu0 0
      %232 = vmatpush.bf16.xpose.msra.mxu0 0
      %233 = vmatpush.bf16.xpose.msra.mxu0 0
      %234 = vmatpush.bf16.xpose.msra.mxu0 0
      %235 = vmatpush.bf16.xpose.msra.mxu0 0
      %236 = vmatpush.bf16.xpose.msra.mxu0 %v228
      %237 = vmatpush.bf16.xpose.msra.mxu0 %v225
      %238 = vmatmul.bf16.gmra.mxu0 %v219
      %v239 = vpop.f32.mrf.mxu0
      %v240 = vadd.f32 0.0, %v239
      %v241 = vpop.f32.mrf.mxu0
      %v242 = vadd.f32 0.0, %v241
      %243 = vmatmul.bf16.gmra.mxu0 %v222
      %v244 = vpop.f32.mrf.mxu0
      %v245 = vadd.f32 0.0, %v244
      %v246 = vpop.f32.mrf.mxu0
      %v247 = vadd.f32 0.0, %v246
      %248 = vdwg.mxu0
      %v249 = vunpack.c.l.b16 %v135
      %v250 = vunpack.c.l.b16 %v137
      %v251 = vunpack.c.l.b16 %v139
      %v252 = vunpack.c.l.b16 %v141
      %v253 = vpack.c.b16 %v250, %v249
      %v254 = vpack.c.b16 %v252, %v251
      %255 = vrot.lane.b32.xlu0 %v253, 64
      %v256 = vpop.permute.xlu0 %255
      %257 = vrot.lane.b32.xlu0 %v254, 64
      %v258 = vpop.permute.xlu0 %257
      %v260 = vsel %vm176, %v253, 0
      %v263 = vsel %vm176, %v254, 0
      %v266 = vsel %vm176, %v256, 0
      %v269 = vsel %vm176, %v258, 0
      %271 = vmatpush.bf16.xpose.msra.mxu0 0
      %272 = vmatpush.bf16.xpose.msra.mxu0 0
      %273 = vmatpush.bf16.xpose.msra.mxu0 0
      %274 = vmatpush.bf16.xpose.msra.mxu0 0
      %275 = vmatpush.bf16.xpose.msra.mxu0 0
      %276 = vmatpush.bf16.xpose.msra.mxu0 0
      %277 = vmatpush.bf16.xpose.msra.mxu0 %v269
      %278 = vmatpush.bf16.xpose.msra.mxu0 %v266
      %279 = vmatmul.bf16.gmra.mxu0 %v260
      %v280 = vpop.f32.mrf.mxu0
      %v281 = vadd.f32 0.0, %v280
      %v282 = vpop.f32.mrf.mxu0
      %v283 = vadd.f32 0.0, %v282
      %284 = vmatmul.bf16.gmra.mxu0 %v263
      %v285 = vpop.f32.mrf.mxu0
      %v286 = vadd.f32 0.0, %v285
      %v287 = vpop.f32.mrf.mxu0
      %v288 = vadd.f32 0.0, %v287
      %289 = vdwg.mxu0
      %v290 = vunpack.c.l.b16 %v143
      %v291 = vunpack.c.l.b16 %v145
      %v292 = vunpack.c.l.b16 %v147
      %v293 = vunpack.c.l.b16 %v149
      %v294 = vpack.c.b16 %v291, %v290
      %v295 = vpack.c.b16 %v293, %v292
      %296 = vrot.lane.b32.xlu0 %v294, 64
      %v297 = vpop.permute.xlu0 %296
      %298 = vrot.lane.b32.xlu0 %v295, 64
      %v299 = vpop.permute.xlu0 %298
      %v301 = vsel %vm176, %v294, 0
      %v304 = vsel %vm176, %v295, 0
      %v307 = vsel %vm176, %v297, 0
      %v310 = vsel %vm176, %v299, 0
      %312 = vmatpush.bf16.xpose.msra.mxu0 0
      %313 = vmatpush.bf16.xpose.msra.mxu0 0
      %314 = vmatpush.bf16.xpose.msra.mxu0 0
      %315 = vmatpush.bf16.xpose.msra.mxu0 0
      %316 = vmatpush.bf16.xpose.msra.mxu0 0
      %317 = vmatpush.bf16.xpose.msra.mxu0 0
      %318 = vmatpush.bf16.xpose.msra.mxu0 %v310
      %319 = vmatpush.bf16.xpose.msra.mxu0 %v307
      %320 = vmatmul.bf16.gmra.mxu0 %v301
      %v321 = vpop.f32.mrf.mxu0
      %v322 = vadd.f32 0.0, %v321
      %v323 = vpop.f32.mrf.mxu0
      %v324 = vadd.f32 0.0, %v323
      %325 = vmatmul.bf16.gmra.mxu0 %v304
      %v326 = vpop.f32.mrf.mxu0
      %v327 = vadd.f32 0.0, %v326
      %v328 = vpop.f32.mrf.mxu0
      %v329 = vadd.f32 0.0, %v328
      %330 = vdwg.mxu0
      %v331 = vmul.f32 %v199, 0.25
      %v332 = vmul.f32 %v201, 0.25
      %v333 = vmul.f32 %v204, 0.25
      %v334 = vmul.f32 %v206, 0.25
      %v335 = vmul.f32 %v240, 0.25
      %v336 = vmul.f32 %v242, 0.25
      %v337 = vmul.f32 %v245, 0.25
      %v338 = vmul.f32 %v247, 0.25
      %v339 = vmul.f32 %v281, 0.25
      %v340 = vmul.f32 %v283, 0.25
      %v341 = vmul.f32 %v286, 0.25
      %v342 = vmul.f32 %v288, 0.25
      %v343 = vmul.f32 %v322, 0.25
      %v344 = vmul.f32 %v324, 0.25
      %v345 = vmul.f32 %v327, 0.25
      %v346 = vmul.f32 %v329, 0.25
      %v347 = vlaneseq
      %v348 = vand.u32 %v347, 127
      %vm349 = vcmp.lt.s32.totalorder %v348, 17
      %v350 = vsel %vm349, %v331, -1e+30
      %v351 = vsel %vm349, %v332, -1e+30
      %v352 = vsel %vm349, %v333, -1e+30
      %v353 = vsel %vm349, %v334, -1e+30
      %v354 = vsel %vm349, %v335, -1e+30
      %v355 = vsel %vm349, %v336, -1e+30
      %v356 = vsel %vm349, %v337, -1e+30
      %v357 = vsel %vm349, %v338, -1e+30
      %v358 = vsel %vm349, %v339, -1e+30
      %v359 = vsel %vm349, %v340, -1e+30
      %v360 = vsel %vm349, %v341, -1e+30
      %v361 = vsel %vm349, %v342, -1e+30
      %v362 = vsel %vm349, %v343, -1e+30
      %v363 = vsel %vm349, %v344, -1e+30
      %v364 = vsel %vm349, %v345, -1e+30
      %v365 = vsel %vm349, %v346, -1e+30
      %vm366 = vcmask 261120
      %v367 = vsel %vm366, %v350, -inf
      %368 = vmax.xlane.f32.xlu0 %v367
      %v369 = vpop.xlane.xlu0 %368
      %v370 = vsel %vm366, %v351, -inf
      %371 = vmax.xlane.f32.xlu0 %v370
      %v372 = vpop.xlane.xlu0 %371
      %v373 = vsel %vm366, %v352, -inf
      %374 = vmax.xlane.f32.xlu0 %v373
      %v375 = vpop.xlane.xlu0 %374
      %v376 = vsel %vm366, %v353, -inf
      %377 = vmax.xlane.f32.xlu0 %v376
      %v378 = vpop.xlane.xlu0 %377
      %v379 = vsel %vm366, %v354, -inf
      %380 = vmax.xlane.f32.xlu0 %v379
      %v381 = vpop.xlane.xlu0 %380
      %v382 = vsel %vm366, %v355, -inf
      %383 = vmax.xlane.f32.xlu0 %v382
      %v384 = vpop.xlane.xlu0 %383
      %v385 = vsel %vm366, %v356, -inf
      %386 = vmax.xlane.f32.xlu0 %v385
      %v387 = vpop.xlane.xlu0 %386
      %v388 = vsel %vm366, %v357, -inf
      %389 = vmax.xlane.f32.xlu0 %v388
      %v390 = vpop.xlane.xlu0 %389
      %v391 = vsel %vm366, %v358, -inf
      %392 = vmax.xlane.f32.xlu0 %v391
      %v393 = vpop.xlane.xlu0 %392
      %v394 = vsel %vm366, %v359, -inf
      %395 = vmax.xlane.f32.xlu0 %v394
      %v396 = vpop.xlane.xlu0 %395
      %v397 = vsel %vm366, %v360, -inf
      %398 = vmax.xlane.f32.xlu0 %v397
      %v399 = vpop.xlane.xlu0 %398
      %v400 = vsel %vm366, %v361, -inf
      %401 = vmax.xlane.f32.xlu0 %v400
      %v402 = vpop.xlane.xlu0 %401
      %v403 = vsel %vm366, %v362, -inf
      %404 = vmax.xlane.f32.xlu0 %v403
      %v405 = vpop.xlane.xlu0 %404
      %v406 = vsel %vm366, %v363, -inf
      %407 = vmax.xlane.f32.xlu0 %v406
      %v408 = vpop.xlane.xlu0 %407
      %v409 = vsel %vm366, %v364, -inf
      %410 = vmax.xlane.f32.xlu0 %v409
      %v411 = vpop.xlane.xlu0 %410
      %v412 = vsel %vm366, %v365, -inf
      %413 = vmax.xlane.f32.xlu0 %v412
      %v414 = vpop.xlane.xlu0 %413
      %v415 = vsub.f32 %v350, %v369
      %v416 = vsub.f32 %v351, %v372
      %v417 = vsub.f32 %v352, %v375
      %v418 = vsub.f32 %v353, %v378
      %v419 = vsub.f32 %v354, %v381
      %v420 = vsub.f32 %v355, %v384
      %v421 = vsub.f32 %v356, %v387
      %v422 = vsub.f32 %v357, %v390
      %v423 = vsub.f32 %v358, %v393
      %v424 = vsub.f32 %v359, %v396
      %v425 = vsub.f32 %v360, %v399
      %v426 = vsub.f32 %v361, %v402
      %v427 = vsub.f32 %v362, %v405
      %v428 = vsub.f32 %v363, %v408
      %v429 = vsub.f32 %v364, %v411
      %v430 = vsub.f32 %v365, %v414
      %v431 = vmul.f32 %v415, 1.442695
      %v432 = vpow.pop %v431
      %v433 = vmul.f32 %v416, 1.442695
      %v434 = vpow.pop %v433
      %v435 = vmul.f32 %v417, 1.442695
      %v436 = vpow.pop %v435
      %v437 = vmul.f32 %v418, 1.442695
      %v438 = vpow.pop %v437
      %v439 = vmul.f32 %v419, 1.442695
      %v440 = vpow.pop %v439
      %v441 = vmul.f32 %v420, 1.442695
      %v442 = vpow.pop %v441
      %v443 = vmul.f32 %v421, 1.442695
      %v444 = vpow.pop %v443
      %v445 = vmul.f32 %v422, 1.442695
      %v446 = vpow.pop %v445
      %v447 = vmul.f32 %v423, 1.442695
      %v448 = vpow.pop %v447
      %v449 = vmul.f32 %v424, 1.442695
      %v450 = vpow.pop %v449
      %v451 = vmul.f32 %v425, 1.442695
      %v452 = vpow.pop %v451
      %v453 = vmul.f32 %v426, 1.442695
      %v454 = vpow.pop %v453
      %v455 = vmul.f32 %v427, 1.442695
      %v456 = vpow.pop %v455
      %v457 = vmul.f32 %v428, 1.442695
      %v458 = vpow.pop %v457
      %v459 = vmul.f32 %v429, 1.442695
      %v460 = vpow.pop %v459
      %v461 = vmul.f32 %v430, 1.442695
      %v462 = vpow.pop %v461
      %v463 = vsel %vm366, %v432, 0.0
      %464 = vadd.xlane.f32.xlu0 %v463
      %v465 = vpop.xlane.xlu0 %464
      %v466 = vsel %vm366, %v434, 0.0
      %467 = vadd.xlane.f32.xlu0 %v466
      %v468 = vpop.xlane.xlu0 %467
      %v469 = vsel %vm366, %v436, 0.0
      %470 = vadd.xlane.f32.xlu0 %v469
      %v471 = vpop.xlane.xlu0 %470
      %v472 = vsel %vm366, %v438, 0.0
      %473 = vadd.xlane.f32.xlu0 %v472
      %v474 = vpop.xlane.xlu0 %473
      %v475 = vsel %vm366, %v440, 0.0
      %476 = vadd.xlane.f32.xlu0 %v475
      %v477 = vpop.xlane.xlu0 %476
      %v478 = vsel %vm366, %v442, 0.0
      %479 = vadd.xlane.f32.xlu0 %v478
      %v480 = vpop.xlane.xlu0 %479
      %v481 = vsel %vm366, %v444, 0.0
      %482 = vadd.xlane.f32.xlu0 %v481
      %v483 = vpop.xlane.xlu0 %482
      %v484 = vsel %vm366, %v446, 0.0
      %485 = vadd.xlane.f32.xlu0 %v484
      %v486 = vpop.xlane.xlu0 %485
      %v487 = vsel %vm366, %v448, 0.0
      %488 = vadd.xlane.f32.xlu0 %v487
      %v489 = vpop.xlane.xlu0 %488
      %v490 = vsel %vm366, %v450, 0.0
      %491 = vadd.xlane.f32.xlu0 %v490
      %v492 = vpop.xlane.xlu0 %491
      %v493 = vsel %vm366, %v452, 0.0
      %494 = vadd.xlane.f32.xlu0 %v493
      %v495 = vpop.xlane.xlu0 %494
      %v496 = vsel %vm366, %v454, 0.0
      %497 = vadd.xlane.f32.xlu0 %v496
      %v498 = vpop.xlane.xlu0 %497
      %v499 = vsel %vm366, %v456, 0.0
      %500 = vadd.xlane.f32.xlu0 %v499
      %v501 = vpop.xlane.xlu0 %500
      %v502 = vsel %vm366, %v458, 0.0
      %503 = vadd.xlane.f32.xlu0 %v502
      %v504 = vpop.xlane.xlu0 %503
      %v505 = vsel %vm366, %v460, 0.0
      %506 = vadd.xlane.f32.xlu0 %v505
      %v507 = vpop.xlane.xlu0 %506
      %v508 = vsel %vm366, %v462, 0.0
      %509 = vadd.xlane.f32.xlu0 %v508
      %v510 = vpop.xlane.xlu0 %509
      %v511 = vrcp.pop %v465
      %v512 = vrcp.pop %v468
      %v513 = vrcp.pop %v471
      %v514 = vrcp.pop %v474
      %v515 = vrcp.pop %v477
      %v516 = vrcp.pop %v480
      %v517 = vrcp.pop %v483
      %v518 = vrcp.pop %v486
      %v519 = vrcp.pop %v489
      %v520 = vrcp.pop %v492
      %v521 = vrcp.pop %v495
      %v522 = vrcp.pop %v498
      %v523 = vrcp.pop %v501
      %v524 = vrcp.pop %v504
      %v525 = vrcp.pop %v507
      %v526 = vrcp.pop %v510
      %v527 = vmul.f32 %v432, %v511
      %v528 = vmul.f32 %v434, %v512
      %v529 = vmul.f32 %v436, %v513
      %v530 = vmul.f32 %v438, %v514
      %v531 = vmul.f32 %v440, %v515
      %v532 = vmul.f32 %v442, %v516
      %v533 = vmul.f32 %v444, %v517
      %v534 = vmul.f32 %v446, %v518
      %v535 = vmul.f32 %v448, %v519
      %v536 = vmul.f32 %v450, %v520
      %v537 = vmul.f32 %v452, %v521
      %v538 = vmul.f32 %v454, %v522
      %v539 = vmul.f32 %v456, %v523
      %v540 = vmul.f32 %v458, %v524
      %v541 = vmul.f32 %v460, %v525
      %v542 = vmul.f32 %v462, %v526
      %v543 = vpack.c.bf16 %v527, %v527
      %v544 = vpack.c.bf16 %v528, %v528
      %v545 = vpack.c.bf16 %v529, %v529
      %v546 = vpack.c.bf16 %v530, %v530
      %v547 = vpack.c.bf16 %v531, %v531
      %v548 = vpack.c.bf16 %v532, %v532
      %v549 = vpack.c.bf16 %v533, %v533
      %v550 = vpack.c.bf16 %v534, %v534
      %v551 = vpack.c.bf16 %v535, %v535
      %v552 = vpack.c.bf16 %v536, %v536
      %v553 = vpack.c.bf16 %v537, %v537
      %v554 = vpack.c.bf16 %v538, %v538
      %v555 = vpack.c.bf16 %v539, %v539
      %v556 = vpack.c.bf16 %v540, %v540
      %v557 = vpack.c.bf16 %v541, %v541
      %v558 = vpack.c.bf16 %v542, %v542
      %v563 = vunpack.c.l.b16 %v543
      %v564 = vunpack.c.l.b16 %v544
      %v565 = vunpack.c.l.b16 %v545
      %v566 = vunpack.c.l.b16 %v546
      %v567 = vpack.c.b16 %v564, %v563
      %v568 = vpack.c.b16 %v566, %v565
      %v569 = vunpack.c.l.b16 %v150
      %v570 = vunpack.c.l.b16 %v151
      %v571 = vunpack.c.l.b16 %v152
      %v572 = vunpack.c.l.b16 %v153
      %v573 = vpack.c.b16 %v570, %v569
      %v574 = vpack.c.b16 %v572, %v571
      %v578 = vsel %vm366, %v567, 0
      %v581 = vsel %vm366, %v568, 0
      %583 = vmatpush.bf16.msra.mxu0 0
      %584 = vmatpush.bf16.msra.mxu0 0
      %585 = vmatpush.bf16.msra.mxu0 0
      %586 = vmatpush.bf16.msra.mxu0 0
      %587 = vmatpush.bf16.msra.mxu0 0
      %588 = vmatpush.bf16.msra.mxu0 0
      %589 = vmatpush.bf16.msra.mxu0 %v574
      %590 = vmatpush.bf16.msra.mxu0 %v573
      %591 = vmatmul.bf16.gmra.mxu0 %v578
      %v592 = vpop.f32.mrf.mxu0
      %v593 = vadd.f32 0.0, %v592
      %v594 = vpop.f32.mrf.mxu0
      %v595 = vadd.f32 0.0, %v594
      %596 = vmatmul.bf16.gmra.mxu0 %v581
      %v597 = vpop.f32.mrf.mxu0
      %v598 = vadd.f32 0.0, %v597
      %v599 = vpop.f32.mrf.mxu0
      %v600 = vadd.f32 0.0, %v599
      %601 = vdwg.mxu0
      %v606 = vunpack.c.l.b16 %v547
      %v607 = vunpack.c.l.b16 %v548
      %v608 = vunpack.c.l.b16 %v549
      %v609 = vunpack.c.l.b16 %v550
      %v610 = vpack.c.b16 %v607, %v606
      %v611 = vpack.c.b16 %v609, %v608
      %v612 = vunpack.c.l.b16 %v154
      %v613 = vunpack.c.l.b16 %v155
      %v614 = vunpack.c.l.b16 %v156
      %v615 = vunpack.c.l.b16 %v157
      %v616 = vpack.c.b16 %v613, %v612
      %v617 = vpack.c.b16 %v615, %v614
      %v621 = vsel %vm366, %v610, 0
      %v624 = vsel %vm366, %v611, 0
      %626 = vmatpush.bf16.msra.mxu0 0
      %627 = vmatpush.bf16.msra.mxu0 0
      %628 = vmatpush.bf16.msra.mxu0 0
      %629 = vmatpush.bf16.msra.mxu0 0
      %630 = vmatpush.bf16.msra.mxu0 0
      %631 = vmatpush.bf16.msra.mxu0 0
      %632 = vmatpush.bf16.msra.mxu0 %v617
      %633 = vmatpush.bf16.msra.mxu0 %v616
      %634 = vmatmul.bf16.gmra.mxu0 %v621
      %v635 = vpop.f32.mrf.mxu0
      %v636 = vadd.f32 0.0, %v635
      %v637 = vpop.f32.mrf.mxu0
      %v638 = vadd.f32 0.0, %v637
      %639 = vmatmul.bf16.gmra.mxu0 %v624
      %v640 = vpop.f32.mrf.mxu0
      %v641 = vadd.f32 0.0, %v640
      %v642 = vpop.f32.mrf.mxu0
      %v643 = vadd.f32 0.0, %v642
      %644 = vdwg.mxu0
      %v649 = vunpack.c.l.b16 %v551
      %v650 = vunpack.c.l.b16 %v552
      %v651 = vunpack.c.l.b16 %v553
      %v652 = vunpack.c.l.b16 %v554
      %v653 = vpack.c.b16 %v650, %v649
      %v654 = vpack.c.b16 %v652, %v651
      %v655 = vunpack.c.l.b16 %v158
      %v656 = vunpack.c.l.b16 %v159
      %v657 = vunpack.c.l.b16 %v160
      %v658 = vunpack.c.l.b16 %v161
      %v659 = vpack.c.b16 %v656, %v655
      %v660 = vpack.c.b16 %v658, %v657
      %v664 = vsel %vm366, %v653, 0
      %v667 = vsel %vm366, %v654, 0
      %669 = vmatpush.bf16.msra.mxu0 0
      %670 = vmatpush.bf16.msra.mxu0 0
      %671 = vmatpush.bf16.msra.mxu0 0
      %672 = vmatpush.bf16.msra.mxu0 0
      %673 = vmatpush.bf16.msra.mxu0 0
      %674 = vmatpush.bf16.msra.mxu0 0
      %675 = vmatpush.bf16.msra.mxu0 %v660
      %676 = vmatpush.bf16.msra.mxu0 %v659
      %677 = vmatmul.bf16.gmra.mxu0 %v664
      %v678 = vpop.f32.mrf.mxu0
      %v679 = vadd.f32 0.0, %v678
      %v680 = vpop.f32.mrf.mxu0
      %v681 = vadd.f32 0.0, %v680
      %682 = vmatmul.bf16.gmra.mxu0 %v667
      %v683 = vpop.f32.mrf.mxu0
      %v684 = vadd.f32 0.0, %v683
      %v685 = vpop.f32.mrf.mxu0
      %v686 = vadd.f32 0.0, %v685
      %687 = vdwg.mxu0
      %v692 = vunpack.c.l.b16 %v555
      %v693 = vunpack.c.l.b16 %v556
      %v694 = vunpack.c.l.b16 %v557
      %v695 = vunpack.c.l.b16 %v558
      %v696 = vpack.c.b16 %v693, %v692
      %v697 = vpack.c.b16 %v695, %v694
      %v698 = vunpack.c.l.b16 %v162
      %v699 = vunpack.c.l.b16 %v163
      %v700 = vunpack.c.l.b16 %v164
      %v701 = vunpack.c.l.b16 %v165
      %v702 = vpack.c.b16 %v699, %v698
      %v703 = vpack.c.b16 %v701, %v700
      %v707 = vsel %vm366, %v696, 0
      %v710 = vsel %vm366, %v697, 0
      %712 = vmatpush.bf16.msra.mxu0 0
      %713 = vmatpush.bf16.msra.mxu0 0
      %714 = vmatpush.bf16.msra.mxu0 0
      %715 = vmatpush.bf16.msra.mxu0 0
      %716 = vmatpush.bf16.msra.mxu0 0
      %717 = vmatpush.bf16.msra.mxu0 0
      %718 = vmatpush.bf16.msra.mxu0 %v703
      %719 = vmatpush.bf16.msra.mxu0 %v702
      %720 = vmatmul.bf16.gmra.mxu0 %v707
      %v721 = vpop.f32.mrf.mxu0
      %v722 = vadd.f32 0.0, %v721
      %v723 = vpop.f32.mrf.mxu0
      %v724 = vadd.f32 0.0, %v723
      %725 = vmatmul.bf16.gmra.mxu0 %v710
      %v726 = vpop.f32.mrf.mxu0
      %v727 = vadd.f32 0.0, %v726
      %v728 = vpop.f32.mrf.mxu0
      %v729 = vadd.f32 0.0, %v728
      %730 = vdwg.mxu0
      %735 = vrot.lane.b32.xlu0 %v636, 16
      %v736 = vpop.permute.xlu0 %735
      %737 = vrot.lane.b32.xlu0 %v638, 16
      %v738 = vpop.permute.xlu0 %737
      %739 = vrot.lane.b32.xlu0 %v641, 16
      %v740 = vpop.permute.xlu0 %739
      %741 = vrot.lane.b32.xlu0 %v643, 16
      %v742 = vpop.permute.xlu0 %741
      %751 = vrot.lane.b32.xlu0 %v679, 32
      %v752 = vpop.permute.xlu0 %751
      %753 = vrot.lane.b32.xlu0 %v681, 32
      %v754 = vpop.permute.xlu0 %753
      %755 = vrot.lane.b32.xlu0 %v684, 32
      %v756 = vpop.permute.xlu0 %755
      %757 = vrot.lane.b32.xlu0 %v686, 32
      %v758 = vpop.permute.xlu0 %757
      %767 = vrot.lane.b32.xlu0 %v722, 48
      %v768 = vpop.permute.xlu0 %767
      %769 = vrot.lane.b32.xlu0 %v724, 48
      %v770 = vpop.permute.xlu0 %769
      %771 = vrot.lane.b32.xlu0 %v727, 48
      %v772 = vpop.permute.xlu0 %771
      %773 = vrot.lane.b32.xlu0 %v729, 48
      %v774 = vpop.permute.xlu0 %773
      %v779 = vsel %vm176, %v593, %v736
      %v780 = vsel %vm176, %v595, %v738
      %v781 = vsel %vm176, %v598, %v740
      %v782 = vsel %vm176, %v600, %v742
      %v783 = vsel %vm366, %v779, %v752
      %v784 = vsel %vm366, %v780, %v754
      %v785 = vsel %vm366, %v781, %v756
      %v786 = vsel %vm366, %v782, %v758
      %vm787 = vcmask 392192
      %v788 = vsel %vm787, %v783, %v768
      %v789 = vsel %vm787, %v784, %v770
      %v790 = vsel %vm787, %v785, %v772
      %v791 = vsel %vm787, %v786, %v774
      %v792 = vpack.c.bf16 %v788, %v788
      %v793 = vpack.c.bf16 %v789, %v789
      %v794 = vpack.c.bf16 %v790, %v790
      %v795 = vpack.c.bf16 %v791, %v791
      %vm796 = vcmask 519168
      %797 = vst.msk [vmem:[%s116] sm:$0xf] %vm796, %v792
      %798 = vst.msk [vmem:[%s116 + $0x4] sm:$0xf] %vm796, %v793
      %799 = vst.msk [vmem:[%s116 + $0x8] sm:$0xf] %vm796, %v794
      %800 = vst.msk [vmem:[%s116 + $0xc] sm:$0xf] %vm796, %v795
      %p801 = scmp.lt.s32.totalorder %s12, 1
      %s802 = scalar_select %p801, %s12, 1
      %s803 = smul.addr %s802, 4
      %s804 = smul.addr %s803, 4
      %s805 = scalar_lea.vmem %s1, %s804
      // Predicated region
      $region25: #{_lambda_.14} parent=23 // pred_check
        %p806 = pneg %p56
      $region26: #{_lambda_.14} parent=23 // pred_check_branch
        %808 = sbr.rel (%p806) target = $region28
      $region27: #{_lambda_.14} parent=23 // pred_region
        _
      $region28: #{_lambda_.14} parent=23 // pred_fallthru
        _
    $region24: #{_lambda_.14} parent=5 // pred_fallthru
      _
    %p809 = scmp.le.s32.totalorder 2, %s7
    // Predicated region
    $region29: #{_lambda_.14} parent=5 // pred_check
      %p810 = pneg %p809
    $region30: #{_lambda_.14} parent=5 // pred_check_branch
      %812 = sbr.rel (%p810) target = $region32
    $region31: #{_lambda_.14} parent=5 // pred_region
      %s813 = ssub.s32 %s7, 2
      // Predicated region
      $region33: #{_lambda_.14} parent=31 // pred_check
        %p814 = pneg %p62
      $region34: #{_lambda_.14} parent=31 // pred_check_branch
        %816 = sbr.rel (%p814) target = $region36
      $region35: #{_lambda_.14} parent=31 // pred_region
        %p817 = scmp.lt.s32.totalorder %s13, 1
        %s818 = scalar_select %p817, %s13, 1
        %s819 = smul.addr %s818, 4
        %s820 = smul.addr %s819, 4
        %s821 = scalar_lea.vmem %s1, %s820
      $region36: #{_lambda_.14} parent=31 // pred_fallthru
        _
    $region32: #{_lambda_.14} parent=5 // pred_fallthru
      _
  $region6: #{_lambda_.14} parent=0 // loop_footer
    %s11 = sadd.s32 1, %s7
  $region7: #{_lambda_.14} parent=0 // loop_footer_branch
    %6 = sbr.rel target = $region3
  $region8: #{_lambda_.14} parent=0 // loop_exit
    _

// kernel: _lambda_.21
$region0: #{_lambda_.21}
  #allocation0 [shape = 'u32[]', space=smem, size = 0x4, offset = 0x4, fixed_abs, tag = 'smem constant byte address 0x4 - core index']
  #allocation1 [shape = 'u32[72,128]{1,0:T(1,128)}', space=vmem, size = 0x9000, scoped, tag = 'internal scratch']
  %s0 = inlined_call_operand.vmem [shape: bf16[2,64], index: 0, kind: input, shape index: {}]
  %s1 = inlined_call_operand.vmem [shape: f32[1,64], index: 1, kind: input, shape index: {}]
  %s2 = inlined_call_operand.vmem [shape: f32[1,64], index: 2, kind: input, shape index: {}]
  %s3 = inlined_call_operand.vmem [shape: bf16[64,32], index: 3, kind: input, shape index: {}]
  %s4 = inlined_call_operand.vmem [shape: f32[1,32], index: 4, kind: input, shape index: {}]
  %s5 = inlined_call_operand.hbm [shape: f32[2,32], index: 5, kind: output, shape index: {}]
  %s6 = sld [smem:[#allocation0]]
  $region30: #{_lambda_.21} parent=0
    _
  %s8 = ssub.s32 1, %s6
  %s9 = scalar_select 0, %s8, %s6
  $region1: #{_lambda_.21} parent=0
    #allocation2 [shape = 'u8[1024]{0}', space=vmem, size = 0x400, scoped, tag = 'output window, operand 0, single buffered']
    #allocation3 [shape = 's32[1]{0}', space=sflag, size = 0x4, scoped, tag = 'scoped memory for _lambda_.21']
    %10 = vsyncpa [#allocation3], 0
    // Predicated region
    $region2: #{_lambda_.21} parent=1 // pred_check
      _
    $region3: #{_lambda_.21} parent=1 // pred_check_branch
      %12 = sbr.rel (0) target = $region5
    $region4: #{_lambda_.21} parent=1 // pred_region
      _
    $region5: #{_lambda_.21} parent=1 // pred_fallthru
      _
    // Predicated region
    $region6: #{_lambda_.21} parent=1 // pred_check
      _
    $region7: #{_lambda_.21} parent=1 // pred_check_branch
      %14 = sbr.rel (0) target = $region9
    $region8: #{_lambda_.21} parent=1 // pred_region
      _
    $region9: #{_lambda_.21} parent=1 // pred_fallthru
      _
    // Predicated region
    $region10: #{_lambda_.21} parent=1 // pred_check
      _
    $region11: #{_lambda_.21} parent=1 // pred_check_branch
      %16 = sbr.rel (0) target = $region13
    $region12: #{_lambda_.21} parent=1 // pred_region
      _
    $region13: #{_lambda_.21} parent=1 // pred_fallthru
      _
    // Predicated region
    $region14: #{_lambda_.21} parent=1 // pred_check
      _
    $region15: #{_lambda_.21} parent=1 // pred_check_branch
      %18 = sbr.rel (0) target = $region17
    $region16: #{_lambda_.21} parent=1 // pred_region
      _
    $region17: #{_lambda_.21} parent=1 // pred_fallthru
      _
    // Predicated region
    $region18: #{_lambda_.21} parent=1 // pred_check
      _
    $region19: #{_lambda_.21} parent=1 // pred_check_branch
      %20 = sbr.rel (0) target = $region21
    $region20: #{_lambda_.21} parent=1 // pred_region
      _
    $region21: #{_lambda_.21} parent=1 // pred_fallthru
      _
    %v22 = vld [vmem:[%s0] sm:$0x1]
    %v23 = vunpack.c.l.bf16 %v22
    %v24 = vld [vmem:[%s1] sm:$0x1]
    %v25 = vld [vmem:[%s2] sm:$0x1]
    %vm26 = vcmask 517120
    %v27 = vsel %vm26, %v23, 0.0
    %28 = vadd.xlane.f32.xlu0 %v27
    %v29 = vpop.xlane.xlu0 %28
    %v30 = vrcp.pop 64.0
    %v31 = vmul.f32 64.0, %v30
    %v32 = vsub.f32 1.0, %v31
    %v33 = vmul.f32 %v30, %v32
    %v34 = vadd.f32 %v30, %v33
    %vm35 = vweird.f32 %v30
    %v36 = vsel %vm35, %v30, %v34
    %v37 = vmul.f32 %v29, %v36
    %v38 = vsub.f32 %v23, %v37
    %v39 = vmul.f32 %v38, %v38
    %v40 = vsel %vm26, %v39, 0.0
    %41 = vadd.xlane.f32.xlu0 %v40
    %v42 = vpop.xlane.xlu0 %41
    %v43 = vmul.f32 %v42, %v36
    %v44 = vadd.f32 %v43, 1e-05
    %v45 = vrsqrt.pop %v44
    %v46 = vmul.f32 %v45, %v44
    %v47 = vmul.f32 %v46, %v45
    %v48 = vmul.f32 0.5, %v47
    %v49 = vsub.f32 1.5, %v48
    %v50 = vmul.f32 %v45, %v49
    %vm51 = vweird.f32 %v44
    %vm52 = vweird.f32 %v45
    %vm53 = vmor %vm51, %vm52
    %v54 = vsel %vm53, %v45, %v50
    %v55 = vmul.f32 %v38, %v54
    %v57 = vperm.slane %v24, 0
    %v59 = vmul.f32 %v55, %v57
    %v61 = vperm.slane %v25, 0
    %v63 = vadd.f32 %v59, %v61
    %v64 = vpack.c.bf16 %v63, %v63
    %v65 = vld [vmem:[%s3] sm:$0xf]
    %v66 = vld [vmem:[%s3 + $0x4] sm:$0xf]
    %v67 = vld [vmem:[%s3 + $0x8] sm:$0xf]
    %v68 = vld [vmem:[%s3 + $0xc] sm:$0xf]
    %v69 = vld [vmem:[%s3 + $0x10] sm:$0xf]
    %v70 = vld [vmem:[%s3 + $0x14] sm:$0xf]
    %v71 = vld [vmem:[%s3 + $0x18] sm:$0xf]
    %v72 = vld [vmem:[%s3 + $0x1c] sm:$0xf]
    %v73 = vld [vmem:[%s4] sm:$0x1]
    %v75 = vperm.slane %v73, 0
    %v85 = vunpack.c.l.b16 %v65
    %v86 = vunpack.c.l.b16 %v66
    %v87 = vunpack.c.l.b16 %v67
    %v88 = vunpack.c.l.b16 %v68
    %v89 = vunpack.c.l.b16 %v69
    %v90 = vunpack.c.l.b16 %v70
    %v91 = vunpack.c.l.b16 %v71
    %v92 = vunpack.c.l.b16 %v72
    %v93 = vpack.c.b16 %v86, %v85
    %v94 = vpack.c.b16 %v88, %v87
    %v95 = vpack.c.b16 %v90, %v89
    %v96 = vpack.c.b16 %v92, %v91
    %vm101 = vcmask 523264
    %v103 = vsel %vm101, %v64, 0
    %105 = vmatpush.bf16.msra.mxu0 0
    %106 = vmatpush.bf16.msra.mxu0 0
    %107 = vmatpush.bf16.msra.mxu0 0
    %108 = vmatpush.bf16.msra.mxu0 0
    %109 = vmatpush.bf16.msra.mxu0 %v96
    %110 = vmatpush.bf16.msra.mxu0 %v95
    %111 = vmatpush.bf16.msra.mxu0 %v94
    %112 = vmatpush.bf16.msra.mxu0 %v93
    %113 = vmatmul.bf16.gmra.mxu0 %v103
    %v114 = vpop.f32.mrf.mxu0
    %v115 = vadd.f32 %v75, %v114
    %v116 = vpop.f32.mrf.mxu0
    %117 = vdwg.mxu0
    %vm118 = vcmask 254976
    %119 = vst.msk [vmem:[#allocation2] sm:$0x3] %vm118, %v115
    // Predicated region
    $region22: #{_lambda_.21} parent=1 // pred_check
      _
    $region23: #{_lambda_.21} parent=1 // pred_check_branch
      %121 = sbr.rel (0) target = $region25
    $region24: #{_lambda_.21} parent=1 // pred_region
      %123 = vsyncadd [#allocation3], 0
      %s125 = sshll.u32 [#allocation2], 4
      %s126 = int_to_ptr.vmem [resolvable:$true] %s125
      %s127 = sshll.u32 %s5, 4
      %s128 = int_to_ptr.hbm [resolvable:$true] %s127
      %130 = dma.vmem_to_hbm [thread:$0]  %s126, 32, %s128, [#allocation3]
    $region25: #{_lambda_.21} parent=1 // pred_fallthru
      _
    // Predicated region
    $region26: #{_lambda_.21} parent=1 // pred_check
      _
    $region27: #{_lambda_.21} parent=1 // pred_check_branch
      %132 = sbr.rel (0) target = $region29
    $region28: #{_lambda_.21} parent=1 // pred_region
      %134 = dma.done [#allocation3], 32
    $region29: #{_lambda_.21} parent=1 // pred_fallthru
      _
    %135 = vsyncpa [#allocation3], 1

// kernel: _lambda_.15
$region0: #{_lambda_.15}
  #allocation0 [shape = 'u32[]', space=smem, size = 0x4, offset = 0x4, fixed_abs, tag = 'smem constant byte address 0x4 - core index']
  #allocation1 [shape = 'u32[72,128]{1,0:T(1,128)}', space=vmem, size = 0x9000, scoped, tag = 'internal scratch']
  %s0 = inlined_call_operand.vmem [shape: bf16[64,64], index: 0, kind: input, shape index: {}]
  %s1 = inlined_call_operand.vmem [shape: bf16[64,64], index: 1, kind: input, shape index: {}]
  %s2 = inlined_call_operand.vmem [shape: bf16[64,64], index: 2, kind: input, shape index: {}]
  %s3 = inlined_call_operand.vmem [shape: f32[1,64], index: 3, kind: input, shape index: {}, may-alias: {3,5}]
  %s4 = inlined_call_operand.vmem [shape: f32[1,64], index: 4, kind: input, shape index: {}]
  %s5 = inlined_call_operand.vmem [shape: f32[1,64], index: 5, kind: input, shape index: {}, may-alias: {3,5}]
  %s6 = inlined_call_operand.vmem [shape: bf16[64,64], index: 6, kind: output, shape index: {}]
  %s7 = sld [smem:[#allocation0]]
  $region34: #{_lambda_.15} parent=0
    _
  %s9 = ssub.s32 1, %s7
  %s10 = scalar_select 0, %s9, %s7
  // Predicated region
  $region2: #{_lambda_.15} parent=0 // pred_check
    _
  $region3: #{_lambda_.15} parent=0 // pred_check_branch
    %12 = sbr.rel (0) target = $region5
  $region4: #{_lambda_.15} parent=0 // pred_region
    _
  $region5: #{_lambda_.15} parent=0 // pred_fallthru
    _
  // Predicated region
  $region6: #{_lambda_.15} parent=0 // pred_check
    _
  $region7: #{_lambda_.15} parent=0 // pred_check_branch
    %14 = sbr.rel (0) target = $region9
  $region8: #{_lambda_.15} parent=0 // pred_region
    _
  $region9: #{_lambda_.15} parent=0 // pred_fallthru
    _
  // Predicated region
  $region10: #{_lambda_.15} parent=0 // pred_check
    _
  $region11: #{_lambda_.15} parent=0 // pred_check_branch
    %16 = sbr.rel (0) target = $region13
  $region12: #{_lambda_.15} parent=0 // pred_region
    _
  $region13: #{_lambda_.15} parent=0 // pred_fallthru
    _
  // Predicated region
  $region14: #{_lambda_.15} parent=0 // pred_check
    _
  $region15: #{_lambda_.15} parent=0 // pred_check_branch
    %18 = sbr.rel (0) target = $region17
  $region16: #{_lambda_.15} parent=0 // pred_region
    _
  $region17: #{_lambda_.15} parent=0 // pred_fallthru
    _
  // Predicated region
  $region18: #{_lambda_.15} parent=0 // pred_check
    _
  $region19: #{_lambda_.15} parent=0 // pred_check_branch
    %20 = sbr.rel (0) target = $region21
  $region20: #{_lambda_.15} parent=0 // pred_region
    _
  $region21: #{_lambda_.15} parent=0 // pred_fallthru
    _
  // Predicated region
  $region22: #{_lambda_.15} parent=0 // pred_check
    _
  $region23: #{_lambda_.15} parent=0 // pred_check_branch
    %22 = sbr.rel (0) target = $region25
  $region24: #{_lambda_.15} parent=0 // pred_region
    _
  $region25: #{_lambda_.15} parent=0 // pred_fallthru
    _
  %v24 = vld [vmem:[%s0] sm:$0xf]
  %v25 = vld [vmem:[%s0 + $0x4] sm:$0xf]
  %v26 = vld [vmem:[%s0 + $0x8] sm:$0xf]
  %v27 = vld [vmem:[%s0 + $0xc] sm:$0xf]
  %v28 = vld [vmem:[%s0 + $0x10] sm:$0xf]
  %v29 = vld [vmem:[%s0 + $0x14] sm:$0xf]
  %v30 = vld [vmem:[%s0 + $0x18] sm:$0xf]
  %v31 = vld [vmem:[%s0 + $0x1c] sm:$0xf]
  %v32 = vld [vmem:[%s2] sm:$0xf]
  %v33 = vld [vmem:[%s2 + $0x4] sm:$0xf]
  %v34 = vld [vmem:[%s2 + $0x8] sm:$0xf]
  %v35 = vld [vmem:[%s2 + $0xc] sm:$0xf]
  %v36 = vld [vmem:[%s2 + $0x10] sm:$0xf]
  %v37 = vld [vmem:[%s2 + $0x14] sm:$0xf]
  %v38 = vld [vmem:[%s2 + $0x18] sm:$0xf]
  %v39 = vld [vmem:[%s2 + $0x1c] sm:$0xf]
  %v40 = vld [vmem:[%s3] sm:$0x1]
  %v42 = vperm.slane %v40, 0
  %v52 = vunpack.c.l.b16 %v24
  %v53 = vunpack.c.l.b16 %v25
  %v54 = vunpack.c.l.b16 %v26
  %v55 = vunpack.c.l.b16 %v27
  %v56 = vunpack.c.l.b16 %v28
  %v57 = vunpack.c.l.b16 %v29
  %v58 = vunpack.c.l.b16 %v30
  %v59 = vunpack.c.l.b16 %v31
  %v60 = vpack.c.b16 %v53, %v52
  %v61 = vpack.c.b16 %v55, %v54
  %v62 = vpack.c.b16 %v57, %v56
  %v63 = vpack.c.b16 %v59, %v58
  %v72 = vunpack.c.l.b16 %v32
  %v73 = vunpack.c.l.b16 %v33
  %v74 = vunpack.c.l.b16 %v34
  %v75 = vunpack.c.l.b16 %v35
  %v76 = vunpack.c.l.b16 %v36
  %v77 = vunpack.c.l.b16 %v37
  %v78 = vunpack.c.l.b16 %v38
  %v79 = vunpack.c.l.b16 %v39
  %v80 = vpack.c.b16 %v73, %v72
  %v81 = vpack.c.b16 %v75, %v74
  %v82 = vpack.c.b16 %v77, %v76
  %v83 = vpack.c.b16 %v79, %v78
  %vm88 = vcmask 523264
  %v90 = vsel %vm88, %v60, 0
  %v93 = vsel %vm88, %v61, 0
  %v96 = vsel %vm88, %v62, 0
  %v99 = vsel %vm88, %v63, 0
  %101 = vmatpush.bf16.msra.mxu0 0
  %102 = vmatpush.bf16.msra.mxu0 0
  %103 = vmatpush.bf16.msra.mxu0 0
  %104 = vmatpush.bf16.msra.mxu0 0
  %105 = vmatpush.bf16.msra.mxu0 %v83
  %106 = vmatpush.bf16.msra.mxu0 %v82
  %107 = vmatpush.bf16.msra.mxu0 %v81
  %108 = vmatpush.bf16.msra.mxu0 %v80
  %109 = vmatmul.bf16.gmra.mxu0 %v90
  %v110 = vpop.f32.mrf.mxu0
  %v111 = vadd.f32 %v42, %v110
  %v112 = vpop.f32.mrf.mxu0
  %v113 = vadd.f32 %v42, %v112
  %114 = vmatmul.bf16.gmra.mxu0 %v93
  %v115 = vpop.f32.mrf.mxu0
  %v116 = vadd.f32 %v42, %v115
  %v117 = vpop.f32.mrf.mxu0
  %v118 = vadd.f32 %v42, %v117
  %119 = vmatmul.bf16.gmra.mxu0 %v96
  %v120 = vpop.f32.mrf.mxu0
  %v121 = vadd.f32 %v42, %v120
  %v122 = vpop.f32.mrf.mxu0
  %v123 = vadd.f32 %v42, %v122
  %124 = vmatmul.bf16.gmra.mxu0 %v99
  %v125 = vpop.f32.mrf.mxu0
  %v126 = vadd.f32 %v42, %v125
  %v127 = vpop.f32.mrf.mxu0
  %v128 = vadd.f32 %v42, %v127
  %129 = vdwg.mxu0
  %v130 = vld [vmem:[%s1] sm:$0xf]
  %v131 = vld [vmem:[%s1 + $0x4] sm:$0xf]
  %v132 = vld [vmem:[%s1 + $0x8] sm:$0xf]
  %v133 = vld [vmem:[%s1 + $0xc] sm:$0xf]
  %v134 = vld [vmem:[%s1 + $0x10] sm:$0xf]
  %v135 = vld [vmem:[%s1 + $0x14] sm:$0xf]
  %v136 = vld [vmem:[%s1 + $0x18] sm:$0xf]
  %v137 = vld [vmem:[%s1 + $0x1c] sm:$0xf]
  %v138 = vunpack.c.l.bf16 %v130
  %v139 = vunpack.c.l.bf16 %v131
  %v140 = vunpack.c.l.bf16 %v132
  %v141 = vunpack.c.l.bf16 %v133
  %v142 = vunpack.c.l.bf16 %v134
  %v143 = vunpack.c.l.bf16 %v135
  %v144 = vunpack.c.l.bf16 %v136
  %v145 = vunpack.c.l.bf16 %v137
  %v146 = vadd.f32 %v138, %v111
  %v147 = vadd.f32 %v139, %v113
  %v148 = vadd.f32 %v140, %v116
  %v149 = vadd.f32 %v141, %v118
  %v150 = vadd.f32 %v142, %v121
  %v151 = vadd.f32 %v143, %v123
  %v152 = vadd.f32 %v144, %v126
  %v153 = vadd.f32 %v145, %v128
  %v154 = vld [vmem:[%s4] sm:$0x1]
  %v155 = vld [vmem:[%s5] sm:$0x1]
  %v156 = vsel %vm88, %v146, 0.0
  %157 = vadd.xlane.f32.xlu0 %v156
  %v158 = vpop.xlane.xlu0 %157
  %v159 = vsel %vm88, %v147, 0.0
  %160 = vadd.xlane.f32.xlu0 %v159
  %v161 = vpop.xlane.xlu0 %160
  %v162 = vsel %vm88, %v148, 0.0
  %163 = vadd.xlane.f32.xlu0 %v162
  %v164 = vpop.xlane.xlu0 %163
  %v165 = vsel %vm88, %v149, 0.0
  %166 = vadd.xlane.f32.xlu0 %v165
  %v167 = vpop.xlane.xlu0 %166
  %v168 = vsel %vm88, %v150, 0.0
  %169 = vadd.xlane.f32.xlu0 %v168
  %v170 = vpop.xlane.xlu0 %169
  %v171 = vsel %vm88, %v151, 0.0
  %172 = vadd.xlane.f32.xlu0 %v171
  %v173 = vpop.xlane.xlu0 %172
  %v174 = vsel %vm88, %v152, 0.0
  %175 = vadd.xlane.f32.xlu0 %v174
  %v176 = vpop.xlane.xlu0 %175
  %v177 = vsel %vm88, %v153, 0.0
  %178 = vadd.xlane.f32.xlu0 %v177
  %v179 = vpop.xlane.xlu0 %178
  %v180 = vrcp.pop 64.0
  %v181 = vmul.f32 64.0, %v180
  %v182 = vsub.f32 1.0, %v181
  %v183 = vmul.f32 %v180, %v182
  %v184 = vadd.f32 %v180, %v183
  %vm185 = vweird.f32 %v180
  %v186 = vsel %vm185, %v180, %v184
  %v187 = vmul.f32 %v158, %v186
  %v188 = vmul.f32 %v161, %v186
  %v189 = vmul.f32 %v164, %v186
  %v190 = vmul.f32 %v167, %v186
  %v191 = vmul.f32 %v170, %v186
  %v192 = vmul.f32 %v173, %v186
  %v193 = vmul.f32 %v176, %v186
  %v194 = vmul.f32 %v179, %v186
  %v195 = vsub.f32 %v146, %v187
  %v196 = vsub.f32 %v147, %v188
  %v197 = vsub.f32 %v148, %v189
  %v198 = vsub.f32 %v149, %v190
  %v199 = vsub.f32 %v150, %v191
  %v200 = vsub.f32 %v151, %v192
  %v201 = vsub.f32 %v152, %v193
  %v202 = vsub.f32 %v153, %v194
  %v203 = vmul.f32 %v195, %v195
  %v204 = vmul.f32 %v196, %v196
  %v205 = vmul.f32 %v197, %v197
  %v206 = vmul.f32 %v198, %v198
  %v207 = vmul.f32 %v199, %v199
  %v208 = vmul.f32 %v200, %v200
  %v209 = vmul.f32 %v201, %v201
  %v210 = vmul.f32 %v202, %v202
  %v211 = vsel %vm88, %v203, 0.0
  %212 = vadd.xlane.f32.xlu0 %v211
  %v213 = vpop.xlane.xlu0 %212
  %v214 = vsel %vm88, %v204, 0.0
  %215 = vadd.xlane.f32.xlu0 %v214
  %v216 = vpop.xlane.xlu0 %215
  %v217 = vsel %vm88, %v205, 0.0
  %218 = vadd.xlane.f32.xlu0 %v217
  %v219 = vpop.xlane.xlu0 %218
  %v220 = vsel %vm88, %v206, 0.0
  %221 = vadd.xlane.f32.xlu0 %v220
  %v222 = vpop.xlane.xlu0 %221
  %v223 = vsel %vm88, %v207, 0.0
  %224 = vadd.xlane.f32.xlu0 %v223
  %v225 = vpop.xlane.xlu0 %224
  %v226 = vsel %vm88, %v208, 0.0
  %227 = vadd.xlane.f32.xlu0 %v226
  %v228 = vpop.xlane.xlu0 %227
  %v229 = vsel %vm88, %v209, 0.0
  %230 = vadd.xlane.f32.xlu0 %v229
  %v231 = vpop.xlane.xlu0 %230
  %v232 = vsel %vm88, %v210, 0.0
  %233 = vadd.xlane.f32.xlu0 %v232
  %v234 = vpop.xlane.xlu0 %233
  %v235 = vmul.f32 %v213, %v186
  %v236 = vmul.f32 %v216, %v186
  %v237 = vmul.f32 %v219, %v186
  %v238 = vmul.f32 %v222, %v186
  %v239 = vmul.f32 %v225, %v186
  %v240 = vmul.f32 %v228, %v186
  %v241 = vmul.f32 %v231, %v186
  %v242 = vmul.f32 %v234, %v186
  %v243 = vadd.f32 %v235, 1e-05
  %v244 = vadd.f32 %v236, 1e-05
  %v245 = vadd.f32 %v237, 1e-05
  %v246 = vadd.f32 %v238, 1e-05
  %v247 = vadd.f32 %v239, 1e-05
  %v248 = vadd.f32 %v240, 1e-05
  %v249 = vadd.f32 %v241, 1e-05
  %v250 = vadd.f32 %v242, 1e-05
  %v251 = vrsqrt.pop %v243
  %v252 = vmul.f32 %v251, %v243
  %v253 = vmul.f32 %v252, %v251
  %v254 = vmul.f32 0.5, %v253
  %v255 = vsub.f32 1.5, %v254
  %v256 = vmul.f32 %v251, %v255
  %vm257 = vweird.f32 %v243
  %vm258 = vweird.f32 %v251
  %vm259 = vmor %vm257, %vm258
  %v260 = vsel %vm259, %v251, %v256
  %v261 = vrsqrt.pop %v244
  %v262 = vmul.f32 %v261, %v244
  %v263 = vmul.f32 %v262, %v261
  %v264 = vmul.f32 0.5, %v263
  %v265 = vsub.f32 1.5, %v264
  %v266 = vmul.f32 %v261, %v265
  %vm267 = vweird.f32 %v244
  %vm268 = vweird.f32 %v261
  %vm269 = vmor %vm267, %vm268
  %v270 = vsel %vm269, %v261, %v266
  %v271 = vrsqrt.pop %v245
  %v272 = vmul.f32 %v271, %v245
  %v273 = vmul.f32 %v272, %v271
  %v274 = vmul.f32 0.5, %v273
  %v275 = vsub.f32 1.5, %v274
  %v276 = vmul.f32 %v271, %v275
  %vm277 = vweird.f32 %v245
  %vm278 = vweird.f32 %v271
  %vm279 = vmor %vm277, %vm278
  %v280 = vsel %vm279, %v271, %v276
  %v281 = vrsqrt.pop %v246
  %v282 = vmul.f32 %v281, %v246
  %v283 = vmul.f32 %v282, %v281
  %v284 = vmul.f32 0.5, %v283
  %v285 = vsub.f32 1.5, %v284
  %v286 = vmul.f32 %v281, %v285
  %vm287 = vweird.f32 %v246
  %vm288 = vweird.f32 %v281
  %vm289 = vmor %vm287, %vm288
  %v290 = vsel %vm289, %v281, %v286
  %v291 = vrsqrt.pop %v247
  %v292 = vmul.f32 %v291, %v247
  %v293 = vmul.f32 %v292, %v291
  %v294 = vmul.f32 0.5, %v293
  %v295 = vsub.f32 1.5, %v294
  %v296 = vmul.f32 %v291, %v295
  %vm297 = vweird.f32 %v247
  %vm298 = vweird.f32 %v291
  %vm299 = vmor %vm297, %vm298
  %v300 = vsel %vm299, %v291, %v296
  %v301 = vrsqrt.pop %v248
  %v302 = vmul.f32 %v301, %v248
  %v303 = vmul.f32 %v302, %v301
  %v304 = vmul.f32 0.5, %v303
  %v305 = vsub.f32 1.5, %v304
  %v306 = vmul.f32 %v301, %v305
  %vm307 = vweird.f32 %v248
  %vm308 = vweird.f32 %v301
  %vm309 = vmor %vm307, %vm308
  %v310 = vsel %vm309, %v301, %v306
  %v311 = vrsqrt.pop %v249
  %v312 = vmul.f32 %v311, %v249
  %v313 = vmul.f32 %v312, %v311
  %v314 = vmul.f32 0.5, %v313
  %v315 = vsub.f32 1.5, %v314
  %v316 = vmul.f32 %v311, %v315
  %vm317 = vweird.f32 %v249
  %vm318 = vweird.f32 %v311
  %vm319 = vmor %vm317, %vm318
  %v320 = vsel %vm319, %v311, %v316
  %v321 = vrsqrt.pop %v250
  %v322 = vmul.f32 %v321, %v250
  %v323 = vmul.f32 %v322, %v321
  %v324 = vmul.f32 0.5, %v323
  %v325 = vsub.f32 1.5, %v324
  %v326 = vmul.f32 %v321, %v325
  %vm327 = vweird.f32 %v250
  %vm328 = vweird.f32 %v321
  %vm329 = vmor %vm327, %vm328
  %v330 = vsel %vm329, %v321, %v326
  %v331 = vmul.f32 %v195, %v260
  %v332 = vmul.f32 %v196, %v270
  %v333 = vmul.f32 %v197, %v280
  %v334 = vmul.f32 %v198, %v290
  %v335 = vmul.f32 %v199, %v300
  %v336 = vmul.f32 %v200, %v310
  %v337 = vmul.f32 %v201, %v320
  %v338 = vmul.f32 %v202, %v330
  %v340 = vperm.slane %v154, 0
  %v342 = vmul.f32 %v331, %v340
  %v343 = vmul.f32 %v332, %v340
  %v344 = vmul.f32 %v333, %v340
  %v345 = vmul.f32 %v334, %v340
  %v346 = vmul.f32 %v335, %v340
  %v347 = vmul.f32 %v336, %v340
  %v348 = vmul.f32 %v337, %v340
  %v349 = vmul.f32 %v338, %v340
  %v351 = vperm.slane %v155, 0
  %v353 = vadd.f32 %v342, %v351
  %v354 = vadd.f32 %v343, %v351
  %v355 = vadd.f32 %v344, %v351
  %v356 = vadd.f32 %v345, %v351
  %v357 = vadd.f32 %v346, %v351
  %v358 = vadd.f32 %v347, %v351
  %v359 = vadd.f32 %v348, %v351
  %v360 = vadd.f32 %v349, %v351
  %v361 = vpack.c.bf16 %v353, %v353
  %v362 = vpack.c.bf16 %v354, %v354
  %v363 = vpack.c.bf16 %v355, %v355
  %v364 = vpack.c.bf16 %v356, %v356
  %v365 = vpack.c.bf16 %v357, %v357
  %v366 = vpack.c.bf16 %v358, %v358
  %v367 = vpack.c.bf16 %v359, %v359
  %v368 = vpack.c.bf16 %v360, %v360
  %vm369 = vcmask 519168
  %370 = vst.msk [vmem:[%s6] sm:$0xf] %vm369, %v361
  %371 = vst.msk [vmem:[%s6 + $0x4] sm:$0xf] %vm369, %v362
  %372 = vst.msk [vmem:[%s6 + $0x8] sm:$0xf] %vm369, %v363
  %373 = vst.msk [vmem:[%s6 + $0xc] sm:$0xf] %vm369, %v364
  %374 = vst.msk [vmem:[%s6 + $0x10] sm:$0xf] %vm369, %v365
  %375 = vst.msk [vmem:[%s6 + $0x14] sm:$0xf] %vm369, %v366
  %376 = vst.msk [vmem:[%s6 + $0x18] sm:$0xf] %vm369, %v367
  %377 = vst.msk [vmem:[%s6 + $0x1c] sm:$0xf] %vm369, %v368
  // Predicated region
  $region26: #{_lambda_.15} parent=0 // pred_check
    _
  $region27: #{_lambda_.15} parent=0 // pred_check_branch
    %379 = sbr.rel (0) target = $region29
  $region28: #{_lambda_.15} parent=0 // pred_region
    _
  $region29: #{_lambda_.15} parent=0 // pred_fallthru
    _
  // Predicated region
  $region30: #{_lambda_.15} parent=0 // pred_check
    _
  $region31: #{_lambda_.15} parent=0 // pred_check_branch
    %381 = sbr.rel (0) target = $region33
  $region32: #{_lambda_.15} parent=0 // pred_region
    _
  $region33: #{_lambda_.15} parent=0 // pred_fallthru
    _

// kernel: _lambda_.16
$region0: #{_lambda_.16}
  #allocation0 [shape = 'u32[]', space=smem, size = 0x4, offset = 0x4, fixed_abs, tag = 'smem constant byte address 0x4 - core index']
  #allocation1 [shape = 'u32[72,128]{1,0:T(1,128)}', space=vmem, size = 0x9000, scoped, tag = 'internal scratch']
  %s0 = inlined_call_operand.vmem [shape: bf16[64,64], index: 0, kind: input, shape index: {}]
  %s1 = inlined_call_operand.vmem [shape: bf16[64,128], index: 1, kind: input, shape index: {}]
  %s2 = inlined_call_operand.vmem [shape: f32[1,128], index: 2, kind: input, shape index: {}]
  %s3 = inlined_call_operand.vmem [shape: bf16[128,64], index: 3, kind: input, shape index: {}]
  %s4 = inlined_call_operand.vmem [shape: f32[1,64], index: 4, kind: input, shape index: {}, may-alias: {4,6}]
  %s5 = inlined_call_operand.vmem [shape: f32[1,64], index: 5, kind: input, shape index: {}]
  %s6 = inlined_call_operand.vmem [shape: f32[1,64], index: 6, kind: input, shape index: {}, may-alias: {4,6}]
  %s7 = inlined_call_operand.vmem [shape: bf16[64,64], index: 7, kind: output, shape index: {}]
  %s8 = sld [smem:[#allocation0]]
  $region38: #{_lambda_.16} parent=0
    _
  %s10 = ssub.s32 1, %s8
  %s11 = scalar_select 0, %s10, %s8
  // Predicated region
  $region2: #{_lambda_.16} parent=0 // pred_check
    _
  $region3: #{_lambda_.16} parent=0 // pred_check_branch
    %13 = sbr.rel (0) target = $region5
  $region4: #{_lambda_.16} parent=0 // pred_region
    _
  $region5: #{_lambda_.16} parent=0 // pred_fallthru
    _
  // Predicated region
  $region6: #{_lambda_.16} parent=0 // pred_check
    _
  $region7: #{_lambda_.16} parent=0 // pred_check_branch
    %15 = sbr.rel (0) target = $region9
  $region8: #{_lambda_.16} parent=0 // pred_region
    _
  $region9: #{_lambda_.16} parent=0 // pred_fallthru
    _
  // Predicated region
  $region10: #{_lambda_.16} parent=0 // pred_check
    _
  $region11: #{_lambda_.16} parent=0 // pred_check_branch
    %17 = sbr.rel (0) target = $region13
  $region12: #{_lambda_.16} parent=0 // pred_region
    _
  $region13: #{_lambda_.16} parent=0 // pred_fallthru
    _
  // Predicated region
  $region14: #{_lambda_.16} parent=0 // pred_check
    _
  $region15: #{_lambda_.16} parent=0 // pred_check_branch
    %19 = sbr.rel (0) target = $region17
  $region16: #{_lambda_.16} parent=0 // pred_region
    _
  $region17: #{_lambda_.16} parent=0 // pred_fallthru
    _
  // Predicated region
  $region18: #{_lambda_.16} parent=0 // pred_check
    _
  $region19: #{_lambda_.16} parent=0 // pred_check_branch
    %21 = sbr.rel (0) target = $region21
  $region20: #{_lambda_.16} parent=0 // pred_region
    _
  $region21: #{_lambda_.16} parent=0 // pred_fallthru
    _
  // Predicated region
  $region22: #{_lambda_.16} parent=0 // pred_check
    _
  $region23: #{_lambda_.16} parent=0 // pred_check_branch
    %23 = sbr.rel (0) target = $region25
  $region24: #{_lambda_.16} parent=0 // pred_region
    _
  $region25: #{_lambda_.16} parent=0 // pred_fallthru
    _
  // Predicated region
  $region26: #{_lambda_.16} parent=0 // pred_check
    _
  $region27: #{_lambda_.16} parent=0 // pred_check_branch
    %25 = sbr.rel (0) target = $region29
  $region28: #{_lambda_.16} parent=0 // pred_region
    _
  $region29: #{_lambda_.16} parent=0 // pred_fallthru
    _
  %v27 = vld [vmem:[%s0] sm:$0xf]
  %v28 = vld [vmem:[%s0 + $0x4] sm:$0xf]
  %v29 = vld [vmem:[%s0 + $0x8] sm:$0xf]
  %v30 = vld [vmem:[%s0 + $0xc] sm:$0xf]
  %v31 = vld [vmem:[%s0 + $0x10] sm:$0xf]
  %v32 = vld [vmem:[%s0 + $0x14] sm:$0xf]
  %v33 = vld [vmem:[%s0 + $0x18] sm:$0xf]
  %v34 = vld [vmem:[%s0 + $0x1c] sm:$0xf]
  %v35 = vld [vmem:[%s1] sm:$0xf]
  %v36 = vld [vmem:[%s1 + $0x4] sm:$0xf]
  %v37 = vld [vmem:[%s1 + $0x8] sm:$0xf]
  %v38 = vld [vmem:[%s1 + $0xc] sm:$0xf]
  %v39 = vld [vmem:[%s1 + $0x10] sm:$0xf]
  %v40 = vld [vmem:[%s1 + $0x14] sm:$0xf]
  %v41 = vld [vmem:[%s1 + $0x18] sm:$0xf]
  %v42 = vld [vmem:[%s1 + $0x1c] sm:$0xf]
  %v43 = vld [vmem:[%s2] sm:$0x1]
  %v45 = vperm.slane %v43, 0
  %v55 = vunpack.c.l.b16 %v27
  %v56 = vunpack.c.l.b16 %v28
  %v57 = vunpack.c.l.b16 %v29
  %v58 = vunpack.c.l.b16 %v30
  %v59 = vunpack.c.l.b16 %v31
  %v60 = vunpack.c.l.b16 %v32
  %v61 = vunpack.c.l.b16 %v33
  %v62 = vunpack.c.l.b16 %v34
  %v63 = vpack.c.b16 %v56, %v55
  %v64 = vpack.c.b16 %v58, %v57
  %v65 = vpack.c.b16 %v60, %v59
  %v66 = vpack.c.b16 %v62, %v61
  %v75 = vunpack.c.l.b16 %v35
  %v76 = vunpack.c.l.b16 %v36
  %v77 = vunpack.c.l.b16 %v37
  %v78 = vunpack.c.l.b16 %v38
  %v79 = vunpack.c.l.b16 %v39
  %v80 = vunpack.c.l.b16 %v40
  %v81 = vunpack.c.l.b16 %v41
  %v82 = vunpack.c.l.b16 %v42
  %v83 = vpack.c.b16 %v76, %v75
  %v84 = vpack.c.b16 %v78, %v77
  %v85 = vpack.c.b16 %v80, %v79
  %v86 = vpack.c.b16 %v82, %v81
  %vm91 = vcmask 523264
  %v93 = vsel %vm91, %v63, 0
  %v96 = vsel %vm91, %v64, 0
  %v99 = vsel %vm91, %v65, 0
  %v102 = vsel %vm91, %v66, 0
  %104 = vmatpush.bf16.msra.mxu0 0
  %105 = vmatpush.bf16.msra.mxu0 0
  %106 = vmatpush.bf16.msra.mxu0 0
  %107 = vmatpush.bf16.msra.mxu0 0
  %108 = vmatpush.bf16.msra.mxu0 %v86
  %109 = vmatpush.bf16.msra.mxu0 %v85
  %110 = vmatpush.bf16.msra.mxu0 %v84
  %111 = vmatpush.bf16.msra.mxu0 %v83
  %112 = vmatmul.bf16.gmra.mxu0 %v93
  %v113 = vpop.f32.mrf.mxu0
  %v114 = vadd.f32 %v45, %v113
  %v115 = vpop.f32.mrf.mxu0
  %v116 = vadd.f32 %v45, %v115
  %117 = vmatmul.bf16.gmra.mxu0 %v96
  %v118 = vpop.f32.mrf.mxu0
  %v119 = vadd.f32 %v45, %v118
  %v120 = vpop.f32.mrf.mxu0
  %v121 = vadd.f32 %v45, %v120
  %122 = vmatmul.bf16.gmra.mxu0 %v99
  %v123 = vpop.f32.mrf.mxu0
  %v124 = vadd.f32 %v45, %v123
  %v125 = vpop.f32.mrf.mxu0
  %v126 = vadd.f32 %v45, %v125
  %127 = vmatmul.bf16.gmra.mxu0 %v102
  %v128 = vpop.f32.mrf.mxu0
  %v129 = vadd.f32 %v45, %v128
  %v130 = vpop.f32.mrf.mxu0
  %v131 = vadd.f32 %v45, %v130
  %132 = vdwg.mxu0
  %v133 = vmul.f32 %v114, 0.5
  %v134 = vmul.f32 %v116, 0.5
  %v135 = vmul.f32 %v119, 0.5
  %v136 = vmul.f32 %v121, 0.5
  %v137 = vmul.f32 %v124, 0.5
  %v138 = vmul.f32 %v126, 0.5
  %v139 = vmul.f32 %v129, 0.5
  %v140 = vmul.f32 %v131, 0.5
  %v141 = vmul.f32 %v114, 0.70710677
  %v142 = vmul.f32 %v116, 0.70710677
  %v143 = vmul.f32 %v119, 0.70710677
  %v144 = vmul.f32 %v121, 0.70710677
  %v145 = vmul.f32 %v124, 0.70710677
  %v146 = vmul.f32 %v126, 0.70710677
  %v147 = vmul.f32 %v129, 0.70710677
  %v148 = vmul.f32 %v131, 0.70710677
  %v149 = vmul.f32 %v141, %v141
  %v150 = vmin.f32 16.0, %v149
  %v151 = vmul.f32 %v150, 2.1237322e-06
  %v152 = vadd.f32 %v151, 0.00028619796
  %v153 = vmul.f32 %v150, %v152
  %v154 = vadd.f32 %v153, 0.0036580483
  %v155 = vmul.f32 %v150, %v154
  %v156 = vadd.f32 %v155, 0.05243302
  %v157 = vmul.f32 %v150, %v156
  %v158 = vadd.f32 %v157, 0.18741608
  %v159 = vmul.f32 %v150, %v158
  %v160 = vadd.f32 %v159, 1.1283791
  %v161 = vmul.f32 %v141, %v160
  %v162 = vmul.f32 %v150, 3.8918573e-05
  %v163 = vadd.f32 %v162, 0.001143296
  %v164 = vmul.f32 %v150, %v163
  %v165 = vadd.f32 %v164, 0.014752088
  %v166 = vmul.f32 %v150, %v165
  %v167 = vadd.f32 %v166, 0.112945676
  %v168 = vmul.f32 %v150, %v167
  %v169 = vadd.f32 %v168, 0.4994258
  %v170 = vmul.f32 %v150, %v169
  %v171 = vadd.f32 %v170, 1.0
  %v172 = vrcp.pop %v171
  %v173 = vmul.f32 %v171, %v172
  %v174 = vsub.f32 1.0, %v173
  %v175 = vmul.f32 %v172, %v174
  %v176 = vadd.f32 %v172, %v175
  %vm177 = vweird.f32 %v171
  %vm178 = vweird.f32 %v172
  %vm179 = vmor %vm177, %vm178
  %v180 = vsel %vm179, %v172, %v176
  %v181 = vand.u32 2147483647, %v171
  %vm182 = vcmp.eq.f32.partialorder %v181, 8.507059e+37
  %v183 = vand.u32 %v171, 2147483648
  %v184 = vor.u32 1.1754944e-38, %v183
  %v185 = vsel %vm182, %v184, %v180
  %v186 = vmul.f32 %v161, %v185
  %v187 = vmin.f32 %v186, 1.0
  %v188 = vmax.f32 %v187, -1.0
  %v189 = vmul.f32 %v142, %v142
  %v190 = vmin.f32 16.0, %v189
  %v191 = vmul.f32 %v190, 2.1237322e-06
  %v192 = vadd.f32 %v191, 0.00028619796
  %v193 = vmul.f32 %v190, %v192
  %v194 = vadd.f32 %v193, 0.0036580483
  %v195 = vmul.f32 %v190, %v194
  %v196 = vadd.f32 %v195, 0.05243302
  %v197 = vmul.f32 %v190, %v196
  %v198 = vadd.f32 %v197, 0.18741608
  %v199 = vmul.f32 %v190, %v198
  %v200 = vadd.f32 %v199, 1.1283791
  %v201 = vmul.f32 %v142, %v200
  %v202 = vmul.f32 %v190, 3.8918573e-05
  %v203 = vadd.f32 %v202, 0.001143296
  %v204 = vmul.f32 %v190, %v203
  %v205 = vadd.f32 %v204, 0.014752088
  %v206 = vmul.f32 %v190, %v205
  %v207 = vadd.f32 %v206, 0.112945676
  %v208 = vmul.f32 %v190, %v207
  %v209 = vadd.f32 %v208, 0.4994258
  %v210 = vmul.f32 %v190, %v209
  %v211 = vadd.f32 %v210, 1.0
  %v212 = vrcp.pop %v211
  %v213 = vmul.f32 %v211, %v212
  %v214 = vsub.f32 1.0, %v213
  %v215 = vmul.f32 %v212, %v214
  %v216 = vadd.f32 %v212, %v215
  %vm217 = vweird.f32 %v211
  %vm218 = vweird.f32 %v212
  %vm219 = vmor %vm217, %vm218
  %v220 = vsel %vm219, %v212, %v216
  %v221 = vand.u32 2147483647, %v211
  %vm222 = vcmp.eq.f32.partialorder %v221, 8.507059e+37
  %v223 = vand.u32 %v211, 2147483648
  %v224 = vor.u32 1.1754944e-38, %v223
  %v225 = vsel %vm222, %v224, %v220
  %v226 = vmul.f32 %v201, %v225
  %v227 = vmin.f32 %v226, 1.0
  %v228 = vmax.f32 %v227, -1.0
  %v229 = vmul.f32 %v143, %v143
  %v230 = vmin.f32 16.0, %v229
  %v231 = vmul.f32 %v230, 2.1237322e-06
  %v232 = vadd.f32 %v231, 0.00028619796
  %v233 = vmul.f32 %v230, %v232
  %v234 = vadd.f32 %v233, 0.0036580483
  %v235 = vmul.f32 %v230, %v234
  %v236 = vadd.f32 %v235, 0.05243302
  %v237 = vmul.f32 %v230, %v236
  %v238 = vadd.f32 %v237, 0.18741608
  %v239 = vmul.f32 %v230, %v238
  %v240 = vadd.f32 %v239, 1.1283791
  %v241 = vmul.f32 %v143, %v240
  %v242 = vmul.f32 %v230, 3.8918573e-05
  %v243 = vadd.f32 %v242, 0.001143296
  %v244 = vmul.f32 %v230, %v243
  %v245 = vadd.f32 %v244, 0.014752088
  %v246 = vmul.f32 %v230, %v245
  %v247 = vadd.f32 %v246, 0.112945676
  %v248 = vmul.f32 %v230, %v247
  %v249 = vadd.f32 %v248, 0.4994258
  %v250 = vmul.f32 %v230, %v249
  %v251 = vadd.f32 %v250, 1.0
  %v252 = vrcp.pop %v251
  %v253 = vmul.f32 %v251, %v252
  %v254 = vsub.f32 1.0, %v253
  %v255 = vmul.f32 %v252, %v254
  %v256 = vadd.f32 %v252, %v255
  %vm257 = vweird.f32 %v251
  %vm258 = vweird.f32 %v252
  %vm259 = vmor %vm257, %vm258
  %v260 = vsel %vm259, %v252, %v256
  %v261 = vand.u32 2147483647, %v251
  %vm262 = vcmp.eq.f32.partialorder %v261, 8.507059e+37
  %v263 = vand.u32 %v251, 2147483648
  %v264 = vor.u32 1.1754944e-38, %v263
  %v265 = vsel %vm262, %v264, %v260
  %v266 = vmul.f32 %v241, %v265
  %v267 = vmin.f32 %v266, 1.0
  %v268 = vmax.f32 %v267, -1.0
  %v269 = vmul.f32 %v144, %v144
  %v270 = vmin.f32 16.0, %v269
  %v271 = vmul.f32 %v270, 2.1237322e-06
  %v272 = vadd.f32 %v271, 0.00028619796
  %v273 = vmul.f32 %v270, %v272
  %v274 = vadd.f32 %v273, 0.0036580483
  %v275 = vmul.f32 %v270, %v274
  %v276 = vadd.f32 %v275, 0.05243302
  %v277 = vmul.f32 %v270, %v276
  %v278 = vadd.f32 %v277, 0.18741608
  %v279 = vmul.f32 %v270, %v278
  %v280 = vadd.f32 %v279, 1.1283791
  %v281 = vmul.f32 %v144, %v280
  %v282 = vmul.f32 %v270, 3.8918573e-05
  %v283 = vadd.f32 %v282, 0.001143296
  %v284 = vmul.f32 %v270, %v283
  %v285 = vadd.f32 %v284, 0.014752088
  %v286 = vmul.f32 %v270, %v285
  %v287 = vadd.f32 %v286, 0.112945676
  %v288 = vmul.f32 %v270, %v287
  %v289 = vadd.f32 %v288, 0.4994258
  %v290 = vmul.f32 %v270, %v289
  %v291 = vadd.f32 %v290, 1.0
  %v292 = vrcp.pop %v291
  %v293 = vmul.f32 %v291, %v292
  %v294 = vsub.f32 1.0, %v293
  %v295 = vmul.f32 %v292, %v294
  %v296 = vadd.f32 %v292, %v295
  %vm297 = vweird.f32 %v291
  %vm298 = vweird.f32 %v292
  %vm299 = vmor %vm297, %vm298
  %v300 = vsel %vm299, %v292, %v296
  %v301 = vand.u32 2147483647, %v291
  %vm302 = vcmp.eq.f32.partialorder %v301, 8.507059e+37
  %v303 = vand.u32 %v291, 2147483648
  %v304 = vor.u32 1.1754944e-38, %v303
  %v305 = vsel %vm302, %v304, %v300
  %v306 = vmul.f32 %v281, %v305
  %v307 = vmin.f32 %v306, 1.0
  %v308 = vmax.f32 %v307, -1.0
  %v309 = vmul.f32 %v145, %v145
  %v310 = vmin.f32 16.0, %v309
  %v311 = vmul.f32 %v310, 2.1237322e-06
  %v312 = vadd.f32 %v311, 0.00028619796
  %v313 = vmul.f32 %v310, %v312
  %v314 = vadd.f32 %v313, 0.0036580483
  %v315 = vmul.f32 %v310, %v314
  %v316 = vadd.f32 %v315, 0.05243302
  %v317 = vmul.f32 %v310, %v316
  %v318 = vadd.f32 %v317, 0.18741608
  %v319 = vmul.f32 %v310, %v318
  %v320 = vadd.f32 %v319, 1.1283791
  %v321 = vmul.f32 %v145, %v320
  %v322 = vmul.f32 %v310, 3.8918573e-05
  %v323 = vadd.f32 %v322, 0.001143296
  %v324 = vmul.f32 %v310, %v323
  %v325 = vadd.f32 %v324, 0.014752088
  %v326 = vmul.f32 %v310, %v325
  %v327 = vadd.f32 %v326, 0.112945676
  %v328 = vmul.f32 %v310, %v327
  %v329 = vadd.f32 %v328, 0.4994258
  %v330 = vmul.f32 %v310, %v329
  %v331 = vadd.f32 %v330, 1.0
  %v332 = vrcp.pop %v331
  %v333 = vmul.f32 %v331, %v332
  %v334 = vsub.f32 1.0, %v333
  %v335 = vmul.f32 %v332, %v334
  %v336 = vadd.f32 %v332, %v335
  %vm337 = vweird.f32 %v331
  %vm338 = vweird.f32 %v332
  %vm339 = vmor %vm337, %vm338
  %v340 = vsel %vm339, %v332, %v336
  %v341 = vand.u32 2147483647, %v331
  %vm342 = vcmp.eq.f32.partialorder %v341, 8.507059e+37
  %v343 = vand.u32 %v331, 2147483648
  %v344 = vor.u32 1.1754944e-38, %v343
  %v345 = vsel %vm342, %v344, %v340
  %v346 = vmul.f32 %v321, %v345
  %v347 = vmin.f32 %v346, 1.0
  %v348 = vmax.f32 %v347, -1.0
  %v349 = vmul.f32 %v146, %v146
  %v350 = vmin.f32 16.0, %v349
  %v351 = vmul.f32 %v350, 2.1237322e-06
  %v352 = vadd.f32 %v351, 0.00028619796
  %v353 = vmul.f32 %v350, %v352
  %v354 = vadd.f32 %v353, 0.0036580483
  %v355 = vmul.f32 %v350, %v354
  %v356 = vadd.f32 %v355, 0.05243302
  %v357 = vmul.f32 %v350, %v356
  %v358 = vadd.f32 %v357, 0.18741608
  %v359 = vmul.f32 %v350, %v358
  %v360 = vadd.f32 %v359, 1.1283791
  %v361 = vmul.f32 %v146, %v360
  %v362 = vmul.f32 %v350, 3.8918573e-05
  %v363 = vadd.f32 %v362, 0.001143296
  %v364 = vmul.f32 %v350, %v363
  %v365 = vadd.f32 %v364, 0.014752088
  %v366 = vmul.f32 %v350, %v365
  %v367 = vadd.f32 %v366, 0.112945676
  %v368 = vmul.f32 %v350, %v367
  %v369 = vadd.f32 %v368, 0.4994258
  %v370 = vmul.f32 %v350, %v369
  %v371 = vadd.f32 %v370, 1.0
  %v372 = vrcp.pop %v371
  %v373 = vmul.f32 %v371, %v372
  %v374 = vsub.f32 1.0, %v373
  %v375 = vmul.f32 %v372, %v374
  %v376 = vadd.f32 %v372, %v375
  %vm377 = vweird.f32 %v371
  %vm378 = vweird.f32 %v372
  %vm379 = vmor %vm377, %vm378
  %v380 = vsel %vm379, %v372, %v376
  %v381 = vand.u32 2147483647, %v371
  %vm382 = vcmp.eq.f32.partialorder %v381, 8.507059e+37
  %v383 = vand.u32 %v371, 2147483648
  %v384 = vor.u32 1.1754944e-38, %v383
  %v385 = vsel %vm382, %v384, %v380
  %v386 = vmul.f32 %v361, %v385
  %v387 = vmin.f32 %v386, 1.0
  %v388 = vmax.f32 %v387, -1.0
  %v389 = vmul.f32 %v147, %v147
  %v390 = vmin.f32 16.0, %v389
  %v391 = vmul.f32 %v390, 2.1237322e-06
  %v392 = vadd.f32 %v391, 0.00028619796
  %v393 = vmul.f32 %v390, %v392
  %v394 = vadd.f32 %v393, 0.0036580483
  %v395 = vmul.f32 %v390, %v394
  %v396 = vadd.f32 %v395, 0.05243302
  %v397 = vmul.f32 %v390, %v396
  %v398 = vadd.f32 %v397, 0.18741608
  %v399 = vmul.f32 %v390, %v398
  %v400 = vadd.f32 %v399, 1.1283791
  %v401 = vmul.f32 %v147, %v400
  %v402 = vmul.f32 %v390, 3.8918573e-05
  %v403 = vadd.f32 %v402, 0.001143296
  %v404 = vmul.f32 %v390, %v403
  %v405 = vadd.f32 %v404, 0.014752088
  %v406 = vmul.f32 %v390, %v405
  %v407 = vadd.f32 %v406, 0.112945676
  %v408 = vmul.f32 %v390, %v407
  %v409 = vadd.f32 %v408, 0.4994258
  %v410 = vmul.f32 %v390, %v409
  %v411 = vadd.f32 %v410, 1.0
  %v412 = vrcp.pop %v411
  %v413 = vmul.f32 %v411, %v412
  %v414 = vsub.f32 1.0, %v413
  %v415 = vmul.f32 %v412, %v414
  %v416 = vadd.f32 %v412, %v415
  %vm417 = vweird.f32 %v411
  %vm418 = vweird.f32 %v412
  %vm419 = vmor %vm417, %vm418
  %v420 = vsel %vm419, %v412, %v416
  %v421 = vand.u32 2147483647, %v411
  %vm422 = vcmp.eq.f32.partialorder %v421, 8.507059e+37
  %v423 = vand.u32 %v411, 2147483648
  %v424 = vor.u32 1.1754944e-38, %v423
  %v425 = vsel %vm422, %v424, %v420
  %v426 = vmul.f32 %v401, %v425
  %v427 = vmin.f32 %v426, 1.0
  %v428 = vmax.f32 %v427, -1.0
  %v429 = vmul.f32 %v148, %v148
  %v430 = vmin.f32 16.0, %v429
  %v431 = vmul.f32 %v430, 2.1237322e-06
  %v432 = vadd.f32 %v431, 0.00028619796
  %v433 = vmul.f32 %v430, %v432
  %v434 = vadd.f32 %v433, 0.0036580483
  %v435 = vmul.f32 %v430, %v434
  %v436 = vadd.f32 %v435, 0.05243302
  %v437 = vmul.f32 %v430, %v436
  %v438 = vadd.f32 %v437, 0.18741608
  %v439 = vmul.f32 %v430, %v438
  %v440 = vadd.f32 %v439, 1.1283791
  %v441 = vmul.f32 %v148, %v440
  %v442 = vmul.f32 %v430, 3.8918573e-05
  %v443 = vadd.f32 %v442, 0.001143296
  %v444 = vmul.f32 %v430, %v443
  %v445 = vadd.f32 %v444, 0.014752088
  %v446 = vmul.f32 %v430, %v445
  %v447 = vadd.f32 %v446, 0.112945676
  %v448 = vmul.f32 %v430, %v447
  %v449 = vadd.f32 %v448, 0.4994258
  %v450 = vmul.f32 %v430, %v449
  %v451 = vadd.f32 %v450, 1.0
  %v452 = vrcp.pop %v451
  %v453 = vmul.f32 %v451, %v452
  %v454 = vsub.f32 1.0, %v453
  %v455 = vmul.f32 %v452, %v454
  %v456 = vadd.f32 %v452, %v455
  %vm457 = vweird.f32 %v451
  %vm458 = vweird.f32 %v452
  %vm459 = vmor %vm457, %vm458
  %v460 = vsel %vm459, %v452, %v456
  %v461 = vand.u32 2147483647, %v451
  %vm462 = vcmp.eq.f32.partialorder %v461, 8.507059e+37
  %v463 = vand.u32 %v451, 2147483648
  %v464 = vor.u32 1.1754944e-38, %v463
  %v465 = vsel %vm462, %v464, %v460
  %v466 = vmul.f32 %v441, %v465
  %v467 = vmin.f32 %v466, 1.0
  %v468 = vmax.f32 %v467, -1.0
  %v469 = vadd.f32 %v188, 1.0
  %v470 = vadd.f32 %v228, 1.0
  %v471 = vadd.f32 %v268, 1.0
  %v472 = vadd.f32 %v308, 1.0
  %v473 = vadd.f32 %v348, 1.0
  %v474 = vadd.f32 %v388, 1.0
  %v475 = vadd.f32 %v428, 1.0
  %v476 = vadd.f32 %v468, 1.0
  %v477 = vmul.f32 %v133, %v469
  %v478 = vmul.f32 %v134, %v470
  %v479 = vmul.f32 %v135, %v471
  %v480 = vmul.f32 %v136, %v472
  %v481 = vmul.f32 %v137, %v473
  %v482 = vmul.f32 %v138, %v474
  %v483 = vmul.f32 %v139, %v475
  %v484 = vmul.f32 %v140, %v476
  %v485 = vpack.c.bf16 %v478, %v477
  %v486 = vpack.c.bf16 %v480, %v479
  %v487 = vpack.c.bf16 %v482, %v481
  %v488 = vpack.c.bf16 %v484, %v483
  %v489 = vld [vmem:[%s3] sm:$0xf]
  %v490 = vld [vmem:[%s3 + $0x4] sm:$0xf]
  %v491 = vld [vmem:[%s3 + $0x8] sm:$0xf]
  %v492 = vld [vmem:[%s3 + $0xc] sm:$0xf]
  %v493 = vld [vmem:[%s3 + $0x10] sm:$0xf]
  %v494 = vld [vmem:[%s3 + $0x14] sm:$0xf]
  %v495 = vld [vmem:[%s3 + $0x18] sm:$0xf]
  %v496 = vld [vmem:[%s3 + $0x1c] sm:$0xf]
  %v497 = vld [vmem:[%s3 + $0x20] sm:$0xf]
  %v498 = vld [vmem:[%s3 + $0x24] sm:$0xf]
  %v499 = vld [vmem:[%s3 + $0x28] sm:$0xf]
  %v500 = vld [vmem:[%s3 + $0x2c] sm:$0xf]
  %v501 = vld [vmem:[%s3 + $0x30] sm:$0xf]
  %v502 = vld [vmem:[%s3 + $0x34] sm:$0xf]
  %v503 = vld [vmem:[%s3 + $0x38] sm:$0xf]
  %v504 = vld [vmem:[%s3 + $0x3c] sm:$0xf]
  %v505 = vld [vmem:[%s4] sm:$0x1]
  %v507 = vperm.slane %v505, 0
  %v525 = vunpack.c.l.b16 %v489
  %v526 = vunpack.c.l.b16 %v490
  %v527 = vunpack.c.l.b16 %v491
  %v528 = vunpack.c.l.b16 %v492
  %v529 = vunpack.c.l.b16 %v493
  %v530 = vunpack.c.l.b16 %v494
  %v531 = vunpack.c.l.b16 %v495
  %v532 = vunpack.c.l.b16 %v496
  %v533 = vunpack.c.l.b16 %v497
  %v534 = vunpack.c.l.b16 %v498
  %v535 = vunpack.c.l.b16 %v499
  %v536 = vunpack.c.l.b16 %v500
  %v537 = vunpack.c.l.b16 %v501
  %v538 = vunpack.c.l.b16 %v502
  %v539 = vunpack.c.l.b16 %v503
  %v540 = vunpack.c.l.b16 %v504
  %v541 = vpack.c.b16 %v526, %v525
  %v542 = vpack.c.b16 %v528, %v527
  %v543 = vpack.c.b16 %v530, %v529
  %v544 = vpack.c.b16 %v532, %v531
  %v545 = vpack.c.b16 %v534, %v533
  %v546 = vpack.c.b16 %v536, %v535
  %v547 = vpack.c.b16 %v538, %v537
  %v548 = vpack.c.b16 %v540, %v539
  %557 = vmatpush.bf16.msra.mxu0 %v548
  %558 = vmatpush.bf16.msra.mxu0 %v547
  %559 = vmatpush.bf16.msra.mxu0 %v546
  %560 = vmatpush.bf16.msra.mxu0 %v545
  %561 = vmatpush.bf16.msra.mxu0 %v544
  %562 = vmatpush.bf16.msra.mxu0 %v543
  %563 = vmatpush.bf16.msra.mxu0 %v542
  %564 = vmatpush.bf16.msra.mxu0 %v541
  %565 = vmatmul.bf16.gmra.mxu0 %v485
  %v566 = vpop.f32.mrf.mxu0
  %v567 = vadd.f32 %v507, %v566
  %v568 = vpop.f32.mrf.mxu0
  %v569 = vadd.f32 %v507, %v568
  %570 = vmatmul.bf16.gmra.mxu0 %v486
  %v571 = vpop.f32.mrf.mxu0
  %v572 = vadd.f32 %v507, %v571
  %v573 = vpop.f32.mrf.mxu0
  %v574 = vadd.f32 %v507, %v573
  %575 = vmatmul.bf16.gmra.mxu0 %v487
  %v576 = vpop.f32.mrf.mxu0
  %v577 = vadd.f32 %v507, %v576
  %v578 = vpop.f32.mrf.mxu0
  %v579 = vadd.f32 %v507, %v578
  %580 = vmatmul.bf16.gmra.mxu0 %v488
  %v581 = vpop.f32.mrf.mxu0
  %v582 = vadd.f32 %v507, %v581
  %v583 = vpop.f32.mrf.mxu0
  %v584 = vadd.f32 %v507, %v583
  %585 = vdwg.mxu0
  %v586 = vunpack.c.l.bf16 %v27
  %v587 = vunpack.c.l.bf16 %v28
  %v588 = vunpack.c.l.bf16 %v29
  %v589 = vunpack.c.l.bf16 %v30
  %v590 = vunpack.c.l.bf16 %v31
  %v591 = vunpack.c.l.bf16 %v32
  %v592 = vunpack.c.l.bf16 %v33
  %v593 = vunpack.c.l.bf16 %v34
  %v594 = vadd.f32 %v586, %v567
  %v595 = vadd.f32 %v587, %v569
  %v596 = vadd.f32 %v588, %v572
  %v597 = vadd.f32 %v589, %v574
  %v598 = vadd.f32 %v590, %v577
  %v599 = vadd.f32 %v591, %v579
  %v600 = vadd.f32 %v592, %v582
  %v601 = vadd.f32 %v593, %v584
  %v602 = vld [vmem:[%s5] sm:$0x1]
  %v603 = vld [vmem:[%s6] sm:$0x1]
  %v604 = vsel %vm91, %v594, 0.0
  %605 = vadd.xlane.f32.xlu0 %v604
  %v606 = vpop.xlane.xlu0 %605
  %v607 = vsel %vm91, %v595, 0.0
  %608 = vadd.xlane.f32.xlu0 %v607
  %v609 = vpop.xlane.xlu0 %608
  %v610 = vsel %vm91, %v596, 0.0
  %611 = vadd.xlane.f32.xlu0 %v610
  %v612 = vpop.xlane.xlu0 %611
  %v613 = vsel %vm91, %v597, 0.0
  %614 = vadd.xlane.f32.xlu0 %v613
  %v615 = vpop.xlane.xlu0 %614
  %v616 = vsel %vm91, %v598, 0.0
  %617 = vadd.xlane.f32.xlu0 %v616
  %v618 = vpop.xlane.xlu0 %617
  %v619 = vsel %vm91, %v599, 0.0
  %620 = vadd.xlane.f32.xlu0 %v619
  %v621 = vpop.xlane.xlu0 %620
  %v622 = vsel %vm91, %v600, 0.0
  %623 = vadd.xlane.f32.xlu0 %v622
  %v624 = vpop.xlane.xlu0 %623
  %v625 = vsel %vm91, %v601, 0.0
  %626 = vadd.xlane.f32.xlu0 %v625
  %v627 = vpop.xlane.xlu0 %626
  %v628 = vrcp.pop 64.0
  %v629 = vmul.f32 64.0, %v628
  %v630 = vsub.f32 1.0, %v629
  %v631 = vmul.f32 %v628, %v630
  %v632 = vadd.f32 %v628, %v631
  %vm633 = vweird.f32 %v628
  %v634 = vsel %vm633, %v628, %v632
  %v635 = vmul.f32 %v606, %v634
  %v636 = vmul.f32 %v609, %v634
  %v637 = vmul.f32 %v612, %v634
  %v638 = vmul.f32 %v615, %v634
  %v639 = vmul.f32 %v618, %v634
  %v640 = vmul.f32 %v621, %v634
  %v641 = vmul.f32 %v624, %v634
  %v642 = vmul.f32 %v627, %v634
  %v643 = vsub.f32 %v594, %v635
  %v644 = vsub.f32 %v595, %v636
  %v645 = vsub.f32 %v596, %v637
  %v646 = vsub.f32 %v597, %v638
  %v647 = vsub.f32 %v598, %v639
  %v648 = vsub.f32 %v599, %v640
  %v649 = vsub.f32 %v600, %v641
  %v650 = vsub.f32 %v601, %v642
  %v651 = vmul.f32 %v643, %v643
  %v652 = vmul.f32 %v644, %v644
  %v653 = vmul.f32 %v645, %v645
  %v654 = vmul.f32 %v646, %v646
  %v655 = vmul.f32 %v647, %v647
  %v656 = vmul.f32 %v648, %v648
  %v657 = vmul.f32 %v649, %v649
  %v658 = vmul.f32 %v650, %v650
  %v659 = vsel %vm91, %v651, 0.0
  %660 = vadd.xlane.f32.xlu0 %v659
  %v661 = vpop.xlane.xlu0 %660
  %v662 = vsel %vm91, %v652, 0.0
  %663 = vadd.xlane.f32.xlu0 %v662
  %v664 = vpop.xlane.xlu0 %663
  %v665 = vsel %vm91, %v653, 0.0
  %666 = vadd.xlane.f32.xlu0 %v665
  %v667 = vpop.xlane.xlu0 %666
  %v668 = vsel %vm91, %v654, 0.0
  %669 = vadd.xlane.f32.xlu0 %v668
  %v670 = vpop.xlane.xlu0 %669
  %v671 = vsel %vm91, %v655, 0.0
  %672 = vadd.xlane.f32.xlu0 %v671
  %v673 = vpop.xlane.xlu0 %672
  %v674 = vsel %vm91, %v656, 0.0
  %675 = vadd.xlane.f32.xlu0 %v674
  %v676 = vpop.xlane.xlu0 %675
  %v677 = vsel %vm91, %v657, 0.0
  %678 = vadd.xlane.f32.xlu0 %v677
  %v679 = vpop.xlane.xlu0 %678
  %v680 = vsel %vm91, %v658, 0.0
  %681 = vadd.xlane.f32.xlu0 %v680
  %v682 = vpop.xlane.xlu0 %681
  %v683 = vmul.f32 %v661, %v634
  %v684 = vmul.f32 %v664, %v634
  %v685 = vmul.f32 %v667, %v634
  %v686 = vmul.f32 %v670, %v634
  %v687 = vmul.f32 %v673, %v634
  %v688 = vmul.f32 %v676, %v634
  %v689 = vmul.f32 %v679, %v634
  %v690 = vmul.f32 %v682, %v634
  %v691 = vadd.f32 %v683, 1e-05
  %v692 = vadd.f32 %v684, 1e-05
  %v693 = vadd.f32 %v685, 1e-05
  %v694 = vadd.f32 %v686, 1e-05
  %v695 = vadd.f32 %v687, 1e-05
  %v696 = vadd.f32 %v688, 1e-05
  %v697 = vadd.f32 %v689, 1e-05
  %v698 = vadd.f32 %v690, 1e-05
  %v699 = vrsqrt.pop %v691
  %v700 = vmul.f32 %v699, %v691
  %v701 = vmul.f32 %v700, %v699
  %v702 = vmul.f32 0.5, %v701
  %v703 = vsub.f32 1.5, %v702
  %v704 = vmul.f32 %v699, %v703
  %vm705 = vweird.f32 %v691
  %vm706 = vweird.f32 %v699
  %vm707 = vmor %vm705, %vm706
  %v708 = vsel %vm707, %v699, %v704
  %v709 = vrsqrt.pop %v692
  %v710 = vmul.f32 %v709, %v692
  %v711 = vmul.f32 %v710, %v709
  %v712 = vmul.f32 0.5, %v711
  %v713 = vsub.f32 1.5, %v712
  %v714 = vmul.f32 %v709, %v713
  %vm715 = vweird.f32 %v692
  %vm716 = vweird.f32 %v709
  %vm717 = vmor %vm715, %vm716
  %v718 = vsel %vm717, %v709, %v714
  %v719 = vrsqrt.pop %v693
  %v720 = vmul.f32 %v719, %v693
  %v721 = vmul.f32 %v720, %v719
  %v722 = vmul.f32 0.5, %v721
  %v723 = vsub.f32 1.5, %v722
  %v724 = vmul.f32 %v719, %v723
  %vm725 = vweird.f32 %v693
  %vm726 = vweird.f32 %v719
  %vm727 = vmor %vm725, %vm726
  %v728 = vsel %vm727, %v719, %v724
  %v729 = vrsqrt.pop %v694
  %v730 = vmul.f32 %v729, %v694
  %v731 = vmul.f32 %v730, %v729
  %v732 = vmul.f32 0.5, %v731
  %v733 = vsub.f32 1.5, %v732
  %v734 = vmul.f32 %v729, %v733
  %vm735 = vweird.f32 %v694
  %vm736 = vweird.f32 %v729
  %vm737 = vmor %vm735, %vm736
  %v738 = vsel %vm737, %v729, %v734
  %v739 = vrsqrt.pop %v695
  %v740 = vmul.f32 %v739, %v695
  %v741 = vmul.f32 %v740, %v739
  %v742 = vmul.f32 0.5, %v741
  %v743 = vsub.f32 1.5, %v742
  %v744 = vmul.f32 %v739, %v743
  %vm745 = vweird.f32 %v695
  %vm746 = vweird.f32 %v739
  %vm747 = vmor %vm745, %vm746
  %v748 = vsel %vm747, %v739, %v744
  %v749 = vrsqrt.pop %v696
  %v750 = vmul.f32 %v749, %v696
  %v751 = vmul.f32 %v750, %v749
  %v752 = vmul.f32 0.5, %v751
  %v753 = vsub.f32 1.5, %v752
  %v754 = vmul.f32 %v749, %v753
  %vm755 = vweird.f32 %v696
  %vm756 = vweird.f32 %v749
  %vm757 = vmor %vm755, %vm756
  %v758 = vsel %vm757, %v749, %v754
  %v759 = vrsqrt.pop %v697
  %v760 = vmul.f32 %v759, %v697
  %v761 = vmul.f32 %v760, %v759
  %v762 = vmul.f32 0.5, %v761
  %v763 = vsub.f32 1.5, %v762
  %v764 = vmul.f32 %v759, %v763
  %vm765 = vweird.f32 %v697
  %vm766 = vweird.f32 %v759
  %vm767 = vmor %vm765, %vm766
  %v768 = vsel %vm767, %v759, %v764
  %v769 = vrsqrt.pop %v698
  %v770 = vmul.f32 %v769, %v698
  %v771 = vmul.f32 %v770, %v769
  %v772 = vmul.f32 0.5, %v771
  %v773 = vsub.f32 1.5, %v772
  %v774 = vmul.f32 %v769, %v773
  %vm775 = vweird.f32 %v698
  %vm776 = vweird.f32 %v769
  %vm777 = vmor %vm775, %vm776
  %v778 = vsel %vm777, %v769, %v774
  %v779 = vmul.f32 %v643, %v708
  %v780 = vmul.f32 %v644, %v718
  %v781 = vmul.f32 %v645, %v728
  %v782 = vmul.f32 %v646, %v738
  %v783 = vmul.f32 %v647, %v748
  %v784 = vmul.f32 %v648, %v758
  %v785 = vmul.f32 %v649, %v768
  %v786 = vmul.f32 %v650, %v778
  %v788 = vperm.slane %v602, 0
  %v790 = vmul.f32 %v779, %v788
  %v791 = vmul.f32 %v780, %v788
  %v792 = vmul.f32 %v781, %v788
  %v793 = vmul.f32 %v782, %v788
  %v794 = vmul.f32 %v783, %v788
  %v795 = vmul.f32 %v784, %v788
  %v796 = vmul.f32 %v785, %v788
  %v797 = vmul.f32 %v786, %v788
  %v799 = vperm.slane %v603, 0
  %v801 = vadd.f32 %v790, %v799
  %v802 = vadd.f32 %v791, %v799
  %v803 = vadd.f32 %v792, %v799
  %v804 = vadd.f32 %v793, %v799
  %v805 = vadd.f32 %v794, %v799
  %v806 = vadd.f32 %v795, %v799
  %v807 = vadd.f32 %v796, %v799
  %v808 = vadd.f32 %v797, %v799
  %v809 = vpack.c.bf16 %v801, %v801
  %v810 = vpack.c.bf16 %v802, %v802
  %v811 = vpack.c.bf16 %v803, %v803
  %v812 = vpack.c.bf16 %v804, %v804
  %v813 = vpack.c.bf16 %v805, %v805
  %v814 = vpack.c.bf16 %v806, %v806
  %v815 = vpack.c.bf16 %v807, %v807
  %v816 = vpack.c.bf16 %v808, %v808
  %vm817 = vcmask 519168
  %818 = vst.msk [vmem:[%s7] sm:$0xf] %vm817, %v809
  %819 = vst.msk [vmem:[%s7 + $0x4] sm:$0xf] %vm817, %v810
  %820 = vst.msk [vmem:[%s7 + $0x8] sm:$0xf] %vm817, %v811
  %821 = vst.msk [vmem:[%s7 + $0xc] sm:$0xf] %vm817, %v812
  %822 = vst.msk [vmem:[%s7 + $0x10] sm:$0xf] %vm817, %v813
  %823 = vst.msk [vmem:[%s7 + $0x14] sm:$0xf] %vm817, %v814
  %824 = vst.msk [vmem:[%s7 + $0x18] sm:$0xf] %vm817, %v815
  %825 = vst.msk [vmem:[%s7 + $0x1c] sm:$0xf] %vm817, %v816
  // Predicated region
  $region30: #{_lambda_.16} parent=0 // pred_check
    _
  $region31: #{_lambda_.16} parent=0 // pred_check_branch
    %827 = sbr.rel (0) target = $region33
  $region32: #{_lambda_.16} parent=0 // pred_region
    _
  $region33: #{_lambda_.16} parent=0 // pred_fallthru
    _
  // Predicated region
  $region34: #{_lambda_.16} parent=0 // pred_check
    _
  $region35: #{_lambda_.16} parent=0 // pred_check_branch
    %829 = sbr.rel (0) target = $region37
  $region36: #{_lambda_.16} parent=0 // pred_region
    _
  $region37: #{_lambda_.16} parent=0 // pred_fallthru
    _

</llo_original>
